<compile_context>
chip_gen: v7x
topology: tpu7x:2x2x1
jax: 0.10.0
libtpu: 0.0.40
codegen_flags: <defaults>
</compile_context>

<pallas_src>
import functools

import jax
import jax.numpy as jnp
from jax.experimental import pallas as pl
from jax.experimental.pallas import tpu as pltpu

LEAKY_SLOPE = 0.2
BN_EPS = 1e-5
K_SIZE = 4
STRIDE = 2

LANE = 128          # lane width
SUBLANE = 16        # bf16 sublane packing
CIN_ALIGN = 8       # pad input channels so K = 16*Cin is a multiple of 128
MAX_TILE_M = 512    # ~85% of HBM roofline per measured tiled-add data
VMEM_LIMIT_BYTES = 64 * 1024 * 1024


def _round_up(x, m):
    return (x + m - 1) // m * m


def _choose_tile_m(m):
    return min(MAX_TILE_M, _round_up(m, SUBLANE))


# ---------------------------------------------------------------------------
# Kernel 1: fused conv-matmul + bias + activation (non-BN layers)
# ---------------------------------------------------------------------------
def _conv_bias_act_kernel(x_ref, w_ref, b_ref, o_ref, *, act):
    acc = jnp.dot(x_ref[...], w_ref[...], preferred_element_type=jnp.float32)
    acc = acc + b_ref[...]
    if act == "leaky":
        acc = jnp.where(acc >= 0, acc, LEAKY_SLOPE * acc)
    elif act == "sigmoid":
        # Numerically stable sigmoid (no overflow for large |acc|).
        pos = acc >= 0
        z = jnp.exp(jnp.where(pos, -acc, acc))
        acc = jnp.where(pos, 1.0 / (1.0 + z), z / (1.0 + z))
    o_ref[...] = acc.astype(o_ref.dtype)


# ---------------------------------------------------------------------------
# Kernel 2: conv-matmul + per-channel sum / sum-of-squares (BN pass 1)
# ---------------------------------------------------------------------------
def _conv_stats_kernel(x_ref, w_ref, y_ref, sum_ref, ssq_ref):
    @pl.when(pl.program_id(0) == 0)
    def _():
        sum_ref[...] = jnp.zeros_like(sum_ref)
        ssq_ref[...] = jnp.zeros_like(ssq_ref)

    acc = jnp.dot(x_ref[...], w_ref[...], preferred_element_type=jnp.float32)
    y_ref[...] = acc
    # Zero-padded M rows contribute 0 to both reductions, so true-M division
    # in pass 2 keeps exact PyTorch BatchNorm2d training-mode semantics.
    sum_ref[...] += jnp.sum(acc, axis=0, keepdims=True)
    ssq_ref[...] += jnp.sum(acc * acc, axis=0, keepdims=True)


# ---------------------------------------------------------------------------
# Kernel 3: BatchNorm normalize (batch stats, biased var) + LeakyReLU (pass 2)
# ---------------------------------------------------------------------------
def _bn_act_kernel(y_ref, sum_ref, ssq_ref, g_ref, b_ref, o_ref, *, inv_count):
    mean = sum_ref[...] * inv_count
    var = jnp.maximum(ssq_ref[...] * inv_count - mean * mean, 0.0)
    scale = g_ref[...] * jax.lax.rsqrt(var + BN_EPS)
    shift = b_ref[...] - mean * scale
    y = y_ref[...] * scale + shift
    o_ref[...] = jnp.where(y >= 0, y, LEAKY_SLOPE * y).astype(o_ref.dtype)


# ---------------------------------------------------------------------------
# Layer drivers (pad M, build grids / BlockSpecs, slice padding off)
# ---------------------------------------------------------------------------
def _compiler_params(semantics):
    return pltpu.CompilerParams(
        dimension_semantics=semantics,
        vmem_limit_bytes=VMEM_LIMIT_BYTES,
    )


def _pad_rows(patches, m_pad):
    m = patches.shape[0]
    if m_pad != m:
        patches = jnp.pad(patches, ((0, m_pad - m), (0, 0)))
    return patches


def _matmul_bias_act(patches, w, bias, act, out_dtype):
    M, K = patches.shape
    Cout = w.shape[1]
    tile_m = _choose_tile_m(M)
    m_pad = _round_up(M, tile_m)
    patches = _pad_rows(patches, m_pad)

    out = pl.pallas_call(
        functools.partial(_conv_bias_act_kernel, act=act),
        out_shape=jax.ShapeDtypeStruct((m_pad, Cout), out_dtype),
        grid=(m_pad // tile_m,),
        in_specs=[
            pl.BlockSpec((tile_m, K), lambda i: (i, 0)),
            pl.BlockSpec((K, Cout), lambda i: (0, 0)),
            pl.BlockSpec((1, Cout), lambda i: (0, 0)),
        ],
        out_specs=pl.BlockSpec((tile_m, Cout), lambda i: (i, 0)),
        compiler_params=_compiler_params(("parallel",)),
    )(patches, w, bias)
    return out[:M]


def _matmul_bn_leaky(patches, w, gamma, beta, out_dtype):
    M, K = patches.shape
    Cout = w.shape[1]
    tile_m = _choose_tile_m(M)
    m_pad = _round_up(M, tile_m)
    patches = _pad_rows(patches, m_pad)
    grid = (m_pad // tile_m,)

    # Pass 1: tiled matmul + global per-channel sum / sum-of-squares.
    # TODO(synk): store the raw conv output in bf16 to halve the intra-layer
    # HBM round-trip (stats are already accumulated from the f32 accumulator).
    y, csum, cssq = pl.pallas_call(
        _conv_stats_kernel,
        out_shape=(
            jax.ShapeDtypeStruct((m_pad, Cout), jnp.float32),
            jax.ShapeDtypeStruct((1, Cout), jnp.float32),
            jax.ShapeDtypeStruct((1, Cout), jnp.float32),
        ),
        grid=grid,
        in_specs=[
            pl.BlockSpec((tile_m, K), lambda i: (i, 0)),
            pl.BlockSpec((K, Cout), lambda i: (0, 0)),
        ],
        out_specs=(
            pl.BlockSpec((tile_m, Cout), lambda i: (i, 0)),
            pl.BlockSpec((1, Cout), lambda i: (0, 0)),
            pl.BlockSpec((1, Cout), lambda i: (0, 0)),
        ),
        compiler_params=_compiler_params(("arbitrary",)),
    )(patches, w)

    # Pass 2: elementwise normalize + LeakyReLU, M tiles independent.
    out = pl.pallas_call(
        functools.partial(_bn_act_kernel, inv_count=1.0 / float(M)),
        out_shape=jax.ShapeDtypeStruct((m_pad, Cout), out_dtype),
        grid=grid,
        in_specs=[
            pl.BlockSpec((tile_m, Cout), lambda i: (i, 0)),
            pl.BlockSpec((1, Cout), lambda i: (0, 0)),
            pl.BlockSpec((1, Cout), lambda i: (0, 0)),
            pl.BlockSpec((1, Cout), lambda i: (0, 0)),
            pl.BlockSpec((1, Cout), lambda i: (0, 0)),
        ],
        out_specs=pl.BlockSpec((tile_m, Cout), lambda i: (i, 0)),
        compiler_params=_compiler_params(("parallel",)),
    )(y, csum, cssq, gamma, beta)
    return out[:M]


# ---------------------------------------------------------------------------
# JAX glue: im2col patch extraction (pure reshuffle, bf16, no compute)
# ---------------------------------------------------------------------------
# TODO(synk): build the [tile, 16*Cin] patch matrix inside the kernel (or do
# 16 accumulated taps reading the padded NHWC input directly) to remove the
# remaining 4x HBM expansion of the XLA-side im2col; likewise the whole 5-layer
# network could be fused into one pallas_call at small batch sizes.
def im2col(x_nhwc, k, stride, pad):
    N, H, W, C = x_nhwc.shape
    xp = jnp.pad(x_nhwc, ((0, 0), (pad, pad), (pad, pad), (0, 0)))
    OH = (H + 2 * pad - k) // stride + 1
    OW = (W + 2 * pad - k) // stride + 1
    taps = []
    for kh in range(k):
        for kw in range(k):
            taps.append(
                xp[:, kh:kh + stride * OH:stride, kw:kw + stride * OW:stride, :]
            )
    p = jnp.stack(taps, axis=3)                   # [N, OH, OW, k*k, C]
    return p.reshape(N * OH * OW, k * k * C), (N, OH, OW)


# ---------------------------------------------------------------------------
# Parameter construction (deterministic, mirrors PyTorch module shapes)
# ---------------------------------------------------------------------------
# Layer configs: (Cin, Cout, pad, has_bias, use_bn, activation)
def layer_configs(nc, f):
    return [
        (nc,     f,     1, True,  False, "leaky"),    # Conv2d(nc, f, 4, 2, 1) + LeakyReLU
        (f,      2 * f, 1, False, True,  "leaky"),    # _block(f, 2f)
        (2 * f,  4 * f, 1, False, True,  "leaky"),    # _block(2f, 4f)
        (4 * f,  8 * f, 1, False, True,  "leaky"),    # _block(4f, 8f)
        (8 * f,  1,     0, True,  False, "sigmoid"),  # Conv2d(8f, 1, 4, 2, 0) + Sigmoid
    ]


def init_params(key, nc, f):
    cfgs = layer_configs(nc, f)
    params = []
    for li, (cin, cout, _pad, has_bias, use_bn, _act) in enumerate(cfgs):
        is_last = li == len(cfgs) - 1
        cin_p = _round_up(cin, CIN_ALIGN)
        cout_p = _round_up(cout, LANE) if is_last else cout  # lane-dense final store
        key, kw_key, kb_key = jax.random.split(key, 3)
        fan_in = cin * K_SIZE * K_SIZE
        bound = 1.0 / float(fan_in) ** 0.5
        # PyTorch Conv2d weight is [Cout, Cin, KH, KW]; stored as
        # [KH, KW, Cin, Cout] flattened to [KH*KW*Cin_p, Cout_p] (im2col order),
        # zero-padded channels/columns contribute nothing.
        w = jax.random.uniform(
            kw_key, (K_SIZE, K_SIZE, cin, cout), jnp.float32, -bound, bound
        )
        w = jnp.pad(w, ((0, 0), (0, 0), (0, cin_p - cin), (0, cout_p - cout)))
        w = w.reshape(K_SIZE * K_SIZE * cin_p, cout_p).astype(jnp.bfloat16)
        if use_bn:
            a = jnp.ones((1, cout_p), jnp.float32)    # gamma
            b = jnp.zeros((1, cout_p), jnp.float32)   # beta
        else:
            if has_bias:
                bias = jax.random.uniform(
                    kb_key, (1, cout), jnp.float32, -bound, bound
                )
                bias = jnp.pad(bias, ((0, 0), (0, cout_p - cout)))
            else:
                bias = jnp.zeros((1, cout_p), jnp.float32)
            a = bias
            b = jnp.zeros((1, cout_p), jnp.float32)   # unused
        params.append((w, a, b))
    return params


# ---------------------------------------------------------------------------
# Full forward pass
# ---------------------------------------------------------------------------
def dcdisc_forward(params, x_nchw, nc, f):
    cfgs = layer_configs(nc, f)
    x = jnp.transpose(x_nchw, (0, 2, 3, 1)).astype(jnp.bfloat16)  # NCHW -> NHWC
    for li, ((w, a, b), (_cin, _cout, pad, _bias, use_bn, act)) in enumerate(
        zip(params, cfgs)
    ):
        cin_p = w.shape[0] // (K_SIZE * K_SIZE)
        cout_p = w.shape[1]
        if x.shape[-1] < cin_p:                       # layer-1 channel padding
            x = jnp.pad(x, ((0, 0), (0, 0), (0, 0), (0, cin_p - x.shape[-1])))
        patches, (N, OH, OW) = im2col(x, K_SIZE, STRIDE, pad)
        is_last = li == len(cfgs) - 1
        out_dtype = jnp.float32 if is_last else jnp.bfloat16
        if use_bn:
            out = _matmul_bn_leaky(patches, w, a, b, out_dtype)
        else:
            out = _matmul_bias_act(patches, w, a, act, out_dtype)
        x = out.reshape(N, OH, OW, cout_p)
    # After the last conv OH = OW = 1; real Cout = 1 lives in column 0 of the
    # lane-padded 128-wide output. Flatten -> [N, 1].
    N = x.shape[0]
    return x.reshape(N, -1)[:, :1].astype(jnp.float32)
    # TODO(synk): BatchNorm running_mean/running_var buffer updates are not
    # modeled (they do not affect the training-mode forward output).


if __name__ == "__main__":
    # 64x64 spatial is required so the final 4x4/stride-2/pad-0 conv reduces to
    # 1x1 (as in the PyTorch module). Small batch and f_disc for the test.
    N, NC, H, W = 2, 3, 64, 64
    F_DISC = 8

    key = jax.random.PRNGKey(0)
    key, xk = jax.random.split(key)
    x = jax.random.normal(xk, (N, NC, H, W), jnp.float32)

    params = init_params(key, NC, F_DISC)
    fwd = jax.jit(functools.partial(dcdisc_forward, nc=NC, f=F_DISC))
    out = fwd(params, x)
    out = jax.block_until_ready(out)

    assert out.shape == (N, 1), out.shape
    assert bool(jnp.all(jnp.isfinite(out)))
    assert bool(jnp.all((out >= 0.0) & (out <= 1.0)))  # sigmoid range
    print("KERNEL_OK")
</pallas_src>

<mosaic_0001>
module attributes {stable_mosaic.version = 11 : i64} {
  func.func @_conv_bias_act_kernel(%arg0: i32, %arg1: memref<512x128xbf16, #tpu.memory_space<vmem>>, %arg2: memref<128x8xbf16, #tpu.memory_space<vmem>>, %arg3: memref<1x8xf32, #tpu.memory_space<vmem>>, %arg4: memref<512x8xbf16, #tpu.memory_space<vmem>>) attributes {dimension_semantics = [#tpu.dimension_semantics<parallel>], iteration_bounds = array<i64: 4>, scalar_prefetch = 0 : i64, scratch_operands = 0 : i64, tpu.core_type = #tpu.core_type<tc>, window_params = [{transform_indices = @transform_0, window_bounds = array<i64: 512, 128>}, {pipeline_mode = #tpu.pipeline_mode<synchronous>, transform_indices = @transform_1, window_bounds = array<i64: 128, 8>}, {pipeline_mode = #tpu.pipeline_mode<synchronous>, transform_indices = @transform_2, window_bounds = array<i64: 1, 8>}, {transform_indices = @transform_3, window_bounds = array<i64: 512, 8>}]} {
    %c0 = arith.constant 0 : index
    %c0_0 = arith.constant 0 : index
    %0 = vector.load %arg1[%c0, %c0_0] : memref<512x128xbf16, #tpu.memory_space<vmem>>, vector<512x128xbf16>
    %c0_1 = arith.constant 0 : index
    %c0_2 = arith.constant 0 : index
    %1 = vector.load %arg2[%c0_1, %c0_2] : memref<128x8xbf16, #tpu.memory_space<vmem>>, vector<128x8xbf16>
    %cst = arith.constant dense<0.000000e+00> : vector<512x8xf32>
    %2 = tpu.matmul %0, %1, %cst {dimension_numbers = #tpu.dot_dimension_numbers<[1], [0], [0], [1], [0, 0, 1, 1], [], []>} : vector<512x128xbf16>, vector<128x8xbf16>, vector<512x8xf32> -> vector<512x8xf32>
    %c0_3 = arith.constant 0 : index
    %c0_4 = arith.constant 0 : index
    %3 = vector.load %arg3[%c0_3, %c0_4] : memref<1x8xf32, #tpu.memory_space<vmem>>, vector<1x8xf32>
    %4 = vector.broadcast %3 : vector<1x8xf32> to vector<512x8xf32>
    %5 = arith.addf %2, %4 : vector<512x8xf32>
    %cst_5 = arith.constant 0.000000e+00 : f32
    %6 = vector.broadcast %cst_5 : f32 to vector<512x8xf32>
    %7 = arith.cmpf oge, %5, %6 : vector<512x8xf32>
    %cst_6 = arith.constant 2.000000e-01 : f32
    %8 = vector.broadcast %cst_6 : f32 to vector<512x8xf32>
    %9 = arith.mulf %8, %5 : vector<512x8xf32>
    %10 = arith.select %7, %5, %9 : vector<512x8xi1>, vector<512x8xf32>
    %11 = arith.truncf %10 : vector<512x8xf32> to vector<512x8xbf16>
    %c0_7 = arith.constant 0 : index
    %c0_8 = arith.constant 0 : index
    %12 = vector.load %arg4[%c0_7, %c0_8] : memref<512x8xbf16, #tpu.memory_space<vmem>>, vector<512x8xbf16>
    tpu.vector_store %arg4[%c0_7, %c0_8], %11 {strides = array<i32>} : memref<512x8xbf16, #tpu.memory_space<vmem>>, vector<512x8xbf16>,
    return
  }
  func.func @transform_0(%arg0: i32) -> (i32, i32) {
    %c0_i32 = arith.constant 0 : i32
    %c0_i32_0 = arith.constant 0 : i32
    return %arg0, %c0_i32 : i32, i32
  }
  func.func @transform_1(%arg0: i32) -> (i32, i32) {
    %c0_i32 = arith.constant 0 : i32
    %c0_i32_0 = arith.constant 0 : i32
    %c0_i32_1 = arith.constant 0 : i32
    return %c0_i32, %c0_i32_0 : i32, i32
  }
  func.func @transform_2(%arg0: i32) -> (i32, i32) {
    %c0_i32 = arith.constant 0 : i32
    %c0_i32_0 = arith.constant 0 : i32
    %c0_i32_1 = arith.constant 0 : i32
    return %c0_i32, %c0_i32_0 : i32, i32
  }
  func.func @transform_3(%arg0: i32) -> (i32, i32) {
    %c0_i32 = arith.constant 0 : i32
    %c0_i32_0 = arith.constant 0 : i32
    return %arg0, %c0_i32 : i32, i32
  }
}

module attributes {stable_mosaic.version = 11 : i64} {
  func.func @_conv_stats_kernel(%arg0: i32, %arg1: memref<512x128xbf16, #tpu.memory_space<vmem>>, %arg2: memref<128x16xbf16, #tpu.memory_space<vmem>>, %arg3: memref<512x16xf32, #tpu.memory_space<vmem>>, %arg4: memref<1x16xf32, #tpu.memory_space<vmem>>, %arg5: memref<1x16xf32, #tpu.memory_space<vmem>>) attributes {dimension_semantics = [#tpu.dimension_semantics<arbitrary>], iteration_bounds = array<i64: 1>, scalar_prefetch = 0 : i64, scratch_operands = 0 : i64, tpu.core_type = #tpu.core_type<tc>, window_params = [{transform_indices = @transform_0, window_bounds = array<i64: 512, 128>}, {pipeline_mode = #tpu.pipeline_mode<synchronous>, transform_indices = @transform_1, window_bounds = array<i64: 128, 16>}, {transform_indices = @transform_2, window_bounds = array<i64: 512, 16>}, {pipeline_mode = #tpu.pipeline_mode<synchronous>, transform_indices = @transform_3, window_bounds = array<i64: 1, 16>}, {pipeline_mode = #tpu.pipeline_mode<synchronous>, transform_indices = @transform_4, window_bounds = array<i64: 1, 16>}]} {
    %c0_i32 = arith.constant 0 : i32
    %0 = arith.cmpi eq, %arg0, %c0_i32 : i32
    %1 = arith.extui %0 : i1 to i32
    %c0_i32_0 = arith.constant 0 : i32
    %2 = arith.cmpi ne, %1, %c0_i32_0 : i32
    scf.if %2 {
      %cst_16 = arith.constant 0.000000e+00 : f32
      %18 = vector.broadcast %cst_16 : f32 to vector<1x16xf32>
      %c0_17 = arith.constant 0 : index
      %c0_18 = arith.constant 0 : index
      %19 = vector.load %arg4[%c0_17, %c0_18] : memref<1x16xf32, #tpu.memory_space<vmem>>, vector<1x16xf32>
      tpu.vector_store %arg4[%c0_17, %c0_18], %18 {strides = array<i32>} : memref<1x16xf32, #tpu.memory_space<vmem>>, vector<1x16xf32>,
      %cst_19 = arith.constant 0.000000e+00 : f32
      %20 = vector.broadcast %cst_19 : f32 to vector<1x16xf32>
      %c0_20 = arith.constant 0 : index
      %c0_21 = arith.constant 0 : index
      %21 = vector.load %arg5[%c0_20, %c0_21] : memref<1x16xf32, #tpu.memory_space<vmem>>, vector<1x16xf32>
      tpu.vector_store %arg5[%c0_20, %c0_21], %20 {strides = array<i32>} : memref<1x16xf32, #tpu.memory_space<vmem>>, vector<1x16xf32>,
    } else {
    }
    %c0 = arith.constant 0 : index
    %c0_1 = arith.constant 0 : index
    %3 = vector.load %arg1[%c0, %c0_1] : memref<512x128xbf16, #tpu.memory_space<vmem>>, vector<512x128xbf16>
    %c0_2 = arith.constant 0 : index
    %c0_3 = arith.constant 0 : index
    %4 = vector.load %arg2[%c0_2, %c0_3] : memref<128x16xbf16, #tpu.memory_space<vmem>>, vector<128x16xbf16>
    %cst = arith.constant dense<0.000000e+00> : vector<512x16xf32>
    %5 = tpu.matmul %3, %4, %cst {dimension_numbers = #tpu.dot_dimension_numbers<[1], [0], [0], [1], [0, 0, 1, 1], [], []>} : vector<512x128xbf16>, vector<128x16xbf16>, vector<512x16xf32> -> vector<512x16xf32>
    %c0_4 = arith.constant 0 : index
    %c0_5 = arith.constant 0 : index
    %6 = vector.load %arg3[%c0_4, %c0_5] : memref<512x16xf32, #tpu.memory_space<vmem>>, vector<512x16xf32>
    tpu.vector_store %arg3[%c0_4, %c0_5], %5 {strides = array<i32>} : memref<512x16xf32, #tpu.memory_space<vmem>>, vector<512x16xf32>,
    %c0_6 = arith.constant 0 : index
    %c0_7 = arith.constant 0 : index
    %7 = vector.load %arg4[%c0_6, %c0_7] : memref<1x16xf32, #tpu.memory_space<vmem>>, vector<1x16xf32>
    %cst_8 = arith.constant dense<0.000000e+00> : vector<16xf32>
    %8 = vector.multi_reduction <add>, %5, %cst_8 [0] : vector<512x16xf32> to vector<16xf32>
    %9 = vector.shape_cast %8 : vector<16xf32> to vector<1x16xf32>
    %10 = arith.addf %7, %9 : vector<1x16xf32>
    %c0_9 = arith.constant 0 : index
    %c0_10 = arith.constant 0 : index
    %11 = vector.load %arg4[%c0_9, %c0_10] : memref<1x16xf32, #tpu.memory_space<vmem>>, vector<1x16xf32>
    tpu.vector_store %arg4[%c0_9, %c0_10], %10 {strides = array<i32>} : memref<1x16xf32, #tpu.memory_space<vmem>>, vector<1x16xf32>,
    %c0_11 = arith.constant 0 : index
    %c0_12 = arith.constant 0 : index
    %12 = vector.load %arg5[%c0_11, %c0_12] : memref<1x16xf32, #tpu.memory_space<vmem>>, vector<1x16xf32>
    %13 = arith.mulf %5, %5 : vector<512x16xf32>
    %cst_13 = arith.constant dense<0.000000e+00> : vector<16xf32>
    %14 = vector.multi_reduction <add>, %13, %cst_13 [0] : vector<512x16xf32> to vector<16xf32>
    %15 = vector.shape_cast %14 : vector<16xf32> to vector<1x16xf32>
    %16 = arith.addf %12, %15 : vector<1x16xf32>
    %c0_14 = arith.constant 0 : index
    %c0_15 = arith.constant 0 : index
    %17 = vector.load %arg5[%c0_14, %c0_15] : memref<1x16xf32, #tpu.memory_space<vmem>>, vector<1x16xf32>
    tpu.vector_store %arg5[%c0_14, %c0_15], %16 {strides = array<i32>} : memref<1x16xf32, #tpu.memory_space<vmem>>, vector<1x16xf32>,
    return
  }
  func.func @transform_0(%arg0: i32) -> (i32, i32) {
    %c0_i32 = arith.constant 0 : i32
    %c0_i32_0 = arith.constant 0 : i32
    return %arg0, %c0_i32 : i32, i32
  }
  func.func @transform_1(%arg0: i32) -> (i32, i32) {
    %c0_i32 = arith.constant 0 : i32
    %c0_i32_0 = arith.constant 0 : i32
    %c0_i32_1 = arith.constant 0 : i32
    return %c0_i32, %c0_i32_0 : i32, i32
  }
  func.func @transform_2(%arg0: i32) -> (i32, i32) {
    %c0_i32 = arith.constant 0 : i32
    %c0_i32_0 = arith.constant 0 : i32
    return %arg0, %c0_i32 : i32, i32
  }
  func.func @transform_3(%arg0: i32) -> (i32, i32) {
    %c0_i32 = arith.constant 0 : i32
    %c0_i32_0 = arith.constant 0 : i32
    %c0_i32_1 = arith.constant 0 : i32
    return %c0_i32, %c0_i32_0 : i32, i32
  }
  func.func @transform_4(%arg0: i32) -> (i32, i32) {
    %c0_i32 = arith.constant 0 : i32
    %c0_i32_0 = arith.constant 0 : i32
    %c0_i32_1 = arith.constant 0 : i32
    return %c0_i32, %c0_i32_0 : i32, i32
  }
}

module attributes {stable_mosaic.version = 11 : i64} {
  func.func @_bn_act_kernel(%arg0: i32, %arg1: memref<512x16xf32, #tpu.memory_space<vmem>>, %arg2: memref<1x16xf32, #tpu.memory_space<vmem>>, %arg3: memref<1x16xf32, #tpu.memory_space<vmem>>, %arg4: memref<1x16xf32, #tpu.memory_space<vmem>>, %arg5: memref<1x16xf32, #tpu.memory_space<vmem>>, %arg6: memref<512x16xbf16, #tpu.memory_space<vmem>>) attributes {dimension_semantics = [#tpu.dimension_semantics<parallel>], iteration_bounds = array<i64: 1>, scalar_prefetch = 0 : i64, scratch_operands = 0 : i64, tpu.core_type = #tpu.core_type<tc>, window_params = [{transform_indices = @transform_0, window_bounds = array<i64: 512, 16>}, {pipeline_mode = #tpu.pipeline_mode<synchronous>, transform_indices = @transform_1, window_bounds = array<i64: 1, 16>}, {pipeline_mode = #tpu.pipeline_mode<synchronous>, transform_indices = @transform_2, window_bounds = array<i64: 1, 16>}, {pipeline_mode = #tpu.pipeline_mode<synchronous>, transform_indices = @transform_3, window_bounds = array<i64: 1, 16>}, {pipeline_mode = #tpu.pipeline_mode<synchronous>, transform_indices = @transform_4, window_bounds = array<i64: 1, 16>}, {transform_indices = @transform_5, window_bounds = array<i64: 512, 16>}]} {
    %c0 = arith.constant 0 : index
    %c0_0 = arith.constant 0 : index
    %0 = vector.load %arg2[%c0, %c0_0] : memref<1x16xf32, #tpu.memory_space<vmem>>, vector<1x16xf32>
    %cst = arith.constant 0.001953125 : f32
    %1 = vector.broadcast %cst : f32 to vector<1x16xf32>
    %2 = arith.mulf %0, %1 : vector<1x16xf32>
    %c0_1 = arith.constant 0 : index
    %c0_2 = arith.constant 0 : index
    %3 = vector.load %arg3[%c0_1, %c0_2] : memref<1x16xf32, #tpu.memory_space<vmem>>, vector<1x16xf32>
    %cst_3 = arith.constant 0.001953125 : f32
    %4 = vector.broadcast %cst_3 : f32 to vector<1x16xf32>
    %5 = arith.mulf %3, %4 : vector<1x16xf32>
    %6 = arith.mulf %2, %2 : vector<1x16xf32>
    %7 = arith.subf %5, %6 : vector<1x16xf32>
    %cst_4 = arith.constant 0.000000e+00 : f32
    %8 = vector.broadcast %cst_4 : f32 to vector<1x16xf32>
    %9 = arith.maximumf %7, %8 : vector<1x16xf32>
    %c0_5 = arith.constant 0 : index
    %c0_6 = arith.constant 0 : index
    %10 = vector.load %arg4[%c0_5, %c0_6] : memref<1x16xf32, #tpu.memory_space<vmem>>, vector<1x16xf32>
    %cst_7 = arith.constant 9.99999974E-6 : f32
    %11 = vector.broadcast %cst_7 : f32 to vector<1x16xf32>
    %12 = arith.addf %9, %11 : vector<1x16xf32>
    %13 = math.rsqrt %12 : vector<1x16xf32>
    %14 = arith.mulf %10, %13 : vector<1x16xf32>
    %c0_8 = arith.constant 0 : index
    %c0_9 = arith.constant 0 : index
    %15 = vector.load %arg5[%c0_8, %c0_9] : memref<1x16xf32, #tpu.memory_space<vmem>>, vector<1x16xf32>
    %16 = arith.mulf %2, %14 : vector<1x16xf32>
    %17 = arith.subf %15, %16 : vector<1x16xf32>
    %c0_10 = arith.constant 0 : index
    %c0_11 = arith.constant 0 : index
    %18 = vector.load %arg1[%c0_10, %c0_11] : memref<512x16xf32, #tpu.memory_space<vmem>>, vector<512x16xf32>
    %19 = vector.broadcast %14 : vector<1x16xf32> to vector<512x16xf32>
    %20 = arith.mulf %18, %19 : vector<512x16xf32>
    %21 = vector.broadcast %17 : vector<1x16xf32> to vector<512x16xf32>
    %22 = arith.addf %20, %21 : vector<512x16xf32>
    %cst_12 = arith.constant 0.000000e+00 : f32
    %23 = vector.broadcast %cst_12 : f32 to vector<512x16xf32>
    %24 = arith.cmpf oge, %22, %23 : vector<512x16xf32>
    %cst_13 = arith.constant 2.000000e-01 : f32
    %25 = vector.broadcast %cst_13 : f32 to vector<512x16xf32>
    %26 = arith.mulf %25, %22 : vector<512x16xf32>
    %27 = arith.select %24, %22, %26 : vector<512x16xi1>, vector<512x16xf32>
    %28 = arith.truncf %27 : vector<512x16xf32> to vector<512x16xbf16>
    %c0_14 = arith.constant 0 : index
    %c0_15 = arith.constant 0 : index
    %29 = vector.load %arg6[%c0_14, %c0_15] : memref<512x16xbf16, #tpu.memory_space<vmem>>, vector<512x16xbf16>
    tpu.vector_store %arg6[%c0_14, %c0_15], %28 {strides = array<i32>} : memref<512x16xbf16, #tpu.memory_space<vmem>>, vector<512x16xbf16>,
    return
  }
  func.func @transform_0(%arg0: i32) -> (i32, i32) {
    %c0_i32 = arith.constant 0 : i32
    %c0_i32_0 = arith.constant 0 : i32
    return %arg0, %c0_i32 : i32, i32
  }
  func.func @transform_1(%arg0: i32) -> (i32, i32) {
    %c0_i32 = arith.constant 0 : i32
    %c0_i32_0 = arith.constant 0 : i32
    %c0_i32_1 = arith.constant 0 : i32
    return %c0_i32, %c0_i32_0 : i32, i32
  }
  func.func @transform_2(%arg0: i32) -> (i32, i32) {
    %c0_i32 = arith.constant 0 : i32
    %c0_i32_0 = arith.constant 0 : i32
    %c0_i32_1 = arith.constant 0 : i32
    return %c0_i32, %c0_i32_0 : i32, i32
  }
  func.func @transform_3(%arg0: i32) -> (i32, i32) {
    %c0_i32 = arith.constant 0 : i32
    %c0_i32_0 = arith.constant 0 : i32
    %c0_i32_1 = arith.constant 0 : i32
    return %c0_i32, %c0_i32_0 : i32, i32
  }
  func.func @transform_4(%arg0: i32) -> (i32, i32) {
    %c0_i32 = arith.constant 0 : i32
    %c0_i32_0 = arith.constant 0 : i32
    %c0_i32_1 = arith.constant 0 : i32
    return %c0_i32, %c0_i32_0 : i32, i32
  }
  func.func @transform_5(%arg0: i32) -> (i32, i32) {
    %c0_i32 = arith.constant 0 : i32
    %c0_i32_0 = arith.constant 0 : i32
    return %arg0, %c0_i32 : i32, i32
  }
}

module attributes {stable_mosaic.version = 11 : i64} {
  func.func @_conv_stats_kernel(%arg0: i32, %arg1: memref<128x256xbf16, #tpu.memory_space<vmem>>, %arg2: memref<256x32xbf16, #tpu.memory_space<vmem>>, %arg3: memref<128x32xf32, #tpu.memory_space<vmem>>, %arg4: memref<1x32xf32, #tpu.memory_space<vmem>>, %arg5: memref<1x32xf32, #tpu.memory_space<vmem>>) attributes {dimension_semantics = [#tpu.dimension_semantics<arbitrary>], iteration_bounds = array<i64: 1>, scalar_prefetch = 0 : i64, scratch_operands = 0 : i64, tpu.core_type = #tpu.core_type<tc>, window_params = [{transform_indices = @transform_0, window_bounds = array<i64: 128, 256>}, {pipeline_mode = #tpu.pipeline_mode<synchronous>, transform_indices = @transform_1, window_bounds = array<i64: 256, 32>}, {transform_indices = @transform_2, window_bounds = array<i64: 128, 32>}, {pipeline_mode = #tpu.pipeline_mode<synchronous>, transform_indices = @transform_3, window_bounds = array<i64: 1, 32>}, {pipeline_mode = #tpu.pipeline_mode<synchronous>, transform_indices = @transform_4, window_bounds = array<i64: 1, 32>}]} {
    %c0_i32 = arith.constant 0 : i32
    %0 = arith.cmpi eq, %arg0, %c0_i32 : i32
    %1 = arith.extui %0 : i1 to i32
    %c0_i32_0 = arith.constant 0 : i32
    %2 = arith.cmpi ne, %1, %c0_i32_0 : i32
    scf.if %2 {
      %cst_16 = arith.constant 0.000000e+00 : f32
      %18 = vector.broadcast %cst_16 : f32 to vector<1x32xf32>
      %c0_17 = arith.constant 0 : index
      %c0_18 = arith.constant 0 : index
      %19 = vector.load %arg4[%c0_17, %c0_18] : memref<1x32xf32, #tpu.memory_space<vmem>>, vector<1x32xf32>
      tpu.vector_store %arg4[%c0_17, %c0_18], %18 {strides = array<i32>} : memref<1x32xf32, #tpu.memory_space<vmem>>, vector<1x32xf32>,
      %cst_19 = arith.constant 0.000000e+00 : f32
      %20 = vector.broadcast %cst_19 : f32 to vector<1x32xf32>
      %c0_20 = arith.constant 0 : index
      %c0_21 = arith.constant 0 : index
      %21 = vector.load %arg5[%c0_20, %c0_21] : memref<1x32xf32, #tpu.memory_space<vmem>>, vector<1x32xf32>
      tpu.vector_store %arg5[%c0_20, %c0_21], %20 {strides = array<i32>} : memref<1x32xf32, #tpu.memory_space<vmem>>, vector<1x32xf32>,
    } else {
    }
    %c0 = arith.constant 0 : index
    %c0_1 = arith.constant 0 : index
    %3 = vector.load %arg1[%c0, %c0_1] : memref<128x256xbf16, #tpu.memory_space<vmem>>, vector<128x256xbf16>
    %c0_2 = arith.constant 0 : index
    %c0_3 = arith.constant 0 : index
    %4 = vector.load %arg2[%c0_2, %c0_3] : memref<256x32xbf16, #tpu.memory_space<vmem>>, vector<256x32xbf16>
    %cst = arith.constant dense<0.000000e+00> : vector<128x32xf32>
    %5 = tpu.matmul %3, %4, %cst {dimension_numbers = #tpu.dot_dimension_numbers<[1], [0], [0], [1], [0, 0, 1, 1], [], []>} : vector<128x256xbf16>, vector<256x32xbf16>, vector<128x32xf32> -> vector<128x32xf32>
    %c0_4 = arith.constant 0 : index
    %c0_5 = arith.constant 0 : index
    %6 = vector.load %arg3[%c0_4, %c0_5] : memref<128x32xf32, #tpu.memory_space<vmem>>, vector<128x32xf32>
    tpu.vector_store %arg3[%c0_4, %c0_5], %5 {strides = array<i32>} : memref<128x32xf32, #tpu.memory_space<vmem>>, vector<128x32xf32>,
    %c0_6 = arith.constant 0 : index
    %c0_7 = arith.constant 0 : index
    %7 = vector.load %arg4[%c0_6, %c0_7] : memref<1x32xf32, #tpu.memory_space<vmem>>, vector<1x32xf32>
    %cst_8 = arith.constant dense<0.000000e+00> : vector<32xf32>
    %8 = vector.multi_reduction <add>, %5, %cst_8 [0] : vector<128x32xf32> to vector<32xf32>
    %9 = vector.shape_cast %8 : vector<32xf32> to vector<1x32xf32>
    %10 = arith.addf %7, %9 : vector<1x32xf32>
    %c0_9 = arith.constant 0 : index
    %c0_10 = arith.constant 0 : index
    %11 = vector.load %arg4[%c0_9, %c0_10] : memref<1x32xf32, #tpu.memory_space<vmem>>, vector<1x32xf32>
    tpu.vector_store %arg4[%c0_9, %c0_10], %10 {strides = array<i32>} : memref<1x32xf32, #tpu.memory_space<vmem>>, vector<1x32xf32>,
    %c0_11 = arith.constant 0 : index
    %c0_12 = arith.constant 0 : index
    %12 = vector.load %arg5[%c0_11, %c0_12] : memref<1x32xf32, #tpu.memory_space<vmem>>, vector<1x32xf32>
    %13 = arith.mulf %5, %5 : vector<128x32xf32>
    %cst_13 = arith.constant dense<0.000000e+00> : vector<32xf32>
    %14 = vector.multi_reduction <add>, %13, %cst_13 [0] : vector<128x32xf32> to vector<32xf32>
    %15 = vector.shape_cast %14 : vector<32xf32> to vector<1x32xf32>
    %16 = arith.addf %12, %15 : vector<1x32xf32>
    %c0_14 = arith.constant 0 : index
    %c0_15 = arith.constant 0 : index
    %17 = vector.load %arg5[%c0_14, %c0_15] : memref<1x32xf32, #tpu.memory_space<vmem>>, vector<1x32xf32>
    tpu.vector_store %arg5[%c0_14, %c0_15], %16 {strides = array<i32>} : memref<1x32xf32, #tpu.memory_space<vmem>>, vector<1x32xf32>,
    return
  }
  func.func @transform_0(%arg0: i32) -> (i32, i32) {
    %c0_i32 = arith.constant 0 : i32
    %c0_i32_0 = arith.constant 0 : i32
    return %arg0, %c0_i32 : i32, i32
  }
  func.func @transform_1(%arg0: i32) -> (i32, i32) {
    %c0_i32 = arith.constant 0 : i32
    %c0_i32_0 = arith.constant 0 : i32
    %c0_i32_1 = arith.constant 0 : i32
    return %c0_i32, %c0_i32_0 : i32, i32
  }
  func.func @transform_2(%arg0: i32) -> (i32, i32) {
    %c0_i32 = arith.constant 0 : i32
    %c0_i32_0 = arith.constant 0 : i32
    return %arg0, %c0_i32 : i32, i32
  }
  func.func @transform_3(%arg0: i32) -> (i32, i32) {
    %c0_i32 = arith.constant 0 : i32
    %c0_i32_0 = arith.constant 0 : i32
    %c0_i32_1 = arith.constant 0 : i32
    return %c0_i32, %c0_i32_0 : i32, i32
  }
  func.func @transform_4(%arg0: i32) -> (i32, i32) {
    %c0_i32 = arith.constant 0 : i32
    %c0_i32_0 = arith.constant 0 : i32
    %c0_i32_1 = arith.constant 0 : i32
    return %c0_i32, %c0_i32_0 : i32, i32
  }
}

module attributes {stable_mosaic.version = 11 : i64} {
  func.func @_bn_act_kernel(%arg0: i32, %arg1: memref<128x32xf32, #tpu.memory_space<vmem>>, %arg2: memref<1x32xf32, #tpu.memory_space<vmem>>, %arg3: memref<1x32xf32, #tpu.memory_space<vmem>>, %arg4: memref<1x32xf32, #tpu.memory_space<vmem>>, %arg5: memref<1x32xf32, #tpu.memory_space<vmem>>, %arg6: memref<128x32xbf16, #tpu.memory_space<vmem>>) attributes {dimension_semantics = [#tpu.dimension_semantics<parallel>], iteration_bounds = array<i64: 1>, scalar_prefetch = 0 : i64, scratch_operands = 0 : i64, tpu.core_type = #tpu.core_type<tc>, window_params = [{transform_indices = @transform_0, window_bounds = array<i64: 128, 32>}, {pipeline_mode = #tpu.pipeline_mode<synchronous>, transform_indices = @transform_1, window_bounds = array<i64: 1, 32>}, {pipeline_mode = #tpu.pipeline_mode<synchronous>, transform_indices = @transform_2, window_bounds = array<i64: 1, 32>}, {pipeline_mode = #tpu.pipeline_mode<synchronous>, transform_indices = @transform_3, window_bounds = array<i64: 1, 32>}, {pipeline_mode = #tpu.pipeline_mode<synchronous>, transform_indices = @transform_4, window_bounds = array<i64: 1, 32>}, {transform_indices = @transform_5, window_bounds = array<i64: 128, 32>}]} {
    %c0 = arith.constant 0 : index
    %c0_0 = arith.constant 0 : index
    %0 = vector.load %arg2[%c0, %c0_0] : memref<1x32xf32, #tpu.memory_space<vmem>>, vector<1x32xf32>
    %cst = arith.constant 7.812500e-03 : f32
    %1 = vector.broadcast %cst : f32 to vector<1x32xf32>
    %2 = arith.mulf %0, %1 : vector<1x32xf32>
    %c0_1 = arith.constant 0 : index
    %c0_2 = arith.constant 0 : index
    %3 = vector.load %arg3[%c0_1, %c0_2] : memref<1x32xf32, #tpu.memory_space<vmem>>, vector<1x32xf32>
    %cst_3 = arith.constant 7.812500e-03 : f32
    %4 = vector.broadcast %cst_3 : f32 to vector<1x32xf32>
    %5 = arith.mulf %3, %4 : vector<1x32xf32>
    %6 = arith.mulf %2, %2 : vector<1x32xf32>
    %7 = arith.subf %5, %6 : vector<1x32xf32>
    %cst_4 = arith.constant 0.000000e+00 : f32
    %8 = vector.broadcast %cst_4 : f32 to vector<1x32xf32>
    %9 = arith.maximumf %7, %8 : vector<1x32xf32>
    %c0_5 = arith.constant 0 : index
    %c0_6 = arith.constant 0 : index
    %10 = vector.load %arg4[%c0_5, %c0_6] : memref<1x32xf32, #tpu.memory_space<vmem>>, vector<1x32xf32>
    %cst_7 = arith.constant 9.99999974E-6 : f32
    %11 = vector.broadcast %cst_7 : f32 to vector<1x32xf32>
    %12 = arith.addf %9, %11 : vector<1x32xf32>
    %13 = math.rsqrt %12 : vector<1x32xf32>
    %14 = arith.mulf %10, %13 : vector<1x32xf32>
    %c0_8 = arith.constant 0 : index
    %c0_9 = arith.constant 0 : index
    %15 = vector.load %arg5[%c0_8, %c0_9] : memref<1x32xf32, #tpu.memory_space<vmem>>, vector<1x32xf32>
    %16 = arith.mulf %2, %14 : vector<1x32xf32>
    %17 = arith.subf %15, %16 : vector<1x32xf32>
    %c0_10 = arith.constant 0 : index
    %c0_11 = arith.constant 0 : index
    %18 = vector.load %arg1[%c0_10, %c0_11] : memref<128x32xf32, #tpu.memory_space<vmem>>, vector<128x32xf32>
    %19 = vector.broadcast %14 : vector<1x32xf32> to vector<128x32xf32>
    %20 = arith.mulf %18, %19 : vector<128x32xf32>
    %21 = vector.broadcast %17 : vector<1x32xf32> to vector<128x32xf32>
    %22 = arith.addf %20, %21 : vector<128x32xf32>
    %cst_12 = arith.constant 0.000000e+00 : f32
    %23 = vector.broadcast %cst_12 : f32 to vector<128x32xf32>
    %24 = arith.cmpf oge, %22, %23 : vector<128x32xf32>
    %cst_13 = arith.constant 2.000000e-01 : f32
    %25 = vector.broadcast %cst_13 : f32 to vector<128x32xf32>
    %26 = arith.mulf %25, %22 : vector<128x32xf32>
    %27 = arith.select %24, %22, %26 : vector<128x32xi1>, vector<128x32xf32>
    %28 = arith.truncf %27 : vector<128x32xf32> to vector<128x32xbf16>
    %c0_14 = arith.constant 0 : index
    %c0_15 = arith.constant 0 : index
    %29 = vector.load %arg6[%c0_14, %c0_15] : memref<128x32xbf16, #tpu.memory_space<vmem>>, vector<128x32xbf16>
    tpu.vector_store %arg6[%c0_14, %c0_15], %28 {strides = array<i32>} : memref<128x32xbf16, #tpu.memory_space<vmem>>, vector<128x32xbf16>,
    return
  }
  func.func @transform_0(%arg0: i32) -> (i32, i32) {
    %c0_i32 = arith.constant 0 : i32
    %c0_i32_0 = arith.constant 0 : i32
    return %arg0, %c0_i32 : i32, i32
  }
  func.func @transform_1(%arg0: i32) -> (i32, i32) {
    %c0_i32 = arith.constant 0 : i32
    %c0_i32_0 = arith.constant 0 : i32
    %c0_i32_1 = arith.constant 0 : i32
    return %c0_i32, %c0_i32_0 : i32, i32
  }
  func.func @transform_2(%arg0: i32) -> (i32, i32) {
    %c0_i32 = arith.constant 0 : i32
    %c0_i32_0 = arith.constant 0 : i32
    %c0_i32_1 = arith.constant 0 : i32
    return %c0_i32, %c0_i32_0 : i32, i32
  }
  func.func @transform_3(%arg0: i32) -> (i32, i32) {
    %c0_i32 = arith.constant 0 : i32
    %c0_i32_0 = arith.constant 0 : i32
    %c0_i32_1 = arith.constant 0 : i32
    return %c0_i32, %c0_i32_0 : i32, i32
  }
  func.func @transform_4(%arg0: i32) -> (i32, i32) {
    %c0_i32 = arith.constant 0 : i32
    %c0_i32_0 = arith.constant 0 : i32
    %c0_i32_1 = arith.constant 0 : i32
    return %c0_i32, %c0_i32_0 : i32, i32
  }
  func.func @transform_5(%arg0: i32) -> (i32, i32) {
    %c0_i32 = arith.constant 0 : i32
    %c0_i32_0 = arith.constant 0 : i32
    return %arg0, %c0_i32 : i32, i32
  }
}

module attributes {stable_mosaic.version = 11 : i64} {
  func.func @_conv_stats_kernel(%arg0: i32, %arg1: memref<32x512xbf16, #tpu.memory_space<vmem>>, %arg2: memref<512x64xbf16, #tpu.memory_space<vmem>>, %arg3: memref<32x64xf32, #tpu.memory_space<vmem>>, %arg4: memref<1x64xf32, #tpu.memory_space<vmem>>, %arg5: memref<1x64xf32, #tpu.memory_space<vmem>>) attributes {dimension_semantics = [#tpu.dimension_semantics<arbitrary>], iteration_bounds = array<i64: 1>, scalar_prefetch = 0 : i64, scratch_operands = 0 : i64, tpu.core_type = #tpu.core_type<tc>, window_params = [{transform_indices = @transform_0, window_bounds = array<i64: 32, 512>}, {pipeline_mode = #tpu.pipeline_mode<synchronous>, transform_indices = @transform_1, window_bounds = array<i64: 512, 64>}, {transform_indices = @transform_2, window_bounds = array<i64: 32, 64>}, {pipeline_mode = #tpu.pipeline_mode<synchronous>, transform_indices = @transform_3, window_bounds = array<i64: 1, 64>}, {pipeline_mode = #tpu.pipeline_mode<synchronous>, transform_indices = @transform_4, window_bounds = array<i64: 1, 64>}]} {
    %c0_i32 = arith.constant 0 : i32
    %0 = arith.cmpi eq, %arg0, %c0_i32 : i32
    %1 = arith.extui %0 : i1 to i32
    %c0_i32_0 = arith.constant 0 : i32
    %2 = arith.cmpi ne, %1, %c0_i32_0 : i32
    scf.if %2 {
      %cst_16 = arith.constant 0.000000e+00 : f32
      %18 = vector.broadcast %cst_16 : f32 to vector<1x64xf32>
      %c0_17 = arith.constant 0 : index
      %c0_18 = arith.constant 0 : index
      %19 = vector.load %arg4[%c0_17, %c0_18] : memref<1x64xf32, #tpu.memory_space<vmem>>, vector<1x64xf32>
      tpu.vector_store %arg4[%c0_17, %c0_18], %18 {strides = array<i32>} : memref<1x64xf32, #tpu.memory_space<vmem>>, vector<1x64xf32>,
      %cst_19 = arith.constant 0.000000e+00 : f32
      %20 = vector.broadcast %cst_19 : f32 to vector<1x64xf32>
      %c0_20 = arith.constant 0 : index
      %c0_21 = arith.constant 0 : index
      %21 = vector.load %arg5[%c0_20, %c0_21] : memref<1x64xf32, #tpu.memory_space<vmem>>, vector<1x64xf32>
      tpu.vector_store %arg5[%c0_20, %c0_21], %20 {strides = array<i32>} : memref<1x64xf32, #tpu.memory_space<vmem>>, vector<1x64xf32>,
    } else {
    }
    %c0 = arith.constant 0 : index
    %c0_1 = arith.constant 0 : index
    %3 = vector.load %arg1[%c0, %c0_1] : memref<32x512xbf16, #tpu.memory_space<vmem>>, vector<32x512xbf16>
    %c0_2 = arith.constant 0 : index
    %c0_3 = arith.constant 0 : index
    %4 = vector.load %arg2[%c0_2, %c0_3] : memref<512x64xbf16, #tpu.memory_space<vmem>>, vector<512x64xbf16>
    %cst = arith.constant dense<0.000000e+00> : vector<32x64xf32>
    %5 = tpu.matmul %3, %4, %cst {dimension_numbers = #tpu.dot_dimension_numbers<[1], [0], [0], [1], [0, 0, 1, 1], [], []>} : vector<32x512xbf16>, vector<512x64xbf16>, vector<32x64xf32> -> vector<32x64xf32>
    %c0_4 = arith.constant 0 : index
    %c0_5 = arith.constant 0 : index
    %6 = vector.load %arg3[%c0_4, %c0_5] : memref<32x64xf32, #tpu.memory_space<vmem>>, vector<32x64xf32>
    tpu.vector_store %arg3[%c0_4, %c0_5], %5 {strides = array<i32>} : memref<32x64xf32, #tpu.memory_space<vmem>>, vector<32x64xf32>,
    %c0_6 = arith.constant 0 : index
    %c0_7 = arith.constant 0 : index
    %7 = vector.load %arg4[%c0_6, %c0_7] : memref<1x64xf32, #tpu.memory_space<vmem>>, vector<1x64xf32>
    %cst_8 = arith.constant dense<0.000000e+00> : vector<64xf32>
    %8 = vector.multi_reduction <add>, %5, %cst_8 [0] : vector<32x64xf32> to vector<64xf32>
    %9 = vector.shape_cast %8 : vector<64xf32> to vector<1x64xf32>
    %10 = arith.addf %7, %9 : vector<1x64xf32>
    %c0_9 = arith.constant 0 : index
    %c0_10 = arith.constant 0 : index
    %11 = vector.load %arg4[%c0_9, %c0_10] : memref<1x64xf32, #tpu.memory_space<vmem>>, vector<1x64xf32>
    tpu.vector_store %arg4[%c0_9, %c0_10], %10 {strides = array<i32>} : memref<1x64xf32, #tpu.memory_space<vmem>>, vector<1x64xf32>,
    %c0_11 = arith.constant 0 : index
    %c0_12 = arith.constant 0 : index
    %12 = vector.load %arg5[%c0_11, %c0_12] : memref<1x64xf32, #tpu.memory_space<vmem>>, vector<1x64xf32>
    %13 = arith.mulf %5, %5 : vector<32x64xf32>
    %cst_13 = arith.constant dense<0.000000e+00> : vector<64xf32>
    %14 = vector.multi_reduction <add>, %13, %cst_13 [0] : vector<32x64xf32> to vector<64xf32>
    %15 = vector.shape_cast %14 : vector<64xf32> to vector<1x64xf32>
    %16 = arith.addf %12, %15 : vector<1x64xf32>
    %c0_14 = arith.constant 0 : index
    %c0_15 = arith.constant 0 : index
    %17 = vector.load %arg5[%c0_14, %c0_15] : memref<1x64xf32, #tpu.memory_space<vmem>>, vector<1x64xf32>
    tpu.vector_store %arg5[%c0_14, %c0_15], %16 {strides = array<i32>} : memref<1x64xf32, #tpu.memory_space<vmem>>, vector<1x64xf32>,
    return
  }
  func.func @transform_0(%arg0: i32) -> (i32, i32) {
    %c0_i32 = arith.constant 0 : i32
    %c0_i32_0 = arith.constant 0 : i32
    return %arg0, %c0_i32 : i32, i32
  }
  func.func @transform_1(%arg0: i32) -> (i32, i32) {
    %c0_i32 = arith.constant 0 : i32
    %c0_i32_0 = arith.constant 0 : i32
    %c0_i32_1 = arith.constant 0 : i32
    return %c0_i32, %c0_i32_0 : i32, i32
  }
  func.func @transform_2(%arg0: i32) -> (i32, i32) {
    %c0_i32 = arith.constant 0 : i32
    %c0_i32_0 = arith.constant 0 : i32
    return %arg0, %c0_i32 : i32, i32
  }
  func.func @transform_3(%arg0: i32) -> (i32, i32) {
    %c0_i32 = arith.constant 0 : i32
    %c0_i32_0 = arith.constant 0 : i32
    %c0_i32_1 = arith.constant 0 : i32
    return %c0_i32, %c0_i32_0 : i32, i32
  }
  func.func @transform_4(%arg0: i32) -> (i32, i32) {
    %c0_i32 = arith.constant 0 : i32
    %c0_i32_0 = arith.constant 0 : i32
    %c0_i32_1 = arith.constant 0 : i32
    return %c0_i32, %c0_i32_0 : i32, i32
  }
}

module attributes {stable_mosaic.version = 11 : i64} {
  func.func @_bn_act_kernel(%arg0: i32, %arg1: memref<32x64xf32, #tpu.memory_space<vmem>>, %arg2: memref<1x64xf32, #tpu.memory_space<vmem>>, %arg3: memref<1x64xf32, #tpu.memory_space<vmem>>, %arg4: memref<1x64xf32, #tpu.memory_space<vmem>>, %arg5: memref<1x64xf32, #tpu.memory_space<vmem>>, %arg6: memref<32x64xbf16, #tpu.memory_space<vmem>>) attributes {dimension_semantics = [#tpu.dimension_semantics<parallel>], iteration_bounds = array<i64: 1>, scalar_prefetch = 0 : i64, scratch_operands = 0 : i64, tpu.core_type = #tpu.core_type<tc>, window_params = [{transform_indices = @transform_0, window_bounds = array<i64: 32, 64>}, {pipeline_mode = #tpu.pipeline_mode<synchronous>, transform_indices = @transform_1, window_bounds = array<i64: 1, 64>}, {pipeline_mode = #tpu.pipeline_mode<synchronous>, transform_indices = @transform_2, window_bounds = array<i64: 1, 64>}, {pipeline_mode = #tpu.pipeline_mode<synchronous>, transform_indices = @transform_3, window_bounds = array<i64: 1, 64>}, {pipeline_mode = #tpu.pipeline_mode<synchronous>, transform_indices = @transform_4, window_bounds = array<i64: 1, 64>}, {transform_indices = @transform_5, window_bounds = array<i64: 32, 64>}]} {
    %c0 = arith.constant 0 : index
    %c0_0 = arith.constant 0 : index
    %0 = vector.load %arg2[%c0, %c0_0] : memref<1x64xf32, #tpu.memory_space<vmem>>, vector<1x64xf32>
    %cst = arith.constant 3.125000e-02 : f32
    %1 = vector.broadcast %cst : f32 to vector<1x64xf32>
    %2 = arith.mulf %0, %1 : vector<1x64xf32>
    %c0_1 = arith.constant 0 : index
    %c0_2 = arith.constant 0 : index
    %3 = vector.load %arg3[%c0_1, %c0_2] : memref<1x64xf32, #tpu.memory_space<vmem>>, vector<1x64xf32>
    %cst_3 = arith.constant 3.125000e-02 : f32
    %4 = vector.broadcast %cst_3 : f32 to vector<1x64xf32>
    %5 = arith.mulf %3, %4 : vector<1x64xf32>
    %6 = arith.mulf %2, %2 : vector<1x64xf32>
    %7 = arith.subf %5, %6 : vector<1x64xf32>
    %cst_4 = arith.constant 0.000000e+00 : f32
    %8 = vector.broadcast %cst_4 : f32 to vector<1x64xf32>
    %9 = arith.maximumf %7, %8 : vector<1x64xf32>
    %c0_5 = arith.constant 0 : index
    %c0_6 = arith.constant 0 : index
    %10 = vector.load %arg4[%c0_5, %c0_6] : memref<1x64xf32, #tpu.memory_space<vmem>>, vector<1x64xf32>
    %cst_7 = arith.constant 9.99999974E-6 : f32
    %11 = vector.broadcast %cst_7 : f32 to vector<1x64xf32>
    %12 = arith.addf %9, %11 : vector<1x64xf32>
    %13 = math.rsqrt %12 : vector<1x64xf32>
    %14 = arith.mulf %10, %13 : vector<1x64xf32>
    %c0_8 = arith.constant 0 : index
    %c0_9 = arith.constant 0 : index
    %15 = vector.load %arg5[%c0_8, %c0_9] : memref<1x64xf32, #tpu.memory_space<vmem>>, vector<1x64xf32>
    %16 = arith.mulf %2, %14 : vector<1x64xf32>
    %17 = arith.subf %15, %16 : vector<1x64xf32>
    %c0_10 = arith.constant 0 : index
    %c0_11 = arith.constant 0 : index
    %18 = vector.load %arg1[%c0_10, %c0_11] : memref<32x64xf32, #tpu.memory_space<vmem>>, vector<32x64xf32>
    %19 = vector.broadcast %14 : vector<1x64xf32> to vector<32x64xf32>
    %20 = arith.mulf %18, %19 : vector<32x64xf32>
    %21 = vector.broadcast %17 : vector<1x64xf32> to vector<32x64xf32>
    %22 = arith.addf %20, %21 : vector<32x64xf32>
    %cst_12 = arith.constant 0.000000e+00 : f32
    %23 = vector.broadcast %cst_12 : f32 to vector<32x64xf32>
    %24 = arith.cmpf oge, %22, %23 : vector<32x64xf32>
    %cst_13 = arith.constant 2.000000e-01 : f32
    %25 = vector.broadcast %cst_13 : f32 to vector<32x64xf32>
    %26 = arith.mulf %25, %22 : vector<32x64xf32>
    %27 = arith.select %24, %22, %26 : vector<32x64xi1>, vector<32x64xf32>
    %28 = arith.truncf %27 : vector<32x64xf32> to vector<32x64xbf16>
    %c0_14 = arith.constant 0 : index
    %c0_15 = arith.constant 0 : index
    %29 = vector.load %arg6[%c0_14, %c0_15] : memref<32x64xbf16, #tpu.memory_space<vmem>>, vector<32x64xbf16>
    tpu.vector_store %arg6[%c0_14, %c0_15], %28 {strides = array<i32>} : memref<32x64xbf16, #tpu.memory_space<vmem>>, vector<32x64xbf16>,
    return
  }
  func.func @transform_0(%arg0: i32) -> (i32, i32) {
    %c0_i32 = arith.constant 0 : i32
    %c0_i32_0 = arith.constant 0 : i32
    return %arg0, %c0_i32 : i32, i32
  }
  func.func @transform_1(%arg0: i32) -> (i32, i32) {
    %c0_i32 = arith.constant 0 : i32
    %c0_i32_0 = arith.constant 0 : i32
    %c0_i32_1 = arith.constant 0 : i32
    return %c0_i32, %c0_i32_0 : i32, i32
  }
  func.func @transform_2(%arg0: i32) -> (i32, i32) {
    %c0_i32 = arith.constant 0 : i32
    %c0_i32_0 = arith.constant 0 : i32
    %c0_i32_1 = arith.constant 0 : i32
    return %c0_i32, %c0_i32_0 : i32, i32
  }
  func.func @transform_3(%arg0: i32) -> (i32, i32) {
    %c0_i32 = arith.constant 0 : i32
    %c0_i32_0 = arith.constant 0 : i32
    %c0_i32_1 = arith.constant 0 : i32
    return %c0_i32, %c0_i32_0 : i32, i32
  }
  func.func @transform_4(%arg0: i32) -> (i32, i32) {
    %c0_i32 = arith.constant 0 : i32
    %c0_i32_0 = arith.constant 0 : i32
    %c0_i32_1 = arith.constant 0 : i32
    return %c0_i32, %c0_i32_0 : i32, i32
  }
  func.func @transform_5(%arg0: i32) -> (i32, i32) {
    %c0_i32 = arith.constant 0 : i32
    %c0_i32_0 = arith.constant 0 : i32
    return %arg0, %c0_i32 : i32, i32
  }
}

module attributes {stable_mosaic.version = 11 : i64} {
  func.func @_conv_bias_act_kernel(%arg0: i32, %arg1: memref<16x1024xbf16, #tpu.memory_space<vmem>>, %arg2: memref<1024x128xbf16, #tpu.memory_space<vmem>>, %arg3: memref<1x128xf32, #tpu.memory_space<vmem>>, %arg4: memref<16x128xf32, #tpu.memory_space<vmem>>) attributes {dimension_semantics = [#tpu.dimension_semantics<parallel>], iteration_bounds = array<i64: 1>, scalar_prefetch = 0 : i64, scratch_operands = 0 : i64, tpu.core_type = #tpu.core_type<tc>, window_params = [{transform_indices = @transform_0, window_bounds = array<i64: 16, 1024>}, {pipeline_mode = #tpu.pipeline_mode<synchronous>, transform_indices = @transform_1, window_bounds = array<i64: 1024, 128>}, {pipeline_mode = #tpu.pipeline_mode<synchronous>, transform_indices = @transform_2, window_bounds = array<i64: 1, 128>}, {transform_indices = @transform_3, window_bounds = array<i64: 16, 128>}]} {
    %c0 = arith.constant 0 : index
    %c0_0 = arith.constant 0 : index
    %0 = vector.load %arg1[%c0, %c0_0] : memref<16x1024xbf16, #tpu.memory_space<vmem>>, vector<16x1024xbf16>
    %c0_1 = arith.constant 0 : index
    %c0_2 = arith.constant 0 : index
    %1 = vector.load %arg2[%c0_1, %c0_2] : memref<1024x128xbf16, #tpu.memory_space<vmem>>, vector<1024x128xbf16>
    %cst = arith.constant dense<0.000000e+00> : vector<16x128xf32>
    %2 = tpu.matmul %0, %1, %cst {dimension_numbers = #tpu.dot_dimension_numbers<[1], [0], [0], [1], [0, 0, 1, 1], [], []>} : vector<16x1024xbf16>, vector<1024x128xbf16>, vector<16x128xf32> -> vector<16x128xf32>
    %c0_3 = arith.constant 0 : index
    %c0_4 = arith.constant 0 : index
    %3 = vector.load %arg3[%c0_3, %c0_4] : memref<1x128xf32, #tpu.memory_space<vmem>>, vector<1x128xf32>
    %4 = vector.broadcast %3 : vector<1x128xf32> to vector<16x128xf32>
    %5 = arith.addf %2, %4 : vector<16x128xf32>
    %cst_5 = arith.constant 0.000000e+00 : f32
    %6 = vector.broadcast %cst_5 : f32 to vector<16x128xf32>
    %7 = arith.cmpf oge, %5, %6 : vector<16x128xf32>
    %cst_6 = arith.constant 0.000000e+00 : f32
    %8 = vector.broadcast %cst_6 : f32 to vector<16x128xf32>
    %9 = arith.subf %8, %5 : vector<16x128xf32>
    %10 = arith.select %7, %9, %5 : vector<16x128xi1>, vector<16x128xf32>
    %11 = math.exp %10 : vector<16x128xf32>
    %cst_7 = arith.constant 1.000000e+00 : f32
    %12 = vector.broadcast %cst_7 : f32 to vector<16x128xf32>
    %13 = arith.addf %12, %11 : vector<16x128xf32>
    %cst_8 = arith.constant 1.000000e+00 : f32
    %14 = vector.broadcast %cst_8 : f32 to vector<16x128xf32>
    %15 = arith.divf %14, %13 : vector<16x128xf32>
    %cst_9 = arith.constant 1.000000e+00 : f32
    %16 = vector.broadcast %cst_9 : f32 to vector<16x128xf32>
    %17 = arith.addf %16, %11 : vector<16x128xf32>
    %18 = arith.divf %11, %17 : vector<16x128xf32>
    %19 = arith.select %7, %15, %18 : vector<16x128xi1>, vector<16x128xf32>
    %c0_10 = arith.constant 0 : index
    %c0_11 = arith.constant 0 : index
    %20 = vector.load %arg4[%c0_10, %c0_11] : memref<16x128xf32, #tpu.memory_space<vmem>>, vector<16x128xf32>
    tpu.vector_store %arg4[%c0_10, %c0_11], %19 {strides = array<i32>} : memref<16x128xf32, #tpu.memory_space<vmem>>, vector<16x128xf32>,
    return
  }
  func.func @transform_0(%arg0: i32) -> (i32, i32) {
    %c0_i32 = arith.constant 0 : i32
    %c0_i32_0 = arith.constant 0 : i32
    return %arg0, %c0_i32 : i32, i32
  }
  func.func @transform_1(%arg0: i32) -> (i32, i32) {
    %c0_i32 = arith.constant 0 : i32
    %c0_i32_0 = arith.constant 0 : i32
    %c0_i32_1 = arith.constant 0 : i32
    return %c0_i32, %c0_i32_0 : i32, i32
  }
  func.func @transform_2(%arg0: i32) -> (i32, i32) {
    %c0_i32 = arith.constant 0 : i32
    %c0_i32_0 = arith.constant 0 : i32
    %c0_i32_1 = arith.constant 0 : i32
    return %c0_i32, %c0_i32_0 : i32, i32
  }
  func.func @transform_3(%arg0: i32) -> (i32, i32) {
    %c0_i32 = arith.constant 0 : i32
    %c0_i32_0 = arith.constant 0 : i32
    return %arg0, %c0_i32 : i32, i32
  }
}

</mosaic_0001>

<llo_original>
// kernel: dcdisc_forward.8
$region0: #{dcdisc_forward.8}
  #allocation0 [shape = 'u32[]', space=smem, size = 0x4, offset = 0x4, fixed_abs, tag = 'smem constant byte address 0x4 - core index']
  #allocation1 [shape = 'u32[144,128]{1,0:T(1,128)}', space=vmem, size = 0x12000, scoped, tag = 'internal scratch']
  %s0 = inlined_call_operand.hbm [shape: bf16[2048,128], index: 0, kind: input, shape index: {}]
  %s1 = inlined_call_operand.hbm [shape: bf16[128,8], index: 1, kind: input, shape index: {}]
  %s2 = inlined_call_operand.hbm [shape: f32[1,8], index: 2, kind: input, shape index: {}]
  %s3 = inlined_call_operand.hbm [shape: bf16[2048,8], index: 3, kind: output, shape index: {}]
  %s4 = sld [smem:[#allocation0]]
  $region57: #{dcdisc_forward.8} parent=0
    _
  %s6 = ssub.s32 1, %s4
  %s7 = scalar_select 0, %s6, %s4
  $region1: #{dcdisc_forward.8} parent=0
    #allocation2 [shape = 'u8[262144]{0}', space=vmem, size = 0x40000, scoped, tag = 'input window, operand 0']
    #allocation3 [shape = 's32[2]{0}', space=sflag, size = 0x8, scoped, tag = 'scoped memory for dcdisc_forward.8']
    #allocation4 [shape = 's32[2]{0}', space=sflag, size = 0x8, scoped, tag = 'scoped memory for dcdisc_forward.8']
    #allocation5 [shape = 'u8[32768]{0}', space=vmem, size = 0x8000, scoped, tag = 'input window, operand 1, single buffered']
    #allocation6 [shape = 's32[1]{0}', space=sflag, size = 0x4, scoped, tag = 'scoped memory for dcdisc_forward.8']
    #allocation7 [shape = 'u8[512]{0}', space=vmem, size = 0x400, scoped, tag = 'input window, operand 2, single buffered']
    #allocation8 [shape = 'u8[262144]{0}', space=vmem, size = 0x40000, scoped, tag = 'output window, operand 0']
    %8 = vsyncpa [#allocation3], 0
    %s9 = scalar_lea.sflag [#allocation3], 1
    %10 = vsyncpa %s9, 0
    %11 = vsyncpa [#allocation6], 0
    %12 = vsyncpa [#allocation4], 0
    %s13 = scalar_lea.sflag [#allocation4], 1
    %14 = vsyncpa %s13, 0
    loop: start=0, step=1, limit=6
    $region2: #{dcdisc_forward.8} parent=1 // loop_pre_header
      _
    $region3: #{dcdisc_forward.8} parent=1 // loop_header
      %s16 = sphi 0, %s20
      %p17 = scmp.ge.s32.totalorder %s16, 6
      %s26 = sphi 0, %s28
      %s29 = sphi 0, %s26
      %s30 = sphi 0, %s29
      %s46 = sphi 0, %s30
      %s50 = sphi 0, %s50
      %s52 = sphi 0, %s50
      %s53 = sphi 0, %s52
      %s67 = sphi 0, %s53
      %s71 = sphi 0, %s71
      %s73 = sphi 0, %s71
      %s74 = sphi 0, %s73
      %s88 = sphi 0, %s74
      %s94 = sphi 0, %s96
      %s97 = sphi 0, %s94
      %s98 = sphi 0, %s97
      %s114 = sphi 0, %s98
    $region4: #{dcdisc_forward.8} parent=1 // loop_header_branch
      %19 = sbr.rel (%p17) target = $region8
    $region5: #{dcdisc_forward.8} parent=1 // loop_body
      %s21 = ssub.s32 %s16, 1
      %s22 = ssub.s32 %s16, 2
      %s23 = sadd.s32 %s16, 1
      %s24 = ssub.s32 %s16, %s23
      %p25 = scmp.eq.s32.totalorder %s24, 0
      %s27 = sadd.s32 %s26, 1
      %s28 = scalar_select %p25, %s26, %s27
      %p31 = pneg %p25
      %p32 = scmp.eq.s32.totalorder %s16, 3
      %p33 = por %p31, %p32
      %p34 = scmp.ne.s32.totalorder %s26, %s29
      %p35 = scmp.eq.s32.totalorder %s16, 0
      %p36 = por %p34, %p35
      %p37 = scmp.ne.s32.totalorder %s26, %s29
      %p38 = scmp.eq.s32.totalorder %s21, 3
      %p39 = por %p37, %p38
      %p40 = scmp.ne.s32.totalorder %s29, %s30
      %p41 = scmp.eq.s32.totalorder %s21, 0
      %p42 = por %p40, %p41
      %p43 = scmp.ne.s32.totalorder %s29, %s30
      %p44 = scmp.eq.s32.totalorder %s22, 3
      %p45 = por %p43, %p44
      %p47 = scmp.ne.s32.totalorder %s30, %s46
      %p48 = scmp.eq.s32.totalorder %s22, 0
      %p49 = por %p47, %p48
      %s51 = sadd.s32 %s50, 1
      %p54 = scmp.eq.s32.totalorder %s16, 3
      %p55 = scmp.ne.s32.totalorder %s50, %s52
      %p56 = scmp.eq.s32.totalorder %s16, 0
      %p57 = por %p55, %p56
      %p58 = scmp.ne.s32.totalorder %s50, %s52
      %p59 = scmp.eq.s32.totalorder %s21, 3
      %p60 = por %p58, %p59
      %p61 = scmp.ne.s32.totalorder %s52, %s53
      %p62 = scmp.eq.s32.totalorder %s21, 0
      %p63 = por %p61, %p62
      %p64 = scmp.ne.s32.totalorder %s52, %s53
      %p65 = scmp.eq.s32.totalorder %s22, 3
      %p66 = por %p64, %p65
      %p68 = scmp.ne.s32.totalorder %s53, %s67
      %p69 = scmp.eq.s32.totalorder %s22, 0
      %p70 = por %p68, %p69
      %s72 = sadd.s32 %s71, 1
      %p75 = scmp.eq.s32.totalorder %s16, 3
      %p76 = scmp.ne.s32.totalorder %s71, %s73
      %p77 = scmp.eq.s32.totalorder %s16, 0
      %p78 = por %p76, %p77
      %p79 = scmp.ne.s32.totalorder %s71, %s73
      %p80 = scmp.eq.s32.totalorder %s21, 3
      %p81 = por %p79, %p80
      %p82 = scmp.ne.s32.totalorder %s73, %s74
      %p83 = scmp.eq.s32.totalorder %s21, 0
      %p84 = por %p82, %p83
      %p85 = scmp.ne.s32.totalorder %s73, %s74
      %p86 = scmp.eq.s32.totalorder %s22, 3
      %p87 = por %p85, %p86
      %p89 = scmp.ne.s32.totalorder %s74, %s88
      %p90 = scmp.eq.s32.totalorder %s22, 0
      %p91 = por %p89, %p90
      %s92 = ssub.s32 %s16, %s23
      %p93 = scmp.eq.s32.totalorder %s92, 0
      %s95 = sadd.s32 %s94, 1
      %s96 = scalar_select %p93, %s94, %s95
      %p99 = pneg %p93
      %p100 = scmp.eq.s32.totalorder %s16, 3
      %p101 = por %p99, %p100
      %p102 = scmp.ne.s32.totalorder %s94, %s97
      %p103 = scmp.eq.s32.totalorder %s16, 0
      %p104 = por %p102, %p103
      %p105 = scmp.ne.s32.totalorder %s94, %s97
      %p106 = scmp.eq.s32.totalorder %s21, 3
      %p107 = por %p105, %p106
      %p108 = scmp.ne.s32.totalorder %s97, %s98
      %p109 = scmp.eq.s32.totalorder %s21, 0
      %p110 = por %p108, %p109
      %p111 = scmp.ne.s32.totalorder %s97, %s98
      %p112 = scmp.eq.s32.totalorder %s22, 3
      %p113 = por %p111, %p112
      %p115 = scmp.ne.s32.totalorder %s98, %s114
      %p116 = scmp.eq.s32.totalorder %s22, 0
      %p117 = por %p115, %p116
      %p118 = scmp.le.s32.totalorder 1, %s16
      %p119 = scmp.lt.s32.totalorder %s16, 5
      %p120 = pnand %p118, %p119
      %p121 = pneg %p120
      // Predicated region
      $region9: #{dcdisc_forward.8} parent=5 // pred_check
        _
      $region10: #{dcdisc_forward.8} parent=5 // pred_check_branch
        %123 = sbr.rel (%p120) target = $region12
      $region11: #{dcdisc_forward.8} parent=5 // pred_region
        %s124 = ssub.s32 %s16, 1
        // Predicated region
        $region13: #{dcdisc_forward.8} parent=11 // pred_check
          %p125 = pneg %p63
        $region14: #{dcdisc_forward.8} parent=11 // pred_check_branch
          %127 = sbr.rel (%p125) target = $region16
        $region15: #{dcdisc_forward.8} parent=11 // pred_region
          %s129 = ssub.s32 1024, 1024
          %130 = vsyncadd [#allocation6], %s129
          %s131 = sshll.u32 [#allocation5], 4
          %s132 = int_to_ptr.vmem [resolvable:$true] %s131
          %137 = dma.hbm_to_vmem [thread:$0]  %s1, 1024, %s132, [#allocation6], 64, 64, 4
        $region16: #{dcdisc_forward.8} parent=11 // pred_fallthru
          _
        // Predicated region
        $region17: #{dcdisc_forward.8} parent=11 // pred_check
          %p138 = pneg %p84
        $region18: #{dcdisc_forward.8} parent=11 // pred_check_branch
          %140 = sbr.rel (%p138) target = $region20
        $region19: #{dcdisc_forward.8} parent=11 // pred_region
          %s142 = ssub.s32 16, 16
          %143 = vsyncadd [#allocation6], %s142
          %s145 = sshll.u32 [#allocation7], 4
          %s146 = int_to_ptr.vmem [resolvable:$true] %s145
          %148 = dma.hbm_to_vmem [thread:$0]  %s2, 16, %s146, [#allocation6]
        $region20: #{dcdisc_forward.8} parent=11 // pred_fallthru
          _
      $region12: #{dcdisc_forward.8} parent=5 // pred_fallthru
        _
      %p149 = scmp.lt.s32.totalorder %s16, 4
      // Predicated region
      $region21: #{dcdisc_forward.8} parent=5 // pred_check
        %p150 = pneg %p149
      $region22: #{dcdisc_forward.8} parent=5 // pred_check_branch
        %152 = sbr.rel (%p150) target = $region24
      $region23: #{dcdisc_forward.8} parent=5 // pred_region
        // Predicated region
        $region25: #{dcdisc_forward.8} parent=23 // pred_check
          %p153 = pneg %p36
        $region26: #{dcdisc_forward.8} parent=23 // pred_check_branch
          %155 = sbr.rel (%p153) target = $region28
        $region27: #{dcdisc_forward.8} parent=23 // pred_region
          %s156 = sand.u32 %s26, 1
          %s157 = scalar_lea.sflag [#allocation3], %s156
          %s158 = sand.u32 %s26, 1
          %s159 = smul.addr %s158, 256
          %s160 = scalar_lea.vmem [#allocation2], %s159
          %s161 = smul.u32 64, %s16
          %s163 = ssub.s32 4096, 4096
          %164 = vsyncadd %s157, %s163
          %s165 = smul.addr %s161, 64
          %s166 = scalar_lea.hbm %s0, %s165
          %s167 = sshll.u32 %s160, 4
          %s168 = int_to_ptr.vmem [resolvable:$true] %s167
          %173 = dma.hbm_to_vmem [thread:$0]  %s166, 4096, %s168, %s157, 64, 64, 4
        $region28: #{dcdisc_forward.8} parent=23 // pred_fallthru
          _
      $region24: #{dcdisc_forward.8} parent=5 // pred_fallthru
        _
      %p174 = scmp.le.s32.totalorder 1, %s16
      %p175 = scmp.lt.s32.totalorder %s16, 5
      %p176 = pnand %p174, %p175
      %p177 = pneg %p176
      // Predicated region
      $region29: #{dcdisc_forward.8} parent=5 // pred_check
        _
      $region30: #{dcdisc_forward.8} parent=5 // pred_check_branch
        %179 = sbr.rel (%p176) target = $region32
      $region31: #{dcdisc_forward.8} parent=5 // pred_region
        %s180 = ssub.s32 %s16, 1
        %s181 = sand.u32 %s29, 1
        %s182 = scalar_lea.sflag [#allocation3], %s181
        %s183 = sand.u32 %s29, 1
        %s184 = smul.addr %s183, 256
        %s185 = scalar_lea.vmem [#allocation2], %s184
        // Predicated region
        $region33: #{dcdisc_forward.8} parent=31 // pred_check
          %p186 = pneg %p42
        $region34: #{dcdisc_forward.8} parent=31 // pred_check_branch
          %188 = sbr.rel (%p186) target = $region36
        $region35: #{dcdisc_forward.8} parent=31 // pred_region
          %189 = dma.done %s182, 4096
        $region36: #{dcdisc_forward.8} parent=31 // pred_fallthru
          _
        // Predicated region
        $region37: #{dcdisc_forward.8} parent=31 // pred_check
          %p190 = pneg %p63
        $region38: #{dcdisc_forward.8} parent=31 // pred_check_branch
          %192 = sbr.rel (%p190) target = $region40
        $region39: #{dcdisc_forward.8} parent=31 // pred_region
          %193 = dma.done [#allocation6], 1024
        $region40: #{dcdisc_forward.8} parent=31 // pred_fallthru
          _
        // Predicated region
        $region41: #{dcdisc_forward.8} parent=31 // pred_check
          %p194 = pneg %p84
        $region42: #{dcdisc_forward.8} parent=31 // pred_check_branch
          %196 = sbr.rel (%p194) target = $region44
        $region43: #{dcdisc_forward.8} parent=31 // pred_region
          %197 = dma.done [#allocation6], 16
        $region44: #{dcdisc_forward.8} parent=31 // pred_fallthru
          _
        %s198 = sand.u32 %s29, 1
        %s199 = scalar_lea.sflag [#allocation3], %s198
        %s200 = sand.u32 %s29, 1
        %s201 = smul.addr %s200, 256
        %s202 = scalar_lea.vmem [#allocation2], %s201
        %p203 = pneg %p42
        %p204 = pneg %p39
        %p205 = pneg %p63
        %p206 = pneg %p60
        %p207 = pneg %p84
        %p208 = pneg %p81
        %p209 = pneg %p110
        %p210 = pneg %p107
        %s211 = sand.u32 %s97, 1
        %s212 = scalar_lea.sflag [#allocation4], %s211
        %s213 = sand.u32 %s97, 1
        %s214 = smul.addr %s213, 256
        %s215 = scalar_lea.vmem [#allocation8], %s214
        %s216 = smul.u32 64, %s21
        %s217 = smul.u32 64, %s21
        %v219 = vld [vmem:[%s185] sm:$0xf]
        %v220 = vld [vmem:[%s185 + $0x4] sm:$0xf]
        %v221 = vld [vmem:[%s185 + $0x8] sm:$0xf]
        %v222 = vld [vmem:[%s185 + $0xc] sm:$0xf]
        %v223 = vld [vmem:[%s185 + $0x10] sm:$0xf]
        %v224 = vld [vmem:[%s185 + $0x14] sm:$0xf]
        %v225 = vld [vmem:[%s185 + $0x18] sm:$0xf]
        %v226 = vld [vmem:[%s185 + $0x1c] sm:$0xf]
        %v227 = vld [vmem:[%s185 + $0x20] sm:$0xf]
        %v228 = vld [vmem:[%s185 + $0x24] sm:$0xf]
        %v229 = vld [vmem:[%s185 + $0x28] sm:$0xf]
        %v230 = vld [vmem:[%s185 + $0x2c] sm:$0xf]
        %v231 = vld [vmem:[%s185 + $0x30] sm:$0xf]
        %v232 = vld [vmem:[%s185 + $0x34] sm:$0xf]
        %v233 = vld [vmem:[%s185 + $0x38] sm:$0xf]
        %v234 = vld [vmem:[%s185 + $0x3c] sm:$0xf]
        %v235 = vld [vmem:[%s185 + $0x40] sm:$0xf]
        %v236 = vld [vmem:[%s185 + $0x44] sm:$0xf]
        %v237 = vld [vmem:[%s185 + $0x48] sm:$0xf]
        %v238 = vld [vmem:[%s185 + $0x4c] sm:$0xf]
        %v239 = vld [vmem:[%s185 + $0x50] sm:$0xf]
        %v240 = vld [vmem:[%s185 + $0x54] sm:$0xf]
        %v241 = vld [vmem:[%s185 + $0x58] sm:$0xf]
        %v242 = vld [vmem:[%s185 + $0x5c] sm:$0xf]
        %v243 = vld [vmem:[%s185 + $0x60] sm:$0xf]
        %v244 = vld [vmem:[%s185 + $0x64] sm:$0xf]
        %v245 = vld [vmem:[%s185 + $0x68] sm:$0xf]
        %v246 = vld [vmem:[%s185 + $0x6c] sm:$0xf]
        %v247 = vld [vmem:[%s185 + $0x70] sm:$0xf]
        %v248 = vld [vmem:[%s185 + $0x74] sm:$0xf]
        %v249 = vld [vmem:[%s185 + $0x78] sm:$0xf]
        %v250 = vld [vmem:[%s185 + $0x7c] sm:$0xf]
        %v251 = vld [vmem:[%s185 + $0x80] sm:$0xf]
        %v252 = vld [vmem:[%s185 + $0x84] sm:$0xf]
        %v253 = vld [vmem:[%s185 + $0x88] sm:$0xf]
        %v254 = vld [vmem:[%s185 + $0x8c] sm:$0xf]
        %v255 = vld [vmem:[%s185 + $0x90] sm:$0xf]
        %v256 = vld [vmem:[%s185 + $0x94] sm:$0xf]
        %v257 = vld [vmem:[%s185 + $0x98] sm:$0xf]
        %v258 = vld [vmem:[%s185 + $0x9c] sm:$0xf]
        %v259 = vld [vmem:[%s185 + $0xa0] sm:$0xf]
        %v260 = vld [vmem:[%s185 + $0xa4] sm:$0xf]
        %v261 = vld [vmem:[%s185 + $0xa8] sm:$0xf]
        %v262 = vld [vmem:[%s185 + $0xac] sm:$0xf]
        %v263 = vld [vmem:[%s185 + $0xb0] sm:$0xf]
        %v264 = vld [vmem:[%s185 + $0xb4] sm:$0xf]
        %v265 = vld [vmem:[%s185 + $0xb8] sm:$0xf]
        %v266 = vld [vmem:[%s185 + $0xbc] sm:$0xf]
        %v267 = vld [vmem:[%s185 + $0xc0] sm:$0xf]
        %v268 = vld [vmem:[%s185 + $0xc4] sm:$0xf]
        %v269 = vld [vmem:[%s185 + $0xc8] sm:$0xf]
        %v270 = vld [vmem:[%s185 + $0xcc] sm:$0xf]
        %v271 = vld [vmem:[%s185 + $0xd0] sm:$0xf]
        %v272 = vld [vmem:[%s185 + $0xd4] sm:$0xf]
        %v273 = vld [vmem:[%s185 + $0xd8] sm:$0xf]
        %v274 = vld [vmem:[%s185 + $0xdc] sm:$0xf]
        %v275 = vld [vmem:[%s185 + $0xe0] sm:$0xf]
        %v276 = vld [vmem:[%s185 + $0xe4] sm:$0xf]
        %v277 = vld [vmem:[%s185 + $0xe8] sm:$0xf]
        %v278 = vld [vmem:[%s185 + $0xec] sm:$0xf]
        %v279 = vld [vmem:[%s185 + $0xf0] sm:$0xf]
        %v280 = vld [vmem:[%s185 + $0xf4] sm:$0xf]
        %v281 = vld [vmem:[%s185 + $0xf8] sm:$0xf]
        %v282 = vld [vmem:[%s185 + $0xfc] sm:$0xf]
        %v283 = vld [vmem:[#allocation5] sm:$0xf]
        %v284 = vld [vmem:[#allocation5 + $0x4] sm:$0xf]
        %v285 = vld [vmem:[#allocation5 + $0x8] sm:$0xf]
        %v286 = vld [vmem:[#allocation5 + $0xc] sm:$0xf]
        %v287 = vld [vmem:[#allocation5 + $0x10] sm:$0xf]
        %v288 = vld [vmem:[#allocation5 + $0x14] sm:$0xf]
        %v289 = vld [vmem:[#allocation5 + $0x18] sm:$0xf]
        %v290 = vld [vmem:[#allocation5 + $0x1c] sm:$0xf]
        %v291 = vld [vmem:[#allocation5 + $0x20] sm:$0xf]
        %v292 = vld [vmem:[#allocation5 + $0x24] sm:$0xf]
        %v293 = vld [vmem:[#allocation5 + $0x28] sm:$0xf]
        %v294 = vld [vmem:[#allocation5 + $0x2c] sm:$0xf]
        %v295 = vld [vmem:[#allocation5 + $0x30] sm:$0xf]
        %v296 = vld [vmem:[#allocation5 + $0x34] sm:$0xf]
        %v297 = vld [vmem:[#allocation5 + $0x38] sm:$0xf]
        %v298 = vld [vmem:[#allocation5 + $0x3c] sm:$0xf]
        %v299 = vld [vmem:[#allocation7] sm:$0x1]
        %v301 = vlaneseq
        %v302 = vshrl.u32 %v301, 7
        %v303 = vsub.s32 0, %v302
        %v304 = vrot.slane %v299, %v303
        %v370 = vunpack.c.l.b16 %v219
        %v371 = vunpack.c.l.b16 %v220
        %v372 = vunpack.c.l.b16 %v221
        %v373 = vunpack.c.l.b16 %v222
        %v374 = vunpack.c.l.b16 %v223
        %v375 = vunpack.c.l.b16 %v224
        %v376 = vunpack.c.l.b16 %v225
        %v377 = vunpack.c.l.b16 %v226
        %v378 = vunpack.c.l.b16 %v227
        %v379 = vunpack.c.l.b16 %v228
        %v380 = vunpack.c.l.b16 %v229
        %v381 = vunpack.c.l.b16 %v230
        %v382 = vunpack.c.l.b16 %v231
        %v383 = vunpack.c.l.b16 %v232
        %v384 = vunpack.c.l.b16 %v233
        %v385 = vunpack.c.l.b16 %v234
        %v386 = vunpack.c.l.b16 %v235
        %v387 = vunpack.c.l.b16 %v236
        %v388 = vunpack.c.l.b16 %v237
        %v389 = vunpack.c.l.b16 %v238
        %v390 = vunpack.c.l.b16 %v239
        %v391 = vunpack.c.l.b16 %v240
        %v392 = vunpack.c.l.b16 %v241
        %v393 = vunpack.c.l.b16 %v242
        %v394 = vunpack.c.l.b16 %v243
        %v395 = vunpack.c.l.b16 %v244
        %v396 = vunpack.c.l.b16 %v245
        %v397 = vunpack.c.l.b16 %v246
        %v398 = vunpack.c.l.b16 %v247
        %v399 = vunpack.c.l.b16 %v248
        %v400 = vunpack.c.l.b16 %v249
        %v401 = vunpack.c.l.b16 %v250
        %v402 = vunpack.c.l.b16 %v251
        %v403 = vunpack.c.l.b16 %v252
        %v404 = vunpack.c.l.b16 %v253
        %v405 = vunpack.c.l.b16 %v254
        %v406 = vunpack.c.l.b16 %v255
        %v407 = vunpack.c.l.b16 %v256
        %v408 = vunpack.c.l.b16 %v257
        %v409 = vunpack.c.l.b16 %v258
        %v410 = vunpack.c.l.b16 %v259
        %v411 = vunpack.c.l.b16 %v260
        %v412 = vunpack.c.l.b16 %v261
        %v413 = vunpack.c.l.b16 %v262
        %v414 = vunpack.c.l.b16 %v263
        %v415 = vunpack.c.l.b16 %v264
        %v416 = vunpack.c.l.b16 %v265
        %v417 = vunpack.c.l.b16 %v266
        %v418 = vunpack.c.l.b16 %v267
        %v419 = vunpack.c.l.b16 %v268
        %v420 = vunpack.c.l.b16 %v269
        %v421 = vunpack.c.l.b16 %v270
        %v422 = vunpack.c.l.b16 %v271
        %v423 = vunpack.c.l.b16 %v272
        %v424 = vunpack.c.l.b16 %v273
        %v425 = vunpack.c.l.b16 %v274
        %v426 = vunpack.c.l.b16 %v275
        %v427 = vunpack.c.l.b16 %v276
        %v428 = vunpack.c.l.b16 %v277
        %v429 = vunpack.c.l.b16 %v278
        %v430 = vunpack.c.l.b16 %v279
        %v431 = vunpack.c.l.b16 %v280
        %v432 = vunpack.c.l.b16 %v281
        %v433 = vunpack.c.l.b16 %v282
        %v434 = vpack.c.b16 %v371, %v370
        %v435 = vpack.c.b16 %v373, %v372
        %v436 = vpack.c.b16 %v375, %v374
        %v437 = vpack.c.b16 %v377, %v376
        %v438 = vpack.c.b16 %v379, %v378
        %v439 = vpack.c.b16 %v381, %v380
        %v440 = vpack.c.b16 %v383, %v382
        %v441 = vpack.c.b16 %v385, %v384
        %v442 = vpack.c.b16 %v387, %v386
        %v443 = vpack.c.b16 %v389, %v388
        %v444 = vpack.c.b16 %v391, %v390
        %v445 = vpack.c.b16 %v393, %v392
        %v446 = vpack.c.b16 %v395, %v394
        %v447 = vpack.c.b16 %v397, %v396
        %v448 = vpack.c.b16 %v399, %v398
        %v449 = vpack.c.b16 %v401, %v400
        %v450 = vpack.c.b16 %v403, %v402
        %v451 = vpack.c.b16 %v405, %v404
        %v452 = vpack.c.b16 %v407, %v406
        %v453 = vpack.c.b16 %v409, %v408
        %v454 = vpack.c.b16 %v411, %v410
        %v455 = vpack.c.b16 %v413, %v412
        %v456 = vpack.c.b16 %v415, %v414
        %v457 = vpack.c.b16 %v417, %v416
        %v458 = vpack.c.b16 %v419, %v418
        %v459 = vpack.c.b16 %v421, %v420
        %v460 = vpack.c.b16 %v423, %v422
        %v461 = vpack.c.b16 %v425, %v424
        %v462 = vpack.c.b16 %v427, %v426
        %v463 = vpack.c.b16 %v429, %v428
        %v464 = vpack.c.b16 %v431, %v430
        %v465 = vpack.c.b16 %v433, %v432
        %v514 = vunpack.c.l.b16 %v283
        %v515 = vunpack.c.l.b16 %v284
        %v516 = vunpack.c.l.b16 %v285
        %v517 = vunpack.c.l.b16 %v286
        %v518 = vunpack.c.l.b16 %v287
        %v519 = vunpack.c.l.b16 %v288
        %v520 = vunpack.c.l.b16 %v289
        %v521 = vunpack.c.l.b16 %v290
        %v522 = vunpack.c.l.b16 %v291
        %v523 = vunpack.c.l.b16 %v292
        %v524 = vunpack.c.l.b16 %v293
        %v525 = vunpack.c.l.b16 %v294
        %v526 = vunpack.c.l.b16 %v295
        %v527 = vunpack.c.l.b16 %v296
        %v528 = vunpack.c.l.b16 %v297
        %v529 = vunpack.c.l.b16 %v298
        %v530 = vpack.c.b16 %v515, %v514
        %v531 = vpack.c.b16 %v517, %v516
        %v532 = vpack.c.b16 %v519, %v518
        %v533 = vpack.c.b16 %v521, %v520
        %v534 = vpack.c.b16 %v523, %v522
        %v535 = vpack.c.b16 %v525, %v524
        %v536 = vpack.c.b16 %v527, %v526
        %v537 = vpack.c.b16 %v529, %v528
        %546 = vmatprep.subr.bf16.mxu0 0
        %547 = vmatpush1.bf16.msra.mxu0 %v530
        %548 = vmatprep.subr.bf16.mxu0 0
        %549 = vmatpush1.bf16.msra.mxu0 %v531
        %550 = vmatprep.subr.bf16.mxu0 0
        %551 = vmatpush1.bf16.msra.mxu0 %v532
        %552 = vmatprep.subr.bf16.mxu0 0
        %553 = vmatpush1.bf16.msra.mxu0 %v533
        %554 = vmatprep.subr.bf16.mxu0 0
        %555 = vmatpush1.bf16.msra.mxu0 %v534
        %556 = vmatprep.subr.bf16.mxu0 0
        %557 = vmatpush1.bf16.msra.mxu0 %v535
        %558 = vmatprep.subr.bf16.mxu0 0
        %559 = vmatpush1.bf16.msra.mxu0 %v536
        %560 = vmatprep.subr.bf16.mxu0 0
        %561 = vmatpush1.bf16.msra.mxu0 %v537
        %562 = vmatprep.subr.bf16.mxu0 0
        %563 = vmatpush1.bf16.msra.mxu0 0
        %564 = vmatprep.subr.bf16.mxu0 0
        %565 = vmatpush1.bf16.msra.mxu0 0
        %566 = vmatprep.subr.bf16.mxu0 0
        %567 = vmatpush1.bf16.msra.mxu0 0
        %568 = vmatprep.subr.bf16.mxu0 0
        %569 = vmatpush1.bf16.msra.mxu0 0
        %570 = vmatprep.subr.bf16.mxu0 0
        %571 = vmatpush1.bf16.msra.mxu0 0
        %572 = vmatprep.subr.bf16.mxu0 0
        %573 = vmatpush1.bf16.msra.mxu0 0
        %574 = vmatprep.subr.bf16.mxu0 0
        %575 = vmatpush1.bf16.msra.mxu0 0
        %576 = vmatprep.subr.bf16.mxu0 0
        %577 = vmatpush1.bf16.msra.mxu0 0
        %578 = vmatprep.mubr.bf16.mxu0 0
        %579 = vmatmul.mubr.bf16.gmra.mrb[0].mxu0 %v434
        %v580 = vpop.f32.mrb[0].mxu0
        %v581 = vadd.f32 %v304, %v580
        %v582 = vpop.f32.mrb[0].mxu0
        %v583 = vpop.f32.mrb[0].mxu0
        %v584 = vadd.f32 %v304, %v583
        %v585 = vpop.f32.mrb[0].mxu0
        %586 = vmatprep.mubr.bf16.mxu0 0
        %587 = vmatmul.mubr.bf16.gmra.mrb[0].mxu0 %v435
        %v588 = vpop.f32.mrb[0].mxu0
        %v589 = vadd.f32 %v304, %v588
        %v590 = vpop.f32.mrb[0].mxu0
        %v591 = vpop.f32.mrb[0].mxu0
        %v592 = vadd.f32 %v304, %v591
        %v593 = vpop.f32.mrb[0].mxu0
        %594 = vmatprep.mubr.bf16.mxu0 0
        %595 = vmatmul.mubr.bf16.gmra.mrb[0].mxu0 %v436
        %v596 = vpop.f32.mrb[0].mxu0
        %v597 = vadd.f32 %v304, %v596
        %v598 = vpop.f32.mrb[0].mxu0
        %v599 = vpop.f32.mrb[0].mxu0
        %v600 = vadd.f32 %v304, %v599
        %v601 = vpop.f32.mrb[0].mxu0
        %602 = vmatprep.mubr.bf16.mxu0 0
        %603 = vmatmul.mubr.bf16.gmra.mrb[0].mxu0 %v437
        %v604 = vpop.f32.mrb[0].mxu0
        %v605 = vadd.f32 %v304, %v604
        %v606 = vpop.f32.mrb[0].mxu0
        %v607 = vpop.f32.mrb[0].mxu0
        %v608 = vadd.f32 %v304, %v607
        %v609 = vpop.f32.mrb[0].mxu0
        %610 = vmatprep.mubr.bf16.mxu0 0
        %611 = vmatmul.mubr.bf16.gmra.mrb[0].mxu0 %v438
        %v612 = vpop.f32.mrb[0].mxu0
        %v613 = vadd.f32 %v304, %v612
        %v614 = vpop.f32.mrb[0].mxu0
        %v615 = vpop.f32.mrb[0].mxu0
        %v616 = vadd.f32 %v304, %v615
        %v617 = vpop.f32.mrb[0].mxu0
        %618 = vmatprep.mubr.bf16.mxu0 0
        %619 = vmatmul.mubr.bf16.gmra.mrb[0].mxu0 %v439
        %v620 = vpop.f32.mrb[0].mxu0
        %v621 = vadd.f32 %v304, %v620
        %v622 = vpop.f32.mrb[0].mxu0
        %v623 = vpop.f32.mrb[0].mxu0
        %v624 = vadd.f32 %v304, %v623
        %v625 = vpop.f32.mrb[0].mxu0
        %626 = vmatprep.mubr.bf16.mxu0 0
        %627 = vmatmul.mubr.bf16.gmra.mrb[0].mxu0 %v440
        %v628 = vpop.f32.mrb[0].mxu0
        %v629 = vadd.f32 %v304, %v628
        %v630 = vpop.f32.mrb[0].mxu0
        %v631 = vpop.f32.mrb[0].mxu0
        %v632 = vadd.f32 %v304, %v631
        %v633 = vpop.f32.mrb[0].mxu0
        %634 = vmatprep.mubr.bf16.mxu0 0
        %635 = vmatmul.mubr.bf16.gmra.mrb[0].mxu0 %v441
        %v636 = vpop.f32.mrb[0].mxu0
        %v637 = vadd.f32 %v304, %v636
        %v638 = vpop.f32.mrb[0].mxu0
        %v639 = vpop.f32.mrb[0].mxu0
        %v640 = vadd.f32 %v304, %v639
        %v641 = vpop.f32.mrb[0].mxu0
        %642 = vmatprep.mubr.bf16.mxu0 0
        %643 = vmatmul.mubr.bf16.gmra.mrb[0].mxu0 %v442
        %v644 = vpop.f32.mrb[0].mxu0
        %v645 = vadd.f32 %v304, %v644
        %v646 = vpop.f32.mrb[0].mxu0
        %v647 = vpop.f32.mrb[0].mxu0
        %v648 = vadd.f32 %v304, %v647
        %v649 = vpop.f32.mrb[0].mxu0
        %650 = vmatprep.mubr.bf16.mxu0 0
        %651 = vmatmul.mubr.bf16.gmra.mrb[0].mxu0 %v443
        %v652 = vpop.f32.mrb[0].mxu0
        %v653 = vadd.f32 %v304, %v652
        %v654 = vpop.f32.mrb[0].mxu0
        %v655 = vpop.f32.mrb[0].mxu0
        %v656 = vadd.f32 %v304, %v655
        %v657 = vpop.f32.mrb[0].mxu0
        %658 = vmatprep.mubr.bf16.mxu0 0
        %659 = vmatmul.mubr.bf16.gmra.mrb[0].mxu0 %v444
        %v660 = vpop.f32.mrb[0].mxu0
        %v661 = vadd.f32 %v304, %v660
        %v662 = vpop.f32.mrb[0].mxu0
        %v663 = vpop.f32.mrb[0].mxu0
        %v664 = vadd.f32 %v304, %v663
        %v665 = vpop.f32.mrb[0].mxu0
        %666 = vmatprep.mubr.bf16.mxu0 0
        %667 = vmatmul.mubr.bf16.gmra.mrb[0].mxu0 %v445
        %v668 = vpop.f32.mrb[0].mxu0
        %v669 = vadd.f32 %v304, %v668
        %v670 = vpop.f32.mrb[0].mxu0
        %v671 = vpop.f32.mrb[0].mxu0
        %v672 = vadd.f32 %v304, %v671
        %v673 = vpop.f32.mrb[0].mxu0
        %674 = vmatprep.mubr.bf16.mxu0 0
        %675 = vmatmul.mubr.bf16.gmra.mrb[0].mxu0 %v446
        %v676 = vpop.f32.mrb[0].mxu0
        %v677 = vadd.f32 %v304, %v676
        %v678 = vpop.f32.mrb[0].mxu0
        %v679 = vpop.f32.mrb[0].mxu0
        %v680 = vadd.f32 %v304, %v679
        %v681 = vpop.f32.mrb[0].mxu0
        %682 = vmatprep.mubr.bf16.mxu0 0
        %683 = vmatmul.mubr.bf16.gmra.mrb[0].mxu0 %v447
        %v684 = vpop.f32.mrb[0].mxu0
        %v685 = vadd.f32 %v304, %v684
        %v686 = vpop.f32.mrb[0].mxu0
        %v687 = vpop.f32.mrb[0].mxu0
        %v688 = vadd.f32 %v304, %v687
        %v689 = vpop.f32.mrb[0].mxu0
        %690 = vmatprep.mubr.bf16.mxu0 0
        %691 = vmatmul.mubr.bf16.gmra.mrb[0].mxu0 %v448
        %v692 = vpop.f32.mrb[0].mxu0
        %v693 = vadd.f32 %v304, %v692
        %v694 = vpop.f32.mrb[0].mxu0
        %v695 = vpop.f32.mrb[0].mxu0
        %v696 = vadd.f32 %v304, %v695
        %v697 = vpop.f32.mrb[0].mxu0
        %698 = vmatprep.mubr.bf16.mxu0 0
        %699 = vmatmul.mubr.bf16.gmra.mrb[0].mxu0 %v449
        %v700 = vpop.f32.mrb[0].mxu0
        %v701 = vadd.f32 %v304, %v700
        %v702 = vpop.f32.mrb[0].mxu0
        %v703 = vpop.f32.mrb[0].mxu0
        %v704 = vadd.f32 %v304, %v703
        %v705 = vpop.f32.mrb[0].mxu0
        %706 = vmatprep.mubr.bf16.mxu0 0
        %707 = vmatmul.mubr.bf16.gmra.mrb[0].mxu0 %v450
        %v708 = vpop.f32.mrb[0].mxu0
        %v709 = vadd.f32 %v304, %v708
        %v710 = vpop.f32.mrb[0].mxu0
        %v711 = vpop.f32.mrb[0].mxu0
        %v712 = vadd.f32 %v304, %v711
        %v713 = vpop.f32.mrb[0].mxu0
        %714 = vmatprep.mubr.bf16.mxu0 0
        %715 = vmatmul.mubr.bf16.gmra.mrb[0].mxu0 %v451
        %v716 = vpop.f32.mrb[0].mxu0
        %v717 = vadd.f32 %v304, %v716
        %v718 = vpop.f32.mrb[0].mxu0
        %v719 = vpop.f32.mrb[0].mxu0
        %v720 = vadd.f32 %v304, %v719
        %v721 = vpop.f32.mrb[0].mxu0
        %722 = vmatprep.mubr.bf16.mxu0 0
        %723 = vmatmul.mubr.bf16.gmra.mrb[0].mxu0 %v452
        %v724 = vpop.f32.mrb[0].mxu0
        %v725 = vadd.f32 %v304, %v724
        %v726 = vpop.f32.mrb[0].mxu0
        %v727 = vpop.f32.mrb[0].mxu0
        %v728 = vadd.f32 %v304, %v727
        %v729 = vpop.f32.mrb[0].mxu0
        %730 = vmatprep.mubr.bf16.mxu0 0
        %731 = vmatmul.mubr.bf16.gmra.mrb[0].mxu0 %v453
        %v732 = vpop.f32.mrb[0].mxu0
        %v733 = vadd.f32 %v304, %v732
        %v734 = vpop.f32.mrb[0].mxu0
        %v735 = vpop.f32.mrb[0].mxu0
        %v736 = vadd.f32 %v304, %v735
        %v737 = vpop.f32.mrb[0].mxu0
        %738 = vmatprep.mubr.bf16.mxu0 0
        %739 = vmatmul.mubr.bf16.gmra.mrb[0].mxu0 %v454
        %v740 = vpop.f32.mrb[0].mxu0
        %v741 = vadd.f32 %v304, %v740
        %v742 = vpop.f32.mrb[0].mxu0
        %v743 = vpop.f32.mrb[0].mxu0
        %v744 = vadd.f32 %v304, %v743
        %v745 = vpop.f32.mrb[0].mxu0
        %746 = vmatprep.mubr.bf16.mxu0 0
        %747 = vmatmul.mubr.bf16.gmra.mrb[0].mxu0 %v455
        %v748 = vpop.f32.mrb[0].mxu0
        %v749 = vadd.f32 %v304, %v748
        %v750 = vpop.f32.mrb[0].mxu0
        %v751 = vpop.f32.mrb[0].mxu0
        %v752 = vadd.f32 %v304, %v751
        %v753 = vpop.f32.mrb[0].mxu0
        %754 = vmatprep.mubr.bf16.mxu0 0
        %755 = vmatmul.mubr.bf16.gmra.mrb[0].mxu0 %v456
        %v756 = vpop.f32.mrb[0].mxu0
        %v757 = vadd.f32 %v304, %v756
        %v758 = vpop.f32.mrb[0].mxu0
        %v759 = vpop.f32.mrb[0].mxu0
        %v760 = vadd.f32 %v304, %v759
        %v761 = vpop.f32.mrb[0].mxu0
        %762 = vmatprep.mubr.bf16.mxu0 0
        %763 = vmatmul.mubr.bf16.gmra.mrb[0].mxu0 %v457
        %v764 = vpop.f32.mrb[0].mxu0
        %v765 = vadd.f32 %v304, %v764
        %v766 = vpop.f32.mrb[0].mxu0
        %v767 = vpop.f32.mrb[0].mxu0
        %v768 = vadd.f32 %v304, %v767
        %v769 = vpop.f32.mrb[0].mxu0
        %770 = vmatprep.mubr.bf16.mxu0 0
        %771 = vmatmul.mubr.bf16.gmra.mrb[0].mxu0 %v458
        %v772 = vpop.f32.mrb[0].mxu0
        %v773 = vadd.f32 %v304, %v772
        %v774 = vpop.f32.mrb[0].mxu0
        %v775 = vpop.f32.mrb[0].mxu0
        %v776 = vadd.f32 %v304, %v775
        %v777 = vpop.f32.mrb[0].mxu0
        %778 = vmatprep.mubr.bf16.mxu0 0
        %779 = vmatmul.mubr.bf16.gmra.mrb[0].mxu0 %v459
        %v780 = vpop.f32.mrb[0].mxu0
        %v781 = vadd.f32 %v304, %v780
        %v782 = vpop.f32.mrb[0].mxu0
        %v783 = vpop.f32.mrb[0].mxu0
        %v784 = vadd.f32 %v304, %v783
        %v785 = vpop.f32.mrb[0].mxu0
        %786 = vmatprep.mubr.bf16.mxu0 0
        %787 = vmatmul.mubr.bf16.gmra.mrb[0].mxu0 %v460
        %v788 = vpop.f32.mrb[0].mxu0
        %v789 = vadd.f32 %v304, %v788
        %v790 = vpop.f32.mrb[0].mxu0
        %v791 = vpop.f32.mrb[0].mxu0
        %v792 = vadd.f32 %v304, %v791
        %v793 = vpop.f32.mrb[0].mxu0
        %794 = vmatprep.mubr.bf16.mxu0 0
        %795 = vmatmul.mubr.bf16.gmra.mrb[0].mxu0 %v461
        %v796 = vpop.f32.mrb[0].mxu0
        %v797 = vadd.f32 %v304, %v796
        %v798 = vpop.f32.mrb[0].mxu0
        %v799 = vpop.f32.mrb[0].mxu0
        %v800 = vadd.f32 %v304, %v799
        %v801 = vpop.f32.mrb[0].mxu0
        %802 = vmatprep.mubr.bf16.mxu0 0
        %803 = vmatmul.mubr.bf16.gmra.mrb[0].mxu0 %v462
        %v804 = vpop.f32.mrb[0].mxu0
        %v805 = vadd.f32 %v304, %v804
        %v806 = vpop.f32.mrb[0].mxu0
        %v807 = vpop.f32.mrb[0].mxu0
        %v808 = vadd.f32 %v304, %v807
        %v809 = vpop.f32.mrb[0].mxu0
        %810 = vmatprep.mubr.bf16.mxu0 0
        %811 = vmatmul.mubr.bf16.gmra.mrb[0].mxu0 %v463
        %v812 = vpop.f32.mrb[0].mxu0
        %v813 = vadd.f32 %v304, %v812
        %v814 = vpop.f32.mrb[0].mxu0
        %v815 = vpop.f32.mrb[0].mxu0
        %v816 = vadd.f32 %v304, %v815
        %v817 = vpop.f32.mrb[0].mxu0
        %818 = vmatprep.mubr.bf16.mxu0 0
        %819 = vmatmul.mubr.bf16.gmra.mrb[0].mxu0 %v464
        %v820 = vpop.f32.mrb[0].mxu0
        %v821 = vadd.f32 %v304, %v820
        %v822 = vpop.f32.mrb[0].mxu0
        %v823 = vpop.f32.mrb[0].mxu0
        %v824 = vadd.f32 %v304, %v823
        %v825 = vpop.f32.mrb[0].mxu0
        %826 = vmatprep.mubr.bf16.mxu0 0
        %827 = vmatmul.mubr.bf16.gmra.mrb[0].mxu0 %v465
        %v828 = vpop.f32.mrb[0].mxu0
        %v829 = vadd.f32 %v304, %v828
        %v830 = vpop.f32.mrb[0].mxu0
        %v831 = vpop.f32.mrb[0].mxu0
        %v832 = vadd.f32 %v304, %v831
        %v833 = vpop.f32.mrb[0].mxu0
        %834 = vdwg.mxu0
        %vm835 = vcmp.ge.f32.partialorder %v581, 0.0
        %vm836 = vcmp.ge.f32.partialorder %v584, 0.0
        %vm837 = vcmp.ge.f32.partialorder %v589, 0.0
        %vm838 = vcmp.ge.f32.partialorder %v592, 0.0
        %vm839 = vcmp.ge.f32.partialorder %v597, 0.0
        %vm840 = vcmp.ge.f32.partialorder %v600, 0.0
        %vm841 = vcmp.ge.f32.partialorder %v605, 0.0
        %vm842 = vcmp.ge.f32.partialorder %v608, 0.0
        %vm843 = vcmp.ge.f32.partialorder %v613, 0.0
        %vm844 = vcmp.ge.f32.partialorder %v616, 0.0
        %vm845 = vcmp.ge.f32.partialorder %v621, 0.0
        %vm846 = vcmp.ge.f32.partialorder %v624, 0.0
        %vm847 = vcmp.ge.f32.partialorder %v629, 0.0
        %vm848 = vcmp.ge.f32.partialorder %v632, 0.0
        %vm849 = vcmp.ge.f32.partialorder %v637, 0.0
        %vm850 = vcmp.ge.f32.partialorder %v640, 0.0
        %vm851 = vcmp.ge.f32.partialorder %v645, 0.0
        %vm852 = vcmp.ge.f32.partialorder %v648, 0.0
        %vm853 = vcmp.ge.f32.partialorder %v653, 0.0
        %vm854 = vcmp.ge.f32.partialorder %v656, 0.0
        %vm855 = vcmp.ge.f32.partialorder %v661, 0.0
        %vm856 = vcmp.ge.f32.partialorder %v664, 0.0
        %vm857 = vcmp.ge.f32.partialorder %v669, 0.0
        %vm858 = vcmp.ge.f32.partialorder %v672, 0.0
        %vm859 = vcmp.ge.f32.partialorder %v677, 0.0
        %vm860 = vcmp.ge.f32.partialorder %v680, 0.0
        %vm861 = vcmp.ge.f32.partialorder %v685, 0.0
        %vm862 = vcmp.ge.f32.partialorder %v688, 0.0
        %vm863 = vcmp.ge.f32.partialorder %v693, 0.0
        %vm864 = vcmp.ge.f32.partialorder %v696, 0.0
        %vm865 = vcmp.ge.f32.partialorder %v701, 0.0
        %vm866 = vcmp.ge.f32.partialorder %v704, 0.0
        %vm867 = vcmp.ge.f32.partialorder %v709, 0.0
        %vm868 = vcmp.ge.f32.partialorder %v712, 0.0
        %vm869 = vcmp.ge.f32.partialorder %v717, 0.0
        %vm870 = vcmp.ge.f32.partialorder %v720, 0.0
        %vm871 = vcmp.ge.f32.partialorder %v725, 0.0
        %vm872 = vcmp.ge.f32.partialorder %v728, 0.0
        %vm873 = vcmp.ge.f32.partialorder %v733, 0.0
        %vm874 = vcmp.ge.f32.partialorder %v736, 0.0
        %vm875 = vcmp.ge.f32.partialorder %v741, 0.0
        %vm876 = vcmp.ge.f32.partialorder %v744, 0.0
        %vm877 = vcmp.ge.f32.partialorder %v749, 0.0
        %vm878 = vcmp.ge.f32.partialorder %v752, 0.0
        %vm879 = vcmp.ge.f32.partialorder %v757, 0.0
        %vm880 = vcmp.ge.f32.partialorder %v760, 0.0
        %vm881 = vcmp.ge.f32.partialorder %v765, 0.0
        %vm882 = vcmp.ge.f32.partialorder %v768, 0.0
        %vm883 = vcmp.ge.f32.partialorder %v773, 0.0
        %vm884 = vcmp.ge.f32.partialorder %v776, 0.0
        %vm885 = vcmp.ge.f32.partialorder %v781, 0.0
        %vm886 = vcmp.ge.f32.partialorder %v784, 0.0
        %vm887 = vcmp.ge.f32.partialorder %v789, 0.0
        %vm888 = vcmp.ge.f32.partialorder %v792, 0.0
        %vm889 = vcmp.ge.f32.partialorder %v797, 0.0
        %vm890 = vcmp.ge.f32.partialorder %v800, 0.0
        %vm891 = vcmp.ge.f32.partialorder %v805, 0.0
        %vm892 = vcmp.ge.f32.partialorder %v808, 0.0
        %vm893 = vcmp.ge.f32.partialorder %v813, 0.0
        %vm894 = vcmp.ge.f32.partialorder %v816, 0.0
        %vm895 = vcmp.ge.f32.partialorder %v821, 0.0
        %vm896 = vcmp.ge.f32.partialorder %v824, 0.0
        %vm897 = vcmp.ge.f32.partialorder %v829, 0.0
        %vm898 = vcmp.ge.f32.partialorder %v832, 0.0
        %v899 = vmul.f32 %v581, 0.2
        %v900 = vmul.f32 %v584, 0.2
        %v901 = vmul.f32 %v589, 0.2
        %v902 = vmul.f32 %v592, 0.2
        %v903 = vmul.f32 %v597, 0.2
        %v904 = vmul.f32 %v600, 0.2
        %v905 = vmul.f32 %v605, 0.2
        %v906 = vmul.f32 %v608, 0.2
        %v907 = vmul.f32 %v613, 0.2
        %v908 = vmul.f32 %v616, 0.2
        %v909 = vmul.f32 %v621, 0.2
        %v910 = vmul.f32 %v624, 0.2
        %v911 = vmul.f32 %v629, 0.2
        %v912 = vmul.f32 %v632, 0.2
        %v913 = vmul.f32 %v637, 0.2
        %v914 = vmul.f32 %v640, 0.2
        %v915 = vmul.f32 %v645, 0.2
        %v916 = vmul.f32 %v648, 0.2
        %v917 = vmul.f32 %v653, 0.2
        %v918 = vmul.f32 %v656, 0.2
        %v919 = vmul.f32 %v661, 0.2
        %v920 = vmul.f32 %v664, 0.2
        %v921 = vmul.f32 %v669, 0.2
        %v922 = vmul.f32 %v672, 0.2
        %v923 = vmul.f32 %v677, 0.2
        %v924 = vmul.f32 %v680, 0.2
        %v925 = vmul.f32 %v685, 0.2
        %v926 = vmul.f32 %v688, 0.2
        %v927 = vmul.f32 %v693, 0.2
        %v928 = vmul.f32 %v696, 0.2
        %v929 = vmul.f32 %v701, 0.2
        %v930 = vmul.f32 %v704, 0.2
        %v931 = vmul.f32 %v709, 0.2
        %v932 = vmul.f32 %v712, 0.2
        %v933 = vmul.f32 %v717, 0.2
        %v934 = vmul.f32 %v720, 0.2
        %v935 = vmul.f32 %v725, 0.2
        %v936 = vmul.f32 %v728, 0.2
        %v937 = vmul.f32 %v733, 0.2
        %v938 = vmul.f32 %v736, 0.2
        %v939 = vmul.f32 %v741, 0.2
        %v940 = vmul.f32 %v744, 0.2
        %v941 = vmul.f32 %v749, 0.2
        %v942 = vmul.f32 %v752, 0.2
        %v943 = vmul.f32 %v757, 0.2
        %v944 = vmul.f32 %v760, 0.2
        %v945 = vmul.f32 %v765, 0.2
        %v946 = vmul.f32 %v768, 0.2
        %v947 = vmul.f32 %v773, 0.2
        %v948 = vmul.f32 %v776, 0.2
        %v949 = vmul.f32 %v781, 0.2
        %v950 = vmul.f32 %v784, 0.2
        %v951 = vmul.f32 %v789, 0.2
        %v952 = vmul.f32 %v792, 0.2
        %v953 = vmul.f32 %v797, 0.2
        %v954 = vmul.f32 %v800, 0.2
        %v955 = vmul.f32 %v805, 0.2
        %v956 = vmul.f32 %v808, 0.2
        %v957 = vmul.f32 %v813, 0.2
        %v958 = vmul.f32 %v816, 0.2
        %v959 = vmul.f32 %v821, 0.2
        %v960 = vmul.f32 %v824, 0.2
        %v961 = vmul.f32 %v829, 0.2
        %v962 = vmul.f32 %v832, 0.2
        %v963 = vsel %vm835, %v581, %v899
        %v964 = vsel %vm836, %v584, %v900
        %v965 = vsel %vm837, %v589, %v901
        %v966 = vsel %vm838, %v592, %v902
        %v967 = vsel %vm839, %v597, %v903
        %v968 = vsel %vm840, %v600, %v904
        %v969 = vsel %vm841, %v605, %v905
        %v970 = vsel %vm842, %v608, %v906
        %v971 = vsel %vm843, %v613, %v907
        %v972 = vsel %vm844, %v616, %v908
        %v973 = vsel %vm845, %v621, %v909
        %v974 = vsel %vm846, %v624, %v910
        %v975 = vsel %vm847, %v629, %v911
        %v976 = vsel %vm848, %v632, %v912
        %v977 = vsel %vm849, %v637, %v913
        %v978 = vsel %vm850, %v640, %v914
        %v979 = vsel %vm851, %v645, %v915
        %v980 = vsel %vm852, %v648, %v916
        %v981 = vsel %vm853, %v653, %v917
        %v982 = vsel %vm854, %v656, %v918
        %v983 = vsel %vm855, %v661, %v919
        %v984 = vsel %vm856, %v664, %v920
        %v985 = vsel %vm857, %v669, %v921
        %v986 = vsel %vm858, %v672, %v922
        %v987 = vsel %vm859, %v677, %v923
        %v988 = vsel %vm860, %v680, %v924
        %v989 = vsel %vm861, %v685, %v925
        %v990 = vsel %vm862, %v688, %v926
        %v991 = vsel %vm863, %v693, %v927
        %v992 = vsel %vm864, %v696, %v928
        %v993 = vsel %vm865, %v701, %v929
        %v994 = vsel %vm866, %v704, %v930
        %v995 = vsel %vm867, %v709, %v931
        %v996 = vsel %vm868, %v712, %v932
        %v997 = vsel %vm869, %v717, %v933
        %v998 = vsel %vm870, %v720, %v934
        %v999 = vsel %vm871, %v725, %v935
        %v1000 = vsel %vm872, %v728, %v936
        %v1001 = vsel %vm873, %v733, %v937
        %v1002 = vsel %vm874, %v736, %v938
        %v1003 = vsel %vm875, %v741, %v939
        %v1004 = vsel %vm876, %v744, %v940
        %v1005 = vsel %vm877, %v749, %v941
        %v1006 = vsel %vm878, %v752, %v942
        %v1007 = vsel %vm879, %v757, %v943
        %v1008 = vsel %vm880, %v760, %v944
        %v1009 = vsel %vm881, %v765, %v945
        %v1010 = vsel %vm882, %v768, %v946
        %v1011 = vsel %vm883, %v773, %v947
        %v1012 = vsel %vm884, %v776, %v948
        %v1013 = vsel %vm885, %v781, %v949
        %v1014 = vsel %vm886, %v784, %v950
        %v1015 = vsel %vm887, %v789, %v951
        %v1016 = vsel %vm888, %v792, %v952
        %v1017 = vsel %vm889, %v797, %v953
        %v1018 = vsel %vm890, %v800, %v954
        %v1019 = vsel %vm891, %v805, %v955
        %v1020 = vsel %vm892, %v808, %v956
        %v1021 = vsel %vm893, %v813, %v957
        %v1022 = vsel %vm894, %v816, %v958
        %v1023 = vsel %vm895, %v821, %v959
        %v1024 = vsel %vm896, %v824, %v960
        %v1025 = vsel %vm897, %v829, %v961
        %v1026 = vsel %vm898, %v832, %v962
        %v1027 = vpack.c.bf16 %v964, %v963
        %v1028 = vpack.c.bf16 %v966, %v965
        %v1029 = vpack.c.bf16 %v968, %v967
        %v1030 = vpack.c.bf16 %v970, %v969
        %v1031 = vpack.c.bf16 %v972, %v971
        %v1032 = vpack.c.bf16 %v974, %v973
        %v1033 = vpack.c.bf16 %v976, %v975
        %v1034 = vpack.c.bf16 %v978, %v977
        %v1035 = vpack.c.bf16 %v980, %v979
        %v1036 = vpack.c.bf16 %v982, %v981
        %v1037 = vpack.c.bf16 %v984, %v983
        %v1038 = vpack.c.bf16 %v986, %v985
        %v1039 = vpack.c.bf16 %v988, %v987
        %v1040 = vpack.c.bf16 %v990, %v989
        %v1041 = vpack.c.bf16 %v992, %v991
        %v1042 = vpack.c.bf16 %v994, %v993
        %v1043 = vpack.c.bf16 %v996, %v995
        %v1044 = vpack.c.bf16 %v998, %v997
        %v1045 = vpack.c.bf16 %v1000, %v999
        %v1046 = vpack.c.bf16 %v1002, %v1001
        %v1047 = vpack.c.bf16 %v1004, %v1003
        %v1048 = vpack.c.bf16 %v1006, %v1005
        %v1049 = vpack.c.bf16 %v1008, %v1007
        %v1050 = vpack.c.bf16 %v1010, %v1009
        %v1051 = vpack.c.bf16 %v1012, %v1011
        %v1052 = vpack.c.bf16 %v1014, %v1013
        %v1053 = vpack.c.bf16 %v1016, %v1015
        %v1054 = vpack.c.bf16 %v1018, %v1017
        %v1055 = vpack.c.bf16 %v1020, %v1019
        %v1056 = vpack.c.bf16 %v1022, %v1021
        %v1057 = vpack.c.bf16 %v1024, %v1023
        %v1058 = vpack.c.bf16 %v1026, %v1025
        %v1091 = vunpack.c.l.b16 %v1027
        %v1092 = vunpack.c.h.b16 %v1027
        %v1093 = vunpack.c.l.b16 %v1028
        %v1094 = vunpack.c.h.b16 %v1028
        %v1095 = vunpack.c.l.b16 %v1029
        %v1096 = vunpack.c.h.b16 %v1029
        %v1097 = vunpack.c.l.b16 %v1030
        %v1098 = vunpack.c.h.b16 %v1030
        %v1099 = vunpack.c.l.b16 %v1031
        %v1100 = vunpack.c.h.b16 %v1031
        %v1101 = vunpack.c.l.b16 %v1032
        %v1102 = vunpack.c.h.b16 %v1032
        %v1103 = vunpack.c.l.b16 %v1033
        %v1104 = vunpack.c.h.b16 %v1033
        %v1105 = vunpack.c.l.b16 %v1034
        %v1106 = vunpack.c.h.b16 %v1034
        %v1107 = vunpack.c.l.b16 %v1035
        %v1108 = vunpack.c.h.b16 %v1035
        %v1109 = vunpack.c.l.b16 %v1036
        %v1110 = vunpack.c.h.b16 %v1036
        %v1111 = vunpack.c.l.b16 %v1037
        %v1112 = vunpack.c.h.b16 %v1037
        %v1113 = vunpack.c.l.b16 %v1038
        %v1114 = vunpack.c.h.b16 %v1038
        %v1115 = vunpack.c.l.b16 %v1039
        %v1116 = vunpack.c.h.b16 %v1039
        %v1117 = vunpack.c.l.b16 %v1040
        %v1118 = vunpack.c.h.b16 %v1040
        %v1119 = vunpack.c.l.b16 %v1041
        %v1120 = vunpack.c.h.b16 %v1041
        %v1121 = vunpack.c.l.b16 %v1042
        %v1122 = vunpack.c.h.b16 %v1042
        %v1123 = vunpack.c.l.b16 %v1043
        %v1124 = vunpack.c.h.b16 %v1043
        %v1125 = vunpack.c.l.b16 %v1044
        %v1126 = vunpack.c.h.b16 %v1044
        %v1127 = vunpack.c.l.b16 %v1045
        %v1128 = vunpack.c.h.b16 %v1045
        %v1129 = vunpack.c.l.b16 %v1046
        %v1130 = vunpack.c.h.b16 %v1046
        %v1131 = vunpack.c.l.b16 %v1047
        %v1132 = vunpack.c.h.b16 %v1047
        %v1133 = vunpack.c.l.b16 %v1048
        %v1134 = vunpack.c.h.b16 %v1048
        %v1135 = vunpack.c.l.b16 %v1049
        %v1136 = vunpack.c.h.b16 %v1049
        %v1137 = vunpack.c.l.b16 %v1050
        %v1138 = vunpack.c.h.b16 %v1050
        %v1139 = vunpack.c.l.b16 %v1051
        %v1140 = vunpack.c.h.b16 %v1051
        %v1141 = vunpack.c.l.b16 %v1052
        %v1142 = vunpack.c.h.b16 %v1052
        %v1143 = vunpack.c.l.b16 %v1053
        %v1144 = vunpack.c.h.b16 %v1053
        %v1145 = vunpack.c.l.b16 %v1054
        %v1146 = vunpack.c.h.b16 %v1054
        %v1147 = vunpack.c.l.b16 %v1055
        %v1148 = vunpack.c.h.b16 %v1055
        %v1149 = vunpack.c.l.b16 %v1056
        %v1150 = vunpack.c.h.b16 %v1056
        %v1151 = vunpack.c.l.b16 %v1057
        %v1152 = vunpack.c.h.b16 %v1057
        %v1153 = vunpack.c.l.b16 %v1058
        %v1154 = vunpack.c.h.b16 %v1058
        %v1155 = vpack.c.b16 %v1091, %v1091
        %v1156 = vpack.c.b16 %v1092, %v1092
        %v1157 = vpack.c.b16 %v1093, %v1093
        %v1158 = vpack.c.b16 %v1094, %v1094
        %v1159 = vpack.c.b16 %v1095, %v1095
        %v1160 = vpack.c.b16 %v1096, %v1096
        %v1161 = vpack.c.b16 %v1097, %v1097
        %v1162 = vpack.c.b16 %v1098, %v1098
        %v1163 = vpack.c.b16 %v1099, %v1099
        %v1164 = vpack.c.b16 %v1100, %v1100
        %v1165 = vpack.c.b16 %v1101, %v1101
        %v1166 = vpack.c.b16 %v1102, %v1102
        %v1167 = vpack.c.b16 %v1103, %v1103
        %v1168 = vpack.c.b16 %v1104, %v1104
        %v1169 = vpack.c.b16 %v1105, %v1105
        %v1170 = vpack.c.b16 %v1106, %v1106
        %v1171 = vpack.c.b16 %v1107, %v1107
        %v1172 = vpack.c.b16 %v1108, %v1108
        %v1173 = vpack.c.b16 %v1109, %v1109
        %v1174 = vpack.c.b16 %v1110, %v1110
        %v1175 = vpack.c.b16 %v1111, %v1111
        %v1176 = vpack.c.b16 %v1112, %v1112
        %v1177 = vpack.c.b16 %v1113, %v1113
        %v1178 = vpack.c.b16 %v1114, %v1114
        %v1179 = vpack.c.b16 %v1115, %v1115
        %v1180 = vpack.c.b16 %v1116, %v1116
        %v1181 = vpack.c.b16 %v1117, %v1117
        %v1182 = vpack.c.b16 %v1118, %v1118
        %v1183 = vpack.c.b16 %v1119, %v1119
        %v1184 = vpack.c.b16 %v1120, %v1120
        %v1185 = vpack.c.b16 %v1121, %v1121
        %v1186 = vpack.c.b16 %v1122, %v1122
        %v1187 = vpack.c.b16 %v1123, %v1123
        %v1188 = vpack.c.b16 %v1124, %v1124
        %v1189 = vpack.c.b16 %v1125, %v1125
        %v1190 = vpack.c.b16 %v1126, %v1126
        %v1191 = vpack.c.b16 %v1127, %v1127
        %v1192 = vpack.c.b16 %v1128, %v1128
        %v1193 = vpack.c.b16 %v1129, %v1129
        %v1194 = vpack.c.b16 %v1130, %v1130
        %v1195 = vpack.c.b16 %v1131, %v1131
        %v1196 = vpack.c.b16 %v1132, %v1132
        %v1197 = vpack.c.b16 %v1133, %v1133
        %v1198 = vpack.c.b16 %v1134, %v1134
        %v1199 = vpack.c.b16 %v1135, %v1135
        %v1200 = vpack.c.b16 %v1136, %v1136
        %v1201 = vpack.c.b16 %v1137, %v1137
        %v1202 = vpack.c.b16 %v1138, %v1138
        %v1203 = vpack.c.b16 %v1139, %v1139
        %v1204 = vpack.c.b16 %v1140, %v1140
        %v1205 = vpack.c.b16 %v1141, %v1141
        %v1206 = vpack.c.b16 %v1142, %v1142
        %v1207 = vpack.c.b16 %v1143, %v1143
        %v1208 = vpack.c.b16 %v1144, %v1144
        %v1209 = vpack.c.b16 %v1145, %v1145
        %v1210 = vpack.c.b16 %v1146, %v1146
        %v1211 = vpack.c.b16 %v1147, %v1147
        %v1212 = vpack.c.b16 %v1148, %v1148
        %v1213 = vpack.c.b16 %v1149, %v1149
        %v1214 = vpack.c.b16 %v1150, %v1150
        %v1215 = vpack.c.b16 %v1151, %v1151
        %v1216 = vpack.c.b16 %v1152, %v1152
        %v1217 = vpack.c.b16 %v1153, %v1153
        %v1218 = vpack.c.b16 %v1154, %v1154
        %vm1283 = vcmask 60416
        %1284 = vst.msk [vmem:[%s215] sm:$0xf] %vm1283, %v1155
        %1285 = vst.msk [vmem:[%s215 + $0x4] sm:$0xf] %vm1283, %v1156
        %1286 = vst.msk [vmem:[%s215 + $0x8] sm:$0xf] %vm1283, %v1157
        %1287 = vst.msk [vmem:[%s215 + $0xc] sm:$0xf] %vm1283, %v1158
        %1288 = vst.msk [vmem:[%s215 + $0x10] sm:$0xf] %vm1283, %v1159
        %1289 = vst.msk [vmem:[%s215 + $0x14] sm:$0xf] %vm1283, %v1160
        %1290 = vst.msk [vmem:[%s215 + $0x18] sm:$0xf] %vm1283, %v1161
        %1291 = vst.msk [vmem:[%s215 + $0x1c] sm:$0xf] %vm1283, %v1162
        %1292 = vst.msk [vmem:[%s215 + $0x20] sm:$0xf] %vm1283, %v1163
        %1293 = vst.msk [vmem:[%s215 + $0x24] sm:$0xf] %vm1283, %v1164
        %1294 = vst.msk [vmem:[%s215 + $0x28] sm:$0xf] %vm1283, %v1165
        %1295 = vst.msk [vmem:[%s215 + $0x2c] sm:$0xf] %vm1283, %v1166
        %1296 = vst.msk [vmem:[%s215 + $0x30] sm:$0xf] %vm1283, %v1167
        %1297 = vst.msk [vmem:[%s215 + $0x34] sm:$0xf] %vm1283, %v1168
        %1298 = vst.msk [vmem:[%s215 + $0x38] sm:$0xf] %vm1283, %v1169
        %1299 = vst.msk [vmem:[%s215 + $0x3c] sm:$0xf] %vm1283, %v1170
        %1300 = vst.msk [vmem:[%s215 + $0x40] sm:$0xf] %vm1283, %v1171
        %1301 = vst.msk [vmem:[%s215 + $0x44] sm:$0xf] %vm1283, %v1172
        %1302 = vst.msk [vmem:[%s215 + $0x48] sm:$0xf] %vm1283, %v1173
        %1303 = vst.msk [vmem:[%s215 + $0x4c] sm:$0xf] %vm1283, %v1174
        %1304 = vst.msk [vmem:[%s215 + $0x50] sm:$0xf] %vm1283, %v1175
        %1305 = vst.msk [vmem:[%s215 + $0x54] sm:$0xf] %vm1283, %v1176
        %1306 = vst.msk [vmem:[%s215 + $0x58] sm:$0xf] %vm1283, %v1177
        %1307 = vst.msk [vmem:[%s215 + $0x5c] sm:$0xf] %vm1283, %v1178
        %1308 = vst.msk [vmem:[%s215 + $0x60] sm:$0xf] %vm1283, %v1179
        %1309 = vst.msk [vmem:[%s215 + $0x64] sm:$0xf] %vm1283, %v1180
        %1310 = vst.msk [vmem:[%s215 + $0x68] sm:$0xf] %vm1283, %v1181
        %1311 = vst.msk [vmem:[%s215 + $0x6c] sm:$0xf] %vm1283, %v1182
        %1312 = vst.msk [vmem:[%s215 + $0x70] sm:$0xf] %vm1283, %v1183
        %1313 = vst.msk [vmem:[%s215 + $0x74] sm:$0xf] %vm1283, %v1184
        %1314 = vst.msk [vmem:[%s215 + $0x78] sm:$0xf] %vm1283, %v1185
        %1315 = vst.msk [vmem:[%s215 + $0x7c] sm:$0xf] %vm1283, %v1186
        %1316 = vst.msk [vmem:[%s215 + $0x80] sm:$0xf] %vm1283, %v1187
        %1317 = vst.msk [vmem:[%s215 + $0x84] sm:$0xf] %vm1283, %v1188
        %1318 = vst.msk [vmem:[%s215 + $0x88] sm:$0xf] %vm1283, %v1189
        %1319 = vst.msk [vmem:[%s215 + $0x8c] sm:$0xf] %vm1283, %v1190
        %1320 = vst.msk [vmem:[%s215 + $0x90] sm:$0xf] %vm1283, %v1191
        %1321 = vst.msk [vmem:[%s215 + $0x94] sm:$0xf] %vm1283, %v1192
        %1322 = vst.msk [vmem:[%s215 + $0x98] sm:$0xf] %vm1283, %v1193
        %1323 = vst.msk [vmem:[%s215 + $0x9c] sm:$0xf] %vm1283, %v1194
        %1324 = vst.msk [vmem:[%s215 + $0xa0] sm:$0xf] %vm1283, %v1195
        %1325 = vst.msk [vmem:[%s215 + $0xa4] sm:$0xf] %vm1283, %v1196
        %1326 = vst.msk [vmem:[%s215 + $0xa8] sm:$0xf] %vm1283, %v1197
        %1327 = vst.msk [vmem:[%s215 + $0xac] sm:$0xf] %vm1283, %v1198
        %1328 = vst.msk [vmem:[%s215 + $0xb0] sm:$0xf] %vm1283, %v1199
        %1329 = vst.msk [vmem:[%s215 + $0xb4] sm:$0xf] %vm1283, %v1200
        %1330 = vst.msk [vmem:[%s215 + $0xb8] sm:$0xf] %vm1283, %v1201
        %1331 = vst.msk [vmem:[%s215 + $0xbc] sm:$0xf] %vm1283, %v1202
        %1332 = vst.msk [vmem:[%s215 + $0xc0] sm:$0xf] %vm1283, %v1203
        %1333 = vst.msk [vmem:[%s215 + $0xc4] sm:$0xf] %vm1283, %v1204
        %1334 = vst.msk [vmem:[%s215 + $0xc8] sm:$0xf] %vm1283, %v1205
        %1335 = vst.msk [vmem:[%s215 + $0xcc] sm:$0xf] %vm1283, %v1206
        %1336 = vst.msk [vmem:[%s215 + $0xd0] sm:$0xf] %vm1283, %v1207
        %1337 = vst.msk [vmem:[%s215 + $0xd4] sm:$0xf] %vm1283, %v1208
        %1338 = vst.msk [vmem:[%s215 + $0xd8] sm:$0xf] %vm1283, %v1209
        %1339 = vst.msk [vmem:[%s215 + $0xdc] sm:$0xf] %vm1283, %v1210
        %1340 = vst.msk [vmem:[%s215 + $0xe0] sm:$0xf] %vm1283, %v1211
        %1341 = vst.msk [vmem:[%s215 + $0xe4] sm:$0xf] %vm1283, %v1212
        %1342 = vst.msk [vmem:[%s215 + $0xe8] sm:$0xf] %vm1283, %v1213
        %1343 = vst.msk [vmem:[%s215 + $0xec] sm:$0xf] %vm1283, %v1214
        %1344 = vst.msk [vmem:[%s215 + $0xf0] sm:$0xf] %vm1283, %v1215
        %1345 = vst.msk [vmem:[%s215 + $0xf4] sm:$0xf] %vm1283, %v1216
        %1346 = vst.msk [vmem:[%s215 + $0xf8] sm:$0xf] %vm1283, %v1217
        %1347 = vst.msk [vmem:[%s215 + $0xfc] sm:$0xf] %vm1283, %v1218
        %s1348 = sand.u32 %s97, 1
        %s1349 = scalar_lea.sflag [#allocation4], %s1348
        %s1350 = sand.u32 %s97, 1
        %s1351 = smul.addr %s1350, 256
        %s1352 = scalar_lea.vmem [#allocation8], %s1351
        // Predicated region
        $region45: #{dcdisc_forward.8} parent=31 // pred_check
          %p1353 = pneg %p107
        $region46: #{dcdisc_forward.8} parent=31 // pred_check_branch
          %1355 = sbr.rel (%p1353) target = $region48
        $region47: #{dcdisc_forward.8} parent=31 // pred_region
          %s1356 = smul.u32 64, %s21
          %s1358 = ssub.s32 4096, 4096
          %1359 = vsyncadd %s1349, %s1358
          %s1360 = smul.addr %s1356, 64
          %s1361 = scalar_lea.hbm %s3, %s1360
          %s1362 = sshll.u32 %s1352, 4
          %s1363 = int_to_ptr.vmem [resolvable:$true] %s1362
          %1368 = dma.vmem_to_hbm [thread:$0]  %s1363, 4096, %s1361, %s1349, 64, 64, 4
        $region48: #{dcdisc_forward.8} parent=31 // pred_fallthru
          _
      $region32: #{dcdisc_forward.8} parent=5 // pred_fallthru
        _
      %p1369 = scmp.le.s32.totalorder 2, %s16
      // Predicated region
      $region49: #{dcdisc_forward.8} parent=5 // pred_check
        %p1370 = pneg %p1369
      $region50: #{dcdisc_forward.8} parent=5 // pred_check_branch
        %1372 = sbr.rel (%p1370) target = $region52
      $region51: #{dcdisc_forward.8} parent=5 // pred_region
        %s1373 = ssub.s32 %s16, 2
        // Predicated region
        $region53: #{dcdisc_forward.8} parent=51 // pred_check
          %p1374 = pneg %p113
        $region54: #{dcdisc_forward.8} parent=51 // pred_check_branch
          %1376 = sbr.rel (%p1374) target = $region56
        $region55: #{dcdisc_forward.8} parent=51 // pred_region
          %s1377 = sand.u32 %s98, 1
          %s1378 = scalar_lea.sflag [#allocation4], %s1377
          %s1379 = sand.u32 %s98, 1
          %s1380 = smul.addr %s1379, 256
          %s1381 = scalar_lea.vmem [#allocation8], %s1380
          %1382 = dma.done %s1378, 4096
        $region56: #{dcdisc_forward.8} parent=51 // pred_fallthru
          _
      $region52: #{dcdisc_forward.8} parent=5 // pred_fallthru
        _
    $region6: #{dcdisc_forward.8} parent=1 // loop_footer
      %s20 = sadd.s32 1, %s16
    $region7: #{dcdisc_forward.8} parent=1 // loop_footer_branch
      %15 = sbr.rel target = $region3
    $region8: #{dcdisc_forward.8} parent=1 // loop_exit
      _
    %1383 = vsyncpa [#allocation3], 1
    %s1384 = scalar_lea.sflag [#allocation3], 1
    %1385 = vsyncpa %s1384, 1
    %1386 = vsyncpa [#allocation6], 1
    %1387 = vsyncpa [#allocation4], 1
    %s1388 = scalar_lea.sflag [#allocation4], 1
    %1389 = vsyncpa %s1388, 1

// kernel: dcdisc_forward.9
$region0: #{dcdisc_forward.9}
  #allocation0 [shape = 'u32[]', space=smem, size = 0x4, offset = 0x4, fixed_abs, tag = 'smem constant byte address 0x4 - core index']
  #allocation1 [shape = 'u32[144,128]{1,0:T(1,128)}', space=vmem, size = 0x12000, scoped, tag = 'internal scratch']
  %s0 = inlined_call_operand.hbm [shape: bf16[512,128], index: 0, kind: input, shape index: {}]
  %s1 = inlined_call_operand.hbm [shape: bf16[128,16], index: 1, kind: input, shape index: {}]
  %s2 = inlined_call_operand.hbm [shape: f32[512,16], index: 2, kind: output, shape index: {0}]
  %s3 = inlined_call_operand.hbm [shape: f32[1,16], index: 3, kind: output, shape index: {1}]
  %s4 = inlined_call_operand.hbm [shape: f32[1,16], index: 4, kind: output, shape index: {2}]
  %5 = xla_tuple %s2, %s3, %s4
  %s6 = sld [smem:[#allocation0]]
  $region46: #{dcdisc_forward.9} parent=0
    _
  %s8 = ssub.s32 1, %s6
  %s9 = scalar_select 0, %s8, %s6
  $region1: #{dcdisc_forward.9} parent=0
    #allocation2 [shape = 'u8[131072]{0}', space=vmem, size = 0x20000, scoped, tag = 'input window, operand 0, single buffered']
    #allocation3 [shape = 's32[1]{0}', space=sflag, size = 0x4, scoped, tag = 'scoped memory for dcdisc_forward.9']
    #allocation4 [shape = 's32[1]{0}', space=sflag, size = 0x4, scoped, tag = 'scoped memory for dcdisc_forward.9']
    #allocation5 [shape = 'u8[32768]{0}', space=vmem, size = 0x8000, scoped, tag = 'input window, operand 1, single buffered']
    #allocation6 [shape = 's32[1]{0}', space=sflag, size = 0x4, scoped, tag = 'scoped memory for dcdisc_forward.9']
    #allocation7 [shape = 'u8[262144]{0}', space=vmem, size = 0x40000, scoped, tag = 'output window, operand 0, single buffered']
    #allocation8 [shape = 'u8[512]{0}', space=vmem, size = 0x400, scoped, tag = 'output window, operand 1, single buffered']
    #allocation9 [shape = 's32[1]{0}', space=sflag, size = 0x4, scoped, tag = 'scoped memory for dcdisc_forward.9']
    #allocation10 [shape = 'u8[512]{0}', space=vmem, size = 0x400, scoped, tag = 'output window, operand 2, single buffered']
    %10 = vsyncpa [#allocation3], 0
    %11 = vsyncpa [#allocation6], 0
    %12 = vsyncpa [#allocation4], 0
    %13 = vsyncpa [#allocation9], 0
    // Predicated region
    $region2: #{dcdisc_forward.9} parent=1 // pred_check
      _
    $region3: #{dcdisc_forward.9} parent=1 // pred_check_branch
      %15 = sbr.rel (0) target = $region5
    $region4: #{dcdisc_forward.9} parent=1 // pred_region
      %s17 = ssub.s32 4096, 4096
      %18 = vsyncadd [#allocation3], %s17
      %s19 = sshll.u32 [#allocation2], 4
      %s20 = int_to_ptr.vmem [resolvable:$true] %s19
      %25 = dma.hbm_to_vmem [thread:$0]  %s0, 4096, %s20, [#allocation3], 64, 64, 4
    $region5: #{dcdisc_forward.9} parent=1 // pred_fallthru
      _
    // Predicated region
    $region6: #{dcdisc_forward.9} parent=1 // pred_check
      _
    $region7: #{dcdisc_forward.9} parent=1 // pred_check_branch
      %27 = sbr.rel (0) target = $region9
    $region8: #{dcdisc_forward.9} parent=1 // pred_region
      %s29 = ssub.s32 1024, 1024
      %30 = vsyncadd [#allocation6], %s29
      %s31 = sshll.u32 [#allocation5], 4
      %s32 = int_to_ptr.vmem [resolvable:$true] %s31
      %37 = dma.hbm_to_vmem [thread:$0]  %s1, 1024, %s32, [#allocation6], 64, 64, 4
    $region9: #{dcdisc_forward.9} parent=1 // pred_fallthru
      _
    // Predicated region
    $region10: #{dcdisc_forward.9} parent=1 // pred_check
      _
    $region11: #{dcdisc_forward.9} parent=1 // pred_check_branch
      %39 = sbr.rel (0) target = $region13
    $region12: #{dcdisc_forward.9} parent=1 // pred_region
      %40 = dma.done [#allocation3], 4096
    $region13: #{dcdisc_forward.9} parent=1 // pred_fallthru
      _
    // Predicated region
    $region14: #{dcdisc_forward.9} parent=1 // pred_check
      _
    $region15: #{dcdisc_forward.9} parent=1 // pred_check_branch
      %42 = sbr.rel (0) target = $region17
    $region16: #{dcdisc_forward.9} parent=1 // pred_region
      %43 = dma.done [#allocation6], 1024
    $region17: #{dcdisc_forward.9} parent=1 // pred_fallthru
      _
    %p45 = scmp.eq.s32.totalorder 0, 0
    // Predicated region
    $region18: #{dcdisc_forward.9} parent=1 // pred_check
      %p46 = pneg %p45
    $region19: #{dcdisc_forward.9} parent=1 // pred_check_branch
      %48 = sbr.rel (%p46) target = $region21
    $region20: #{dcdisc_forward.9} parent=1 // pred_region
      %vm49 = vcmask 122880
      %50 = vst.msk [vmem:[#allocation8] sm:$0x1] %vm49, 0.0
      %51 = vst.msk [vmem:[#allocation10] sm:$0x1] %vm49, 0.0
    $region21: #{dcdisc_forward.9} parent=1 // pred_fallthru
      _
    %v52 = vld [vmem:[#allocation2] sm:$0xf]
    %v53 = vld [vmem:[#allocation2 + $0x4] sm:$0xf]
    %v54 = vld [vmem:[#allocation2 + $0x8] sm:$0xf]
    %v55 = vld [vmem:[#allocation2 + $0xc] sm:$0xf]
    %v56 = vld [vmem:[#allocation2 + $0x10] sm:$0xf]
    %v57 = vld [vmem:[#allocation2 + $0x14] sm:$0xf]
    %v58 = vld [vmem:[#allocation2 + $0x18] sm:$0xf]
    %v59 = vld [vmem:[#allocation2 + $0x1c] sm:$0xf]
    %v60 = vld [vmem:[#allocation2 + $0x20] sm:$0xf]
    %v61 = vld [vmem:[#allocation2 + $0x24] sm:$0xf]
    %v62 = vld [vmem:[#allocation2 + $0x28] sm:$0xf]
    %v63 = vld [vmem:[#allocation2 + $0x2c] sm:$0xf]
    %v64 = vld [vmem:[#allocation2 + $0x30] sm:$0xf]
    %v65 = vld [vmem:[#allocation2 + $0x34] sm:$0xf]
    %v66 = vld [vmem:[#allocation2 + $0x38] sm:$0xf]
    %v67 = vld [vmem:[#allocation2 + $0x3c] sm:$0xf]
    %v68 = vld [vmem:[#allocation2 + $0x40] sm:$0xf]
    %v69 = vld [vmem:[#allocation2 + $0x44] sm:$0xf]
    %v70 = vld [vmem:[#allocation2 + $0x48] sm:$0xf]
    %v71 = vld [vmem:[#allocation2 + $0x4c] sm:$0xf]
    %v72 = vld [vmem:[#allocation2 + $0x50] sm:$0xf]
    %v73 = vld [vmem:[#allocation2 + $0x54] sm:$0xf]
    %v74 = vld [vmem:[#allocation2 + $0x58] sm:$0xf]
    %v75 = vld [vmem:[#allocation2 + $0x5c] sm:$0xf]
    %v76 = vld [vmem:[#allocation2 + $0x60] sm:$0xf]
    %v77 = vld [vmem:[#allocation2 + $0x64] sm:$0xf]
    %v78 = vld [vmem:[#allocation2 + $0x68] sm:$0xf]
    %v79 = vld [vmem:[#allocation2 + $0x6c] sm:$0xf]
    %v80 = vld [vmem:[#allocation2 + $0x70] sm:$0xf]
    %v81 = vld [vmem:[#allocation2 + $0x74] sm:$0xf]
    %v82 = vld [vmem:[#allocation2 + $0x78] sm:$0xf]
    %v83 = vld [vmem:[#allocation2 + $0x7c] sm:$0xf]
    %v84 = vld [vmem:[#allocation2 + $0x80] sm:$0xf]
    %v85 = vld [vmem:[#allocation2 + $0x84] sm:$0xf]
    %v86 = vld [vmem:[#allocation2 + $0x88] sm:$0xf]
    %v87 = vld [vmem:[#allocation2 + $0x8c] sm:$0xf]
    %v88 = vld [vmem:[#allocation2 + $0x90] sm:$0xf]
    %v89 = vld [vmem:[#allocation2 + $0x94] sm:$0xf]
    %v90 = vld [vmem:[#allocation2 + $0x98] sm:$0xf]
    %v91 = vld [vmem:[#allocation2 + $0x9c] sm:$0xf]
    %v92 = vld [vmem:[#allocation2 + $0xa0] sm:$0xf]
    %v93 = vld [vmem:[#allocation2 + $0xa4] sm:$0xf]
    %v94 = vld [vmem:[#allocation2 + $0xa8] sm:$0xf]
    %v95 = vld [vmem:[#allocation2 + $0xac] sm:$0xf]
    %v96 = vld [vmem:[#allocation2 + $0xb0] sm:$0xf]
    %v97 = vld [vmem:[#allocation2 + $0xb4] sm:$0xf]
    %v98 = vld [vmem:[#allocation2 + $0xb8] sm:$0xf]
    %v99 = vld [vmem:[#allocation2 + $0xbc] sm:$0xf]
    %v100 = vld [vmem:[#allocation2 + $0xc0] sm:$0xf]
    %v101 = vld [vmem:[#allocation2 + $0xc4] sm:$0xf]
    %v102 = vld [vmem:[#allocation2 + $0xc8] sm:$0xf]
    %v103 = vld [vmem:[#allocation2 + $0xcc] sm:$0xf]
    %v104 = vld [vmem:[#allocation2 + $0xd0] sm:$0xf]
    %v105 = vld [vmem:[#allocation2 + $0xd4] sm:$0xf]
    %v106 = vld [vmem:[#allocation2 + $0xd8] sm:$0xf]
    %v107 = vld [vmem:[#allocation2 + $0xdc] sm:$0xf]
    %v108 = vld [vmem:[#allocation2 + $0xe0] sm:$0xf]
    %v109 = vld [vmem:[#allocation2 + $0xe4] sm:$0xf]
    %v110 = vld [vmem:[#allocation2 + $0xe8] sm:$0xf]
    %v111 = vld [vmem:[#allocation2 + $0xec] sm:$0xf]
    %v112 = vld [vmem:[#allocation2 + $0xf0] sm:$0xf]
    %v113 = vld [vmem:[#allocation2 + $0xf4] sm:$0xf]
    %v114 = vld [vmem:[#allocation2 + $0xf8] sm:$0xf]
    %v115 = vld [vmem:[#allocation2 + $0xfc] sm:$0xf]
    %v116 = vld [vmem:[#allocation5] sm:$0xf]
    %v117 = vld [vmem:[#allocation5 + $0x4] sm:$0xf]
    %v118 = vld [vmem:[#allocation5 + $0x8] sm:$0xf]
    %v119 = vld [vmem:[#allocation5 + $0xc] sm:$0xf]
    %v120 = vld [vmem:[#allocation5 + $0x10] sm:$0xf]
    %v121 = vld [vmem:[#allocation5 + $0x14] sm:$0xf]
    %v122 = vld [vmem:[#allocation5 + $0x18] sm:$0xf]
    %v123 = vld [vmem:[#allocation5 + $0x1c] sm:$0xf]
    %v124 = vld [vmem:[#allocation5 + $0x20] sm:$0xf]
    %v125 = vld [vmem:[#allocation5 + $0x24] sm:$0xf]
    %v126 = vld [vmem:[#allocation5 + $0x28] sm:$0xf]
    %v127 = vld [vmem:[#allocation5 + $0x2c] sm:$0xf]
    %v128 = vld [vmem:[#allocation5 + $0x30] sm:$0xf]
    %v129 = vld [vmem:[#allocation5 + $0x34] sm:$0xf]
    %v130 = vld [vmem:[#allocation5 + $0x38] sm:$0xf]
    %v131 = vld [vmem:[#allocation5 + $0x3c] sm:$0xf]
    %v196 = vunpack.c.l.b16 %v52
    %v197 = vunpack.c.l.b16 %v53
    %v198 = vunpack.c.l.b16 %v54
    %v199 = vunpack.c.l.b16 %v55
    %v200 = vunpack.c.l.b16 %v56
    %v201 = vunpack.c.l.b16 %v57
    %v202 = vunpack.c.l.b16 %v58
    %v203 = vunpack.c.l.b16 %v59
    %v204 = vunpack.c.l.b16 %v60
    %v205 = vunpack.c.l.b16 %v61
    %v206 = vunpack.c.l.b16 %v62
    %v207 = vunpack.c.l.b16 %v63
    %v208 = vunpack.c.l.b16 %v64
    %v209 = vunpack.c.l.b16 %v65
    %v210 = vunpack.c.l.b16 %v66
    %v211 = vunpack.c.l.b16 %v67
    %v212 = vunpack.c.l.b16 %v68
    %v213 = vunpack.c.l.b16 %v69
    %v214 = vunpack.c.l.b16 %v70
    %v215 = vunpack.c.l.b16 %v71
    %v216 = vunpack.c.l.b16 %v72
    %v217 = vunpack.c.l.b16 %v73
    %v218 = vunpack.c.l.b16 %v74
    %v219 = vunpack.c.l.b16 %v75
    %v220 = vunpack.c.l.b16 %v76
    %v221 = vunpack.c.l.b16 %v77
    %v222 = vunpack.c.l.b16 %v78
    %v223 = vunpack.c.l.b16 %v79
    %v224 = vunpack.c.l.b16 %v80
    %v225 = vunpack.c.l.b16 %v81
    %v226 = vunpack.c.l.b16 %v82
    %v227 = vunpack.c.l.b16 %v83
    %v228 = vunpack.c.l.b16 %v84
    %v229 = vunpack.c.l.b16 %v85
    %v230 = vunpack.c.l.b16 %v86
    %v231 = vunpack.c.l.b16 %v87
    %v232 = vunpack.c.l.b16 %v88
    %v233 = vunpack.c.l.b16 %v89
    %v234 = vunpack.c.l.b16 %v90
    %v235 = vunpack.c.l.b16 %v91
    %v236 = vunpack.c.l.b16 %v92
    %v237 = vunpack.c.l.b16 %v93
    %v238 = vunpack.c.l.b16 %v94
    %v239 = vunpack.c.l.b16 %v95
    %v240 = vunpack.c.l.b16 %v96
    %v241 = vunpack.c.l.b16 %v97
    %v242 = vunpack.c.l.b16 %v98
    %v243 = vunpack.c.l.b16 %v99
    %v244 = vunpack.c.l.b16 %v100
    %v245 = vunpack.c.l.b16 %v101
    %v246 = vunpack.c.l.b16 %v102
    %v247 = vunpack.c.l.b16 %v103
    %v248 = vunpack.c.l.b16 %v104
    %v249 = vunpack.c.l.b16 %v105
    %v250 = vunpack.c.l.b16 %v106
    %v251 = vunpack.c.l.b16 %v107
    %v252 = vunpack.c.l.b16 %v108
    %v253 = vunpack.c.l.b16 %v109
    %v254 = vunpack.c.l.b16 %v110
    %v255 = vunpack.c.l.b16 %v111
    %v256 = vunpack.c.l.b16 %v112
    %v257 = vunpack.c.l.b16 %v113
    %v258 = vunpack.c.l.b16 %v114
    %v259 = vunpack.c.l.b16 %v115
    %v260 = vpack.c.b16 %v197, %v196
    %v261 = vpack.c.b16 %v199, %v198
    %v262 = vpack.c.b16 %v201, %v200
    %v263 = vpack.c.b16 %v203, %v202
    %v264 = vpack.c.b16 %v205, %v204
    %v265 = vpack.c.b16 %v207, %v206
    %v266 = vpack.c.b16 %v209, %v208
    %v267 = vpack.c.b16 %v211, %v210
    %v268 = vpack.c.b16 %v213, %v212
    %v269 = vpack.c.b16 %v215, %v214
    %v270 = vpack.c.b16 %v217, %v216
    %v271 = vpack.c.b16 %v219, %v218
    %v272 = vpack.c.b16 %v221, %v220
    %v273 = vpack.c.b16 %v223, %v222
    %v274 = vpack.c.b16 %v225, %v224
    %v275 = vpack.c.b16 %v227, %v226
    %v276 = vpack.c.b16 %v229, %v228
    %v277 = vpack.c.b16 %v231, %v230
    %v278 = vpack.c.b16 %v233, %v232
    %v279 = vpack.c.b16 %v235, %v234
    %v280 = vpack.c.b16 %v237, %v236
    %v281 = vpack.c.b16 %v239, %v238
    %v282 = vpack.c.b16 %v241, %v240
    %v283 = vpack.c.b16 %v243, %v242
    %v284 = vpack.c.b16 %v245, %v244
    %v285 = vpack.c.b16 %v247, %v246
    %v286 = vpack.c.b16 %v249, %v248
    %v287 = vpack.c.b16 %v251, %v250
    %v288 = vpack.c.b16 %v253, %v252
    %v289 = vpack.c.b16 %v255, %v254
    %v290 = vpack.c.b16 %v257, %v256
    %v291 = vpack.c.b16 %v259, %v258
    %v340 = vunpack.c.l.b16 %v116
    %v341 = vunpack.c.l.b16 %v117
    %v342 = vunpack.c.l.b16 %v118
    %v343 = vunpack.c.l.b16 %v119
    %v344 = vunpack.c.l.b16 %v120
    %v345 = vunpack.c.l.b16 %v121
    %v346 = vunpack.c.l.b16 %v122
    %v347 = vunpack.c.l.b16 %v123
    %v348 = vunpack.c.l.b16 %v124
    %v349 = vunpack.c.l.b16 %v125
    %v350 = vunpack.c.l.b16 %v126
    %v351 = vunpack.c.l.b16 %v127
    %v352 = vunpack.c.l.b16 %v128
    %v353 = vunpack.c.l.b16 %v129
    %v354 = vunpack.c.l.b16 %v130
    %v355 = vunpack.c.l.b16 %v131
    %v356 = vpack.c.b16 %v341, %v340
    %v357 = vpack.c.b16 %v343, %v342
    %v358 = vpack.c.b16 %v345, %v344
    %v359 = vpack.c.b16 %v347, %v346
    %v360 = vpack.c.b16 %v349, %v348
    %v361 = vpack.c.b16 %v351, %v350
    %v362 = vpack.c.b16 %v353, %v352
    %v363 = vpack.c.b16 %v355, %v354
    %372 = vmatprep.subr.bf16.mxu0 0
    %373 = vmatpush1.bf16.msra.mxu0 %v356
    %374 = vmatprep.subr.bf16.mxu0 0
    %375 = vmatpush1.bf16.msra.mxu0 %v357
    %376 = vmatprep.subr.bf16.mxu0 0
    %377 = vmatpush1.bf16.msra.mxu0 %v358
    %378 = vmatprep.subr.bf16.mxu0 0
    %379 = vmatpush1.bf16.msra.mxu0 %v359
    %380 = vmatprep.subr.bf16.mxu0 0
    %381 = vmatpush1.bf16.msra.mxu0 %v360
    %382 = vmatprep.subr.bf16.mxu0 0
    %383 = vmatpush1.bf16.msra.mxu0 %v361
    %384 = vmatprep.subr.bf16.mxu0 0
    %385 = vmatpush1.bf16.msra.mxu0 %v362
    %386 = vmatprep.subr.bf16.mxu0 0
    %387 = vmatpush1.bf16.msra.mxu0 %v363
    %388 = vmatprep.subr.bf16.mxu0 0
    %389 = vmatpush1.bf16.msra.mxu0 0
    %390 = vmatprep.subr.bf16.mxu0 0
    %391 = vmatpush1.bf16.msra.mxu0 0
    %392 = vmatprep.subr.bf16.mxu0 0
    %393 = vmatpush1.bf16.msra.mxu0 0
    %394 = vmatprep.subr.bf16.mxu0 0
    %395 = vmatpush1.bf16.msra.mxu0 0
    %396 = vmatprep.subr.bf16.mxu0 0
    %397 = vmatpush1.bf16.msra.mxu0 0
    %398 = vmatprep.subr.bf16.mxu0 0
    %399 = vmatpush1.bf16.msra.mxu0 0
    %400 = vmatprep.subr.bf16.mxu0 0
    %401 = vmatpush1.bf16.msra.mxu0 0
    %402 = vmatprep.subr.bf16.mxu0 0
    %403 = vmatpush1.bf16.msra.mxu0 0
    %404 = vmatprep.mubr.bf16.mxu0 0
    %405 = vmatmul.mubr.bf16.gmra.mrb[0].mxu0 %v260
    %v406 = vpop.f32.mrb[0].mxu0
    %v407 = vadd.f32 0.0, %v406
    %v408 = vpop.f32.mrb[0].mxu0
    %v409 = vpop.f32.mrb[0].mxu0
    %v410 = vadd.f32 0.0, %v409
    %v411 = vpop.f32.mrb[0].mxu0
    %412 = vmatprep.mubr.bf16.mxu0 0
    %413 = vmatmul.mubr.bf16.gmra.mrb[0].mxu0 %v261
    %v414 = vpop.f32.mrb[0].mxu0
    %v415 = vadd.f32 0.0, %v414
    %v416 = vpop.f32.mrb[0].mxu0
    %v417 = vpop.f32.mrb[0].mxu0
    %v418 = vadd.f32 0.0, %v417
    %v419 = vpop.f32.mrb[0].mxu0
    %420 = vmatprep.mubr.bf16.mxu0 0
    %421 = vmatmul.mubr.bf16.gmra.mrb[0].mxu0 %v262
    %v422 = vpop.f32.mrb[0].mxu0
    %v423 = vadd.f32 0.0, %v422
    %v424 = vpop.f32.mrb[0].mxu0
    %v425 = vpop.f32.mrb[0].mxu0
    %v426 = vadd.f32 0.0, %v425
    %v427 = vpop.f32.mrb[0].mxu0
    %428 = vmatprep.mubr.bf16.mxu0 0
    %429 = vmatmul.mubr.bf16.gmra.mrb[0].mxu0 %v263
    %v430 = vpop.f32.mrb[0].mxu0
    %v431 = vadd.f32 0.0, %v430
    %v432 = vpop.f32.mrb[0].mxu0
    %v433 = vpop.f32.mrb[0].mxu0
    %v434 = vadd.f32 0.0, %v433
    %v435 = vpop.f32.mrb[0].mxu0
    %436 = vmatprep.mubr.bf16.mxu0 0
    %437 = vmatmul.mubr.bf16.gmra.mrb[0].mxu0 %v264
    %v438 = vpop.f32.mrb[0].mxu0
    %v439 = vadd.f32 0.0, %v438
    %v440 = vpop.f32.mrb[0].mxu0
    %v441 = vpop.f32.mrb[0].mxu0
    %v442 = vadd.f32 0.0, %v441
    %v443 = vpop.f32.mrb[0].mxu0
    %444 = vmatprep.mubr.bf16.mxu0 0
    %445 = vmatmul.mubr.bf16.gmra.mrb[0].mxu0 %v265
    %v446 = vpop.f32.mrb[0].mxu0
    %v447 = vadd.f32 0.0, %v446
    %v448 = vpop.f32.mrb[0].mxu0
    %v449 = vpop.f32.mrb[0].mxu0
    %v450 = vadd.f32 0.0, %v449
    %v451 = vpop.f32.mrb[0].mxu0
    %452 = vmatprep.mubr.bf16.mxu0 0
    %453 = vmatmul.mubr.bf16.gmra.mrb[0].mxu0 %v266
    %v454 = vpop.f32.mrb[0].mxu0
    %v455 = vadd.f32 0.0, %v454
    %v456 = vpop.f32.mrb[0].mxu0
    %v457 = vpop.f32.mrb[0].mxu0
    %v458 = vadd.f32 0.0, %v457
    %v459 = vpop.f32.mrb[0].mxu0
    %460 = vmatprep.mubr.bf16.mxu0 0
    %461 = vmatmul.mubr.bf16.gmra.mrb[0].mxu0 %v267
    %v462 = vpop.f32.mrb[0].mxu0
    %v463 = vadd.f32 0.0, %v462
    %v464 = vpop.f32.mrb[0].mxu0
    %v465 = vpop.f32.mrb[0].mxu0
    %v466 = vadd.f32 0.0, %v465
    %v467 = vpop.f32.mrb[0].mxu0
    %468 = vmatprep.mubr.bf16.mxu0 0
    %469 = vmatmul.mubr.bf16.gmra.mrb[0].mxu0 %v268
    %v470 = vpop.f32.mrb[0].mxu0
    %v471 = vadd.f32 0.0, %v470
    %v472 = vpop.f32.mrb[0].mxu0
    %v473 = vpop.f32.mrb[0].mxu0
    %v474 = vadd.f32 0.0, %v473
    %v475 = vpop.f32.mrb[0].mxu0
    %476 = vmatprep.mubr.bf16.mxu0 0
    %477 = vmatmul.mubr.bf16.gmra.mrb[0].mxu0 %v269
    %v478 = vpop.f32.mrb[0].mxu0
    %v479 = vadd.f32 0.0, %v478
    %v480 = vpop.f32.mrb[0].mxu0
    %v481 = vpop.f32.mrb[0].mxu0
    %v482 = vadd.f32 0.0, %v481
    %v483 = vpop.f32.mrb[0].mxu0
    %484 = vmatprep.mubr.bf16.mxu0 0
    %485 = vmatmul.mubr.bf16.gmra.mrb[0].mxu0 %v270
    %v486 = vpop.f32.mrb[0].mxu0
    %v487 = vadd.f32 0.0, %v486
    %v488 = vpop.f32.mrb[0].mxu0
    %v489 = vpop.f32.mrb[0].mxu0
    %v490 = vadd.f32 0.0, %v489
    %v491 = vpop.f32.mrb[0].mxu0
    %492 = vmatprep.mubr.bf16.mxu0 0
    %493 = vmatmul.mubr.bf16.gmra.mrb[0].mxu0 %v271
    %v494 = vpop.f32.mrb[0].mxu0
    %v495 = vadd.f32 0.0, %v494
    %v496 = vpop.f32.mrb[0].mxu0
    %v497 = vpop.f32.mrb[0].mxu0
    %v498 = vadd.f32 0.0, %v497
    %v499 = vpop.f32.mrb[0].mxu0
    %500 = vmatprep.mubr.bf16.mxu0 0
    %501 = vmatmul.mubr.bf16.gmra.mrb[0].mxu0 %v272
    %v502 = vpop.f32.mrb[0].mxu0
    %v503 = vadd.f32 0.0, %v502
    %v504 = vpop.f32.mrb[0].mxu0
    %v505 = vpop.f32.mrb[0].mxu0
    %v506 = vadd.f32 0.0, %v505
    %v507 = vpop.f32.mrb[0].mxu0
    %508 = vmatprep.mubr.bf16.mxu0 0
    %509 = vmatmul.mubr.bf16.gmra.mrb[0].mxu0 %v273
    %v510 = vpop.f32.mrb[0].mxu0
    %v511 = vadd.f32 0.0, %v510
    %v512 = vpop.f32.mrb[0].mxu0
    %v513 = vpop.f32.mrb[0].mxu0
    %v514 = vadd.f32 0.0, %v513
    %v515 = vpop.f32.mrb[0].mxu0
    %516 = vmatprep.mubr.bf16.mxu0 0
    %517 = vmatmul.mubr.bf16.gmra.mrb[0].mxu0 %v274
    %v518 = vpop.f32.mrb[0].mxu0
    %v519 = vadd.f32 0.0, %v518
    %v520 = vpop.f32.mrb[0].mxu0
    %v521 = vpop.f32.mrb[0].mxu0
    %v522 = vadd.f32 0.0, %v521
    %v523 = vpop.f32.mrb[0].mxu0
    %524 = vmatprep.mubr.bf16.mxu0 0
    %525 = vmatmul.mubr.bf16.gmra.mrb[0].mxu0 %v275
    %v526 = vpop.f32.mrb[0].mxu0
    %v527 = vadd.f32 0.0, %v526
    %v528 = vpop.f32.mrb[0].mxu0
    %v529 = vpop.f32.mrb[0].mxu0
    %v530 = vadd.f32 0.0, %v529
    %v531 = vpop.f32.mrb[0].mxu0
    %532 = vmatprep.mubr.bf16.mxu0 0
    %533 = vmatmul.mubr.bf16.gmra.mrb[0].mxu0 %v276
    %v534 = vpop.f32.mrb[0].mxu0
    %v535 = vadd.f32 0.0, %v534
    %v536 = vpop.f32.mrb[0].mxu0
    %v537 = vpop.f32.mrb[0].mxu0
    %v538 = vadd.f32 0.0, %v537
    %v539 = vpop.f32.mrb[0].mxu0
    %540 = vmatprep.mubr.bf16.mxu0 0
    %541 = vmatmul.mubr.bf16.gmra.mrb[0].mxu0 %v277
    %v542 = vpop.f32.mrb[0].mxu0
    %v543 = vadd.f32 0.0, %v542
    %v544 = vpop.f32.mrb[0].mxu0
    %v545 = vpop.f32.mrb[0].mxu0
    %v546 = vadd.f32 0.0, %v545
    %v547 = vpop.f32.mrb[0].mxu0
    %548 = vmatprep.mubr.bf16.mxu0 0
    %549 = vmatmul.mubr.bf16.gmra.mrb[0].mxu0 %v278
    %v550 = vpop.f32.mrb[0].mxu0
    %v551 = vadd.f32 0.0, %v550
    %v552 = vpop.f32.mrb[0].mxu0
    %v553 = vpop.f32.mrb[0].mxu0
    %v554 = vadd.f32 0.0, %v553
    %v555 = vpop.f32.mrb[0].mxu0
    %556 = vmatprep.mubr.bf16.mxu0 0
    %557 = vmatmul.mubr.bf16.gmra.mrb[0].mxu0 %v279
    %v558 = vpop.f32.mrb[0].mxu0
    %v559 = vadd.f32 0.0, %v558
    %v560 = vpop.f32.mrb[0].mxu0
    %v561 = vpop.f32.mrb[0].mxu0
    %v562 = vadd.f32 0.0, %v561
    %v563 = vpop.f32.mrb[0].mxu0
    %564 = vmatprep.mubr.bf16.mxu0 0
    %565 = vmatmul.mubr.bf16.gmra.mrb[0].mxu0 %v280
    %v566 = vpop.f32.mrb[0].mxu0
    %v567 = vadd.f32 0.0, %v566
    %v568 = vpop.f32.mrb[0].mxu0
    %v569 = vpop.f32.mrb[0].mxu0
    %v570 = vadd.f32 0.0, %v569
    %v571 = vpop.f32.mrb[0].mxu0
    %572 = vmatprep.mubr.bf16.mxu0 0
    %573 = vmatmul.mubr.bf16.gmra.mrb[0].mxu0 %v281
    %v574 = vpop.f32.mrb[0].mxu0
    %v575 = vadd.f32 0.0, %v574
    %v576 = vpop.f32.mrb[0].mxu0
    %v577 = vpop.f32.mrb[0].mxu0
    %v578 = vadd.f32 0.0, %v577
    %v579 = vpop.f32.mrb[0].mxu0
    %580 = vmatprep.mubr.bf16.mxu0 0
    %581 = vmatmul.mubr.bf16.gmra.mrb[0].mxu0 %v282
    %v582 = vpop.f32.mrb[0].mxu0
    %v583 = vadd.f32 0.0, %v582
    %v584 = vpop.f32.mrb[0].mxu0
    %v585 = vpop.f32.mrb[0].mxu0
    %v586 = vadd.f32 0.0, %v585
    %v587 = vpop.f32.mrb[0].mxu0
    %588 = vmatprep.mubr.bf16.mxu0 0
    %589 = vmatmul.mubr.bf16.gmra.mrb[0].mxu0 %v283
    %v590 = vpop.f32.mrb[0].mxu0
    %v591 = vadd.f32 0.0, %v590
    %v592 = vpop.f32.mrb[0].mxu0
    %v593 = vpop.f32.mrb[0].mxu0
    %v594 = vadd.f32 0.0, %v593
    %v595 = vpop.f32.mrb[0].mxu0
    %596 = vmatprep.mubr.bf16.mxu0 0
    %597 = vmatmul.mubr.bf16.gmra.mrb[0].mxu0 %v284
    %v598 = vpop.f32.mrb[0].mxu0
    %v599 = vadd.f32 0.0, %v598
    %v600 = vpop.f32.mrb[0].mxu0
    %v601 = vpop.f32.mrb[0].mxu0
    %v602 = vadd.f32 0.0, %v601
    %v603 = vpop.f32.mrb[0].mxu0
    %604 = vmatprep.mubr.bf16.mxu0 0
    %605 = vmatmul.mubr.bf16.gmra.mrb[0].mxu0 %v285
    %v606 = vpop.f32.mrb[0].mxu0
    %v607 = vadd.f32 0.0, %v606
    %v608 = vpop.f32.mrb[0].mxu0
    %v609 = vpop.f32.mrb[0].mxu0
    %v610 = vadd.f32 0.0, %v609
    %v611 = vpop.f32.mrb[0].mxu0
    %612 = vmatprep.mubr.bf16.mxu0 0
    %613 = vmatmul.mubr.bf16.gmra.mrb[0].mxu0 %v286
    %v614 = vpop.f32.mrb[0].mxu0
    %v615 = vadd.f32 0.0, %v614
    %v616 = vpop.f32.mrb[0].mxu0
    %v617 = vpop.f32.mrb[0].mxu0
    %v618 = vadd.f32 0.0, %v617
    %v619 = vpop.f32.mrb[0].mxu0
    %620 = vmatprep.mubr.bf16.mxu0 0
    %621 = vmatmul.mubr.bf16.gmra.mrb[0].mxu0 %v287
    %v622 = vpop.f32.mrb[0].mxu0
    %v623 = vadd.f32 0.0, %v622
    %v624 = vpop.f32.mrb[0].mxu0
    %v625 = vpop.f32.mrb[0].mxu0
    %v626 = vadd.f32 0.0, %v625
    %v627 = vpop.f32.mrb[0].mxu0
    %628 = vmatprep.mubr.bf16.mxu0 0
    %629 = vmatmul.mubr.bf16.gmra.mrb[0].mxu0 %v288
    %v630 = vpop.f32.mrb[0].mxu0
    %v631 = vadd.f32 0.0, %v630
    %v632 = vpop.f32.mrb[0].mxu0
    %v633 = vpop.f32.mrb[0].mxu0
    %v634 = vadd.f32 0.0, %v633
    %v635 = vpop.f32.mrb[0].mxu0
    %636 = vmatprep.mubr.bf16.mxu0 0
    %637 = vmatmul.mubr.bf16.gmra.mrb[0].mxu0 %v289
    %v638 = vpop.f32.mrb[0].mxu0
    %v639 = vadd.f32 0.0, %v638
    %v640 = vpop.f32.mrb[0].mxu0
    %v641 = vpop.f32.mrb[0].mxu0
    %v642 = vadd.f32 0.0, %v641
    %v643 = vpop.f32.mrb[0].mxu0
    %644 = vmatprep.mubr.bf16.mxu0 0
    %645 = vmatmul.mubr.bf16.gmra.mrb[0].mxu0 %v290
    %v646 = vpop.f32.mrb[0].mxu0
    %v647 = vadd.f32 0.0, %v646
    %v648 = vpop.f32.mrb[0].mxu0
    %v649 = vpop.f32.mrb[0].mxu0
    %v650 = vadd.f32 0.0, %v649
    %v651 = vpop.f32.mrb[0].mxu0
    %652 = vmatprep.mubr.bf16.mxu0 0
    %653 = vmatmul.mubr.bf16.gmra.mrb[0].mxu0 %v291
    %v654 = vpop.f32.mrb[0].mxu0
    %v655 = vadd.f32 0.0, %v654
    %v656 = vpop.f32.mrb[0].mxu0
    %v657 = vpop.f32.mrb[0].mxu0
    %v658 = vadd.f32 0.0, %v657
    %v659 = vpop.f32.mrb[0].mxu0
    %660 = vdwg.mxu0
    %vm661 = vcmask 130048
    %662 = vst.msk [vmem:[#allocation7] sm:$0xff] %vm661, %v407
    %663 = vst.msk [vmem:[#allocation7 + $0x8] sm:$0xff] %vm661, %v410
    %664 = vst.msk [vmem:[#allocation7 + $0x10] sm:$0xff] %vm661, %v415
    %665 = vst.msk [vmem:[#allocation7 + $0x18] sm:$0xff] %vm661, %v418
    %666 = vst.msk [vmem:[#allocation7 + $0x20] sm:$0xff] %vm661, %v423
    %667 = vst.msk [vmem:[#allocation7 + $0x28] sm:$0xff] %vm661, %v426
    %668 = vst.msk [vmem:[#allocation7 + $0x30] sm:$0xff] %vm661, %v431
    %669 = vst.msk [vmem:[#allocation7 + $0x38] sm:$0xff] %vm661, %v434
    %670 = vst.msk [vmem:[#allocation7 + $0x40] sm:$0xff] %vm661, %v439
    %671 = vst.msk [vmem:[#allocation7 + $0x48] sm:$0xff] %vm661, %v442
    %672 = vst.msk [vmem:[#allocation7 + $0x50] sm:$0xff] %vm661, %v447
    %673 = vst.msk [vmem:[#allocation7 + $0x58] sm:$0xff] %vm661, %v450
    %674 = vst.msk [vmem:[#allocation7 + $0x60] sm:$0xff] %vm661, %v455
    %675 = vst.msk [vmem:[#allocation7 + $0x68] sm:$0xff] %vm661, %v458
    %676 = vst.msk [vmem:[#allocation7 + $0x70] sm:$0xff] %vm661, %v463
    %677 = vst.msk [vmem:[#allocation7 + $0x78] sm:$0xff] %vm661, %v466
    %678 = vst.msk [vmem:[#allocation7 + $0x80] sm:$0xff] %vm661, %v471
    %679 = vst.msk [vmem:[#allocation7 + $0x88] sm:$0xff] %vm661, %v474
    %680 = vst.msk [vmem:[#allocation7 + $0x90] sm:$0xff] %vm661, %v479
    %681 = vst.msk [vmem:[#allocation7 + $0x98] sm:$0xff] %vm661, %v482
    %682 = vst.msk [vmem:[#allocation7 + $0xa0] sm:$0xff] %vm661, %v487
    %683 = vst.msk [vmem:[#allocation7 + $0xa8] sm:$0xff] %vm661, %v490
    %684 = vst.msk [vmem:[#allocation7 + $0xb0] sm:$0xff] %vm661, %v495
    %685 = vst.msk [vmem:[#allocation7 + $0xb8] sm:$0xff] %vm661, %v498
    %686 = vst.msk [vmem:[#allocation7 + $0xc0] sm:$0xff] %vm661, %v503
    %687 = vst.msk [vmem:[#allocation7 + $0xc8] sm:$0xff] %vm661, %v506
    %688 = vst.msk [vmem:[#allocation7 + $0xd0] sm:$0xff] %vm661, %v511
    %689 = vst.msk [vmem:[#allocation7 + $0xd8] sm:$0xff] %vm661, %v514
    %690 = vst.msk [vmem:[#allocation7 + $0xe0] sm:$0xff] %vm661, %v519
    %691 = vst.msk [vmem:[#allocation7 + $0xe8] sm:$0xff] %vm661, %v522
    %692 = vst.msk [vmem:[#allocation7 + $0xf0] sm:$0xff] %vm661, %v527
    %693 = vst.msk [vmem:[#allocation7 + $0xf8] sm:$0xff] %vm661, %v530
    %694 = vst.msk [vmem:[#allocation7 + $0x100] sm:$0xff] %vm661, %v535
    %695 = vst.msk [vmem:[#allocation7 + $0x108] sm:$0xff] %vm661, %v538
    %696 = vst.msk [vmem:[#allocation7 + $0x110] sm:$0xff] %vm661, %v543
    %697 = vst.msk [vmem:[#allocation7 + $0x118] sm:$0xff] %vm661, %v546
    %698 = vst.msk [vmem:[#allocation7 + $0x120] sm:$0xff] %vm661, %v551
    %699 = vst.msk [vmem:[#allocation7 + $0x128] sm:$0xff] %vm661, %v554
    %700 = vst.msk [vmem:[#allocation7 + $0x130] sm:$0xff] %vm661, %v559
    %701 = vst.msk [vmem:[#allocation7 + $0x138] sm:$0xff] %vm661, %v562
    %702 = vst.msk [vmem:[#allocation7 + $0x140] sm:$0xff] %vm661, %v567
    %703 = vst.msk [vmem:[#allocation7 + $0x148] sm:$0xff] %vm661, %v570
    %704 = vst.msk [vmem:[#allocation7 + $0x150] sm:$0xff] %vm661, %v575
    %705 = vst.msk [vmem:[#allocation7 + $0x158] sm:$0xff] %vm661, %v578
    %706 = vst.msk [vmem:[#allocation7 + $0x160] sm:$0xff] %vm661, %v583
    %707 = vst.msk [vmem:[#allocation7 + $0x168] sm:$0xff] %vm661, %v586
    %708 = vst.msk [vmem:[#allocation7 + $0x170] sm:$0xff] %vm661, %v591
    %709 = vst.msk [vmem:[#allocation7 + $0x178] sm:$0xff] %vm661, %v594
    %710 = vst.msk [vmem:[#allocation7 + $0x180] sm:$0xff] %vm661, %v599
    %711 = vst.msk [vmem:[#allocation7 + $0x188] sm:$0xff] %vm661, %v602
    %712 = vst.msk [vmem:[#allocation7 + $0x190] sm:$0xff] %vm661, %v607
    %713 = vst.msk [vmem:[#allocation7 + $0x198] sm:$0xff] %vm661, %v610
    %714 = vst.msk [vmem:[#allocation7 + $0x1a0] sm:$0xff] %vm661, %v615
    %715 = vst.msk [vmem:[#allocation7 + $0x1a8] sm:$0xff] %vm661, %v618
    %716 = vst.msk [vmem:[#allocation7 + $0x1b0] sm:$0xff] %vm661, %v623
    %717 = vst.msk [vmem:[#allocation7 + $0x1b8] sm:$0xff] %vm661, %v626
    %718 = vst.msk [vmem:[#allocation7 + $0x1c0] sm:$0xff] %vm661, %v631
    %719 = vst.msk [vmem:[#allocation7 + $0x1c8] sm:$0xff] %vm661, %v634
    %720 = vst.msk [vmem:[#allocation7 + $0x1d0] sm:$0xff] %vm661, %v639
    %721 = vst.msk [vmem:[#allocation7 + $0x1d8] sm:$0xff] %vm661, %v642
    %722 = vst.msk [vmem:[#allocation7 + $0x1e0] sm:$0xff] %vm661, %v647
    %723 = vst.msk [vmem:[#allocation7 + $0x1e8] sm:$0xff] %vm661, %v650
    %724 = vst.msk [vmem:[#allocation7 + $0x1f0] sm:$0xff] %vm661, %v655
    %725 = vst.msk [vmem:[#allocation7 + $0x1f8] sm:$0xff] %vm661, %v658
    %v726 = vld [vmem:[#allocation8] sm:$0x1]
    %v727 = vsel %vm661, %v407, 0.0
    %v728 = vsel %vm661, %v410, 0.0
    %v729 = vadd.f32 %v727, %v728
    %v730 = vsel %vm661, %v415, 0.0
    %v731 = vadd.f32 %v729, %v730
    %v732 = vsel %vm661, %v418, 0.0
    %v733 = vadd.f32 %v731, %v732
    %v734 = vsel %vm661, %v423, 0.0
    %v735 = vadd.f32 %v733, %v734
    %v736 = vsel %vm661, %v426, 0.0
    %v737 = vadd.f32 %v735, %v736
    %v738 = vsel %vm661, %v431, 0.0
    %v739 = vadd.f32 %v737, %v738
    %v740 = vsel %vm661, %v434, 0.0
    %v741 = vadd.f32 %v739, %v740
    %v742 = vsel %vm661, %v439, 0.0
    %v743 = vadd.f32 %v741, %v742
    %v744 = vsel %vm661, %v442, 0.0
    %v745 = vadd.f32 %v743, %v744
    %v746 = vsel %vm661, %v447, 0.0
    %v747 = vadd.f32 %v745, %v746
    %v748 = vsel %vm661, %v450, 0.0
    %v749 = vadd.f32 %v747, %v748
    %v750 = vsel %vm661, %v455, 0.0
    %v751 = vadd.f32 %v749, %v750
    %v752 = vsel %vm661, %v458, 0.0
    %v753 = vadd.f32 %v751, %v752
    %v754 = vsel %vm661, %v463, 0.0
    %v755 = vadd.f32 %v753, %v754
    %v756 = vsel %vm661, %v466, 0.0
    %v757 = vadd.f32 %v755, %v756
    %v758 = vsel %vm661, %v471, 0.0
    %v759 = vadd.f32 %v757, %v758
    %v760 = vsel %vm661, %v474, 0.0
    %v761 = vadd.f32 %v759, %v760
    %v762 = vsel %vm661, %v479, 0.0
    %v763 = vadd.f32 %v761, %v762
    %v764 = vsel %vm661, %v482, 0.0
    %v765 = vadd.f32 %v763, %v764
    %v766 = vsel %vm661, %v487, 0.0
    %v767 = vadd.f32 %v765, %v766
    %v768 = vsel %vm661, %v490, 0.0
    %v769 = vadd.f32 %v767, %v768
    %v770 = vsel %vm661, %v495, 0.0
    %v771 = vadd.f32 %v769, %v770
    %v772 = vsel %vm661, %v498, 0.0
    %v773 = vadd.f32 %v771, %v772
    %v774 = vsel %vm661, %v503, 0.0
    %v775 = vadd.f32 %v773, %v774
    %v776 = vsel %vm661, %v506, 0.0
    %v777 = vadd.f32 %v775, %v776
    %v778 = vsel %vm661, %v511, 0.0
    %v779 = vadd.f32 %v777, %v778
    %v780 = vsel %vm661, %v514, 0.0
    %v781 = vadd.f32 %v779, %v780
    %v782 = vsel %vm661, %v519, 0.0
    %v783 = vadd.f32 %v781, %v782
    %v784 = vsel %vm661, %v522, 0.0
    %v785 = vadd.f32 %v783, %v784
    %v786 = vsel %vm661, %v527, 0.0
    %v787 = vadd.f32 %v785, %v786
    %v788 = vsel %vm661, %v530, 0.0
    %v789 = vadd.f32 %v787, %v788
    %v790 = vsel %vm661, %v535, 0.0
    %v791 = vadd.f32 %v789, %v790
    %v792 = vsel %vm661, %v538, 0.0
    %v793 = vadd.f32 %v791, %v792
    %v794 = vsel %vm661, %v543, 0.0
    %v795 = vadd.f32 %v793, %v794
    %v796 = vsel %vm661, %v546, 0.0
    %v797 = vadd.f32 %v795, %v796
    %v798 = vsel %vm661, %v551, 0.0
    %v799 = vadd.f32 %v797, %v798
    %v800 = vsel %vm661, %v554, 0.0
    %v801 = vadd.f32 %v799, %v800
    %v802 = vsel %vm661, %v559, 0.0
    %v803 = vadd.f32 %v801, %v802
    %v804 = vsel %vm661, %v562, 0.0
    %v805 = vadd.f32 %v803, %v804
    %v806 = vsel %vm661, %v567, 0.0
    %v807 = vadd.f32 %v805, %v806
    %v808 = vsel %vm661, %v570, 0.0
    %v809 = vadd.f32 %v807, %v808
    %v810 = vsel %vm661, %v575, 0.0
    %v811 = vadd.f32 %v809, %v810
    %v812 = vsel %vm661, %v578, 0.0
    %v813 = vadd.f32 %v811, %v812
    %v814 = vsel %vm661, %v583, 0.0
    %v815 = vadd.f32 %v813, %v814
    %v816 = vsel %vm661, %v586, 0.0
    %v817 = vadd.f32 %v815, %v816
    %v818 = vsel %vm661, %v591, 0.0
    %v819 = vadd.f32 %v817, %v818
    %v820 = vsel %vm661, %v594, 0.0
    %v821 = vadd.f32 %v819, %v820
    %v822 = vsel %vm661, %v599, 0.0
    %v823 = vadd.f32 %v821, %v822
    %v824 = vsel %vm661, %v602, 0.0
    %v825 = vadd.f32 %v823, %v824
    %v826 = vsel %vm661, %v607, 0.0
    %v827 = vadd.f32 %v825, %v826
    %v828 = vsel %vm661, %v610, 0.0
    %v829 = vadd.f32 %v827, %v828
    %v830 = vsel %vm661, %v615, 0.0
    %v831 = vadd.f32 %v829, %v830
    %v832 = vsel %vm661, %v618, 0.0
    %v833 = vadd.f32 %v831, %v832
    %v834 = vsel %vm661, %v623, 0.0
    %v835 = vadd.f32 %v833, %v834
    %v836 = vsel %vm661, %v626, 0.0
    %v837 = vadd.f32 %v835, %v836
    %v838 = vsel %vm661, %v631, 0.0
    %v839 = vadd.f32 %v837, %v838
    %v840 = vsel %vm661, %v634, 0.0
    %v841 = vadd.f32 %v839, %v840
    %v842 = vsel %vm661, %v639, 0.0
    %v843 = vadd.f32 %v841, %v842
    %v844 = vsel %vm661, %v642, 0.0
    %v845 = vadd.f32 %v843, %v844
    %v846 = vsel %vm661, %v647, 0.0
    %v847 = vadd.f32 %v845, %v846
    %v848 = vsel %vm661, %v650, 0.0
    %v849 = vadd.f32 %v847, %v848
    %v850 = vsel %vm661, %v655, 0.0
    %v851 = vadd.f32 %v849, %v850
    %v852 = vsel %vm661, %v658, 0.0
    %v853 = vadd.f32 %v851, %v852
    %v854 = vrot.slane %v853, 4
    %v855 = vadd.f32 %v853, %v854
    %v856 = vrot.slane %v855, 2
    %v857 = vadd.f32 %v855, %v856
    %v858 = vrot.slane %v857, 1
    %v859 = vadd.f32 %v857, %v858
    %v860 = vadd.f32 %v726, %v859
    %vm861 = vcmask 122880
    %862 = vst.msk [vmem:[#allocation8] sm:$0x1] %vm861, %v860
    %v863 = vld [vmem:[#allocation10] sm:$0x1]
    %v864 = vmul.f32 %v407, %v407
    %v865 = vmul.f32 %v410, %v410
    %v866 = vmul.f32 %v415, %v415
    %v867 = vmul.f32 %v418, %v418
    %v868 = vmul.f32 %v423, %v423
    %v869 = vmul.f32 %v426, %v426
    %v870 = vmul.f32 %v431, %v431
    %v871 = vmul.f32 %v434, %v434
    %v872 = vmul.f32 %v439, %v439
    %v873 = vmul.f32 %v442, %v442
    %v874 = vmul.f32 %v447, %v447
    %v875 = vmul.f32 %v450, %v450
    %v876 = vmul.f32 %v455, %v455
    %v877 = vmul.f32 %v458, %v458
    %v878 = vmul.f32 %v463, %v463
    %v879 = vmul.f32 %v466, %v466
    %v880 = vmul.f32 %v471, %v471
    %v881 = vmul.f32 %v474, %v474
    %v882 = vmul.f32 %v479, %v479
    %v883 = vmul.f32 %v482, %v482
    %v884 = vmul.f32 %v487, %v487
    %v885 = vmul.f32 %v490, %v490
    %v886 = vmul.f32 %v495, %v495
    %v887 = vmul.f32 %v498, %v498
    %v888 = vmul.f32 %v503, %v503
    %v889 = vmul.f32 %v506, %v506
    %v890 = vmul.f32 %v511, %v511
    %v891 = vmul.f32 %v514, %v514
    %v892 = vmul.f32 %v519, %v519
    %v893 = vmul.f32 %v522, %v522
    %v894 = vmul.f32 %v527, %v527
    %v895 = vmul.f32 %v530, %v530
    %v896 = vmul.f32 %v535, %v535
    %v897 = vmul.f32 %v538, %v538
    %v898 = vmul.f32 %v543, %v543
    %v899 = vmul.f32 %v546, %v546
    %v900 = vmul.f32 %v551, %v551
    %v901 = vmul.f32 %v554, %v554
    %v902 = vmul.f32 %v559, %v559
    %v903 = vmul.f32 %v562, %v562
    %v904 = vmul.f32 %v567, %v567
    %v905 = vmul.f32 %v570, %v570
    %v906 = vmul.f32 %v575, %v575
    %v907 = vmul.f32 %v578, %v578
    %v908 = vmul.f32 %v583, %v583
    %v909 = vmul.f32 %v586, %v586
    %v910 = vmul.f32 %v591, %v591
    %v911 = vmul.f32 %v594, %v594
    %v912 = vmul.f32 %v599, %v599
    %v913 = vmul.f32 %v602, %v602
    %v914 = vmul.f32 %v607, %v607
    %v915 = vmul.f32 %v610, %v610
    %v916 = vmul.f32 %v615, %v615
    %v917 = vmul.f32 %v618, %v618
    %v918 = vmul.f32 %v623, %v623
    %v919 = vmul.f32 %v626, %v626
    %v920 = vmul.f32 %v631, %v631
    %v921 = vmul.f32 %v634, %v634
    %v922 = vmul.f32 %v639, %v639
    %v923 = vmul.f32 %v642, %v642
    %v924 = vmul.f32 %v647, %v647
    %v925 = vmul.f32 %v650, %v650
    %v926 = vmul.f32 %v655, %v655
    %v927 = vmul.f32 %v658, %v658
    %v928 = vsel %vm661, %v864, 0.0
    %v929 = vsel %vm661, %v865, 0.0
    %v930 = vadd.f32 %v928, %v929
    %v931 = vsel %vm661, %v866, 0.0
    %v932 = vadd.f32 %v930, %v931
    %v933 = vsel %vm661, %v867, 0.0
    %v934 = vadd.f32 %v932, %v933
    %v935 = vsel %vm661, %v868, 0.0
    %v936 = vadd.f32 %v934, %v935
    %v937 = vsel %vm661, %v869, 0.0
    %v938 = vadd.f32 %v936, %v937
    %v939 = vsel %vm661, %v870, 0.0
    %v940 = vadd.f32 %v938, %v939
    %v941 = vsel %vm661, %v871, 0.0
    %v942 = vadd.f32 %v940, %v941
    %v943 = vsel %vm661, %v872, 0.0
    %v944 = vadd.f32 %v942, %v943
    %v945 = vsel %vm661, %v873, 0.0
    %v946 = vadd.f32 %v944, %v945
    %v947 = vsel %vm661, %v874, 0.0
    %v948 = vadd.f32 %v946, %v947
    %v949 = vsel %vm661, %v875, 0.0
    %v950 = vadd.f32 %v948, %v949
    %v951 = vsel %vm661, %v876, 0.0
    %v952 = vadd.f32 %v950, %v951
    %v953 = vsel %vm661, %v877, 0.0
    %v954 = vadd.f32 %v952, %v953
    %v955 = vsel %vm661, %v878, 0.0
    %v956 = vadd.f32 %v954, %v955
    %v957 = vsel %vm661, %v879, 0.0
    %v958 = vadd.f32 %v956, %v957
    %v959 = vsel %vm661, %v880, 0.0
    %v960 = vadd.f32 %v958, %v959
    %v961 = vsel %vm661, %v881, 0.0
    %v962 = vadd.f32 %v960, %v961
    %v963 = vsel %vm661, %v882, 0.0
    %v964 = vadd.f32 %v962, %v963
    %v965 = vsel %vm661, %v883, 0.0
    %v966 = vadd.f32 %v964, %v965
    %v967 = vsel %vm661, %v884, 0.0
    %v968 = vadd.f32 %v966, %v967
    %v969 = vsel %vm661, %v885, 0.0
    %v970 = vadd.f32 %v968, %v969
    %v971 = vsel %vm661, %v886, 0.0
    %v972 = vadd.f32 %v970, %v971
    %v973 = vsel %vm661, %v887, 0.0
    %v974 = vadd.f32 %v972, %v973
    %v975 = vsel %vm661, %v888, 0.0
    %v976 = vadd.f32 %v974, %v975
    %v977 = vsel %vm661, %v889, 0.0
    %v978 = vadd.f32 %v976, %v977
    %v979 = vsel %vm661, %v890, 0.0
    %v980 = vadd.f32 %v978, %v979
    %v981 = vsel %vm661, %v891, 0.0
    %v982 = vadd.f32 %v980, %v981
    %v983 = vsel %vm661, %v892, 0.0
    %v984 = vadd.f32 %v982, %v983
    %v985 = vsel %vm661, %v893, 0.0
    %v986 = vadd.f32 %v984, %v985
    %v987 = vsel %vm661, %v894, 0.0
    %v988 = vadd.f32 %v986, %v987
    %v989 = vsel %vm661, %v895, 0.0
    %v990 = vadd.f32 %v988, %v989
    %v991 = vsel %vm661, %v896, 0.0
    %v992 = vadd.f32 %v990, %v991
    %v993 = vsel %vm661, %v897, 0.0
    %v994 = vadd.f32 %v992, %v993
    %v995 = vsel %vm661, %v898, 0.0
    %v996 = vadd.f32 %v994, %v995
    %v997 = vsel %vm661, %v899, 0.0
    %v998 = vadd.f32 %v996, %v997
    %v999 = vsel %vm661, %v900, 0.0
    %v1000 = vadd.f32 %v998, %v999
    %v1001 = vsel %vm661, %v901, 0.0
    %v1002 = vadd.f32 %v1000, %v1001
    %v1003 = vsel %vm661, %v902, 0.0
    %v1004 = vadd.f32 %v1002, %v1003
    %v1005 = vsel %vm661, %v903, 0.0
    %v1006 = vadd.f32 %v1004, %v1005
    %v1007 = vsel %vm661, %v904, 0.0
    %v1008 = vadd.f32 %v1006, %v1007
    %v1009 = vsel %vm661, %v905, 0.0
    %v1010 = vadd.f32 %v1008, %v1009
    %v1011 = vsel %vm661, %v906, 0.0
    %v1012 = vadd.f32 %v1010, %v1011
    %v1013 = vsel %vm661, %v907, 0.0
    %v1014 = vadd.f32 %v1012, %v1013
    %v1015 = vsel %vm661, %v908, 0.0
    %v1016 = vadd.f32 %v1014, %v1015
    %v1017 = vsel %vm661, %v909, 0.0
    %v1018 = vadd.f32 %v1016, %v1017
    %v1019 = vsel %vm661, %v910, 0.0
    %v1020 = vadd.f32 %v1018, %v1019
    %v1021 = vsel %vm661, %v911, 0.0
    %v1022 = vadd.f32 %v1020, %v1021
    %v1023 = vsel %vm661, %v912, 0.0
    %v1024 = vadd.f32 %v1022, %v1023
    %v1025 = vsel %vm661, %v913, 0.0
    %v1026 = vadd.f32 %v1024, %v1025
    %v1027 = vsel %vm661, %v914, 0.0
    %v1028 = vadd.f32 %v1026, %v1027
    %v1029 = vsel %vm661, %v915, 0.0
    %v1030 = vadd.f32 %v1028, %v1029
    %v1031 = vsel %vm661, %v916, 0.0
    %v1032 = vadd.f32 %v1030, %v1031
    %v1033 = vsel %vm661, %v917, 0.0
    %v1034 = vadd.f32 %v1032, %v1033
    %v1035 = vsel %vm661, %v918, 0.0
    %v1036 = vadd.f32 %v1034, %v1035
    %v1037 = vsel %vm661, %v919, 0.0
    %v1038 = vadd.f32 %v1036, %v1037
    %v1039 = vsel %vm661, %v920, 0.0
    %v1040 = vadd.f32 %v1038, %v1039
    %v1041 = vsel %vm661, %v921, 0.0
    %v1042 = vadd.f32 %v1040, %v1041
    %v1043 = vsel %vm661, %v922, 0.0
    %v1044 = vadd.f32 %v1042, %v1043
    %v1045 = vsel %vm661, %v923, 0.0
    %v1046 = vadd.f32 %v1044, %v1045
    %v1047 = vsel %vm661, %v924, 0.0
    %v1048 = vadd.f32 %v1046, %v1047
    %v1049 = vsel %vm661, %v925, 0.0
    %v1050 = vadd.f32 %v1048, %v1049
    %v1051 = vsel %vm661, %v926, 0.0
    %v1052 = vadd.f32 %v1050, %v1051
    %v1053 = vsel %vm661, %v927, 0.0
    %v1054 = vadd.f32 %v1052, %v1053
    %v1055 = vrot.slane %v1054, 4
    %v1056 = vadd.f32 %v1054, %v1055
    %v1057 = vrot.slane %v1056, 2
    %v1058 = vadd.f32 %v1056, %v1057
    %v1059 = vrot.slane %v1058, 1
    %v1060 = vadd.f32 %v1058, %v1059
    %v1061 = vadd.f32 %v863, %v1060
    %1062 = vst.msk [vmem:[#allocation10] sm:$0x1] %vm861, %v1061
    // Predicated region
    $region22: #{dcdisc_forward.9} parent=1 // pred_check
      _
    $region23: #{dcdisc_forward.9} parent=1 // pred_check_branch
      %1064 = sbr.rel (0) target = $region25
    $region24: #{dcdisc_forward.9} parent=1 // pred_region
      %s1066 = ssub.s32 8192, 8192
      %1067 = vsyncadd [#allocation4], %s1066
      %s1068 = sshll.u32 [#allocation7], 4
      %s1069 = int_to_ptr.vmem [resolvable:$true] %s1068
      %1074 = dma.vmem_to_hbm [thread:$0]  %s1069, 8192, %s2, [#allocation4], 128, 128, 8
    $region25: #{dcdisc_forward.9} parent=1 // pred_fallthru
      _
    // Predicated region
    $region26: #{dcdisc_forward.9} parent=1 // pred_check
      _
    $region27: #{dcdisc_forward.9} parent=1 // pred_check_branch
      %1076 = sbr.rel (0) target = $region29
    $region28: #{dcdisc_forward.9} parent=1 // pred_region
      %s1078 = ssub.s32 16, 16
      %1079 = vsyncadd [#allocation9], %s1078
      %s1081 = sshll.u32 [#allocation8], 4
      %s1082 = int_to_ptr.vmem [resolvable:$true] %s1081
      %1084 = dma.vmem_to_hbm [thread:$0]  %s1082, 16, %s3, [#allocation9]
    $region29: #{dcdisc_forward.9} parent=1 // pred_fallthru
      _
    // Predicated region
    $region30: #{dcdisc_forward.9} parent=1 // pred_check
      _
    $region31: #{dcdisc_forward.9} parent=1 // pred_check_branch
      %1086 = sbr.rel (0) target = $region33
    $region32: #{dcdisc_forward.9} parent=1 // pred_region
      %s1088 = ssub.s32 16, 16
      %1089 = vsyncadd [#allocation9], %s1088
      %s1091 = sshll.u32 [#allocation10], 4
      %s1092 = int_to_ptr.vmem [resolvable:$true] %s1091
      %1094 = dma.vmem_to_hbm [thread:$0]  %s1092, 16, %s4, [#allocation9]
    $region33: #{dcdisc_forward.9} parent=1 // pred_fallthru
      _
    // Predicated region
    $region34: #{dcdisc_forward.9} parent=1 // pred_check
      _
    $region35: #{dcdisc_forward.9} parent=1 // pred_check_branch
      %1096 = sbr.rel (0) target = $region37
    $region36: #{dcdisc_forward.9} parent=1 // pred_region
      %1097 = dma.done [#allocation4], 8192
    $region37: #{dcdisc_forward.9} parent=1 // pred_fallthru
      _
    // Predicated region
    $region38: #{dcdisc_forward.9} parent=1 // pred_check
      _
    $region39: #{dcdisc_forward.9} parent=1 // pred_check_branch
      %1099 = sbr.rel (0) target = $region41
    $region40: #{dcdisc_forward.9} parent=1 // pred_region
      %1100 = dma.done [#allocation9], 16
    $region41: #{dcdisc_forward.9} parent=1 // pred_fallthru
      _
    // Predicated region
    $region42: #{dcdisc_forward.9} parent=1 // pred_check
      _
    $region43: #{dcdisc_forward.9} parent=1 // pred_check_branch
      %1102 = sbr.rel (0) target = $region45
    $region44: #{dcdisc_forward.9} parent=1 // pred_region
      %1103 = dma.done [#allocation9], 16
    $region45: #{dcdisc_forward.9} parent=1 // pred_fallthru
      _
    %1104 = vsyncpa [#allocation3], 1
    %1105 = vsyncpa [#allocation6], 1
    %1106 = vsyncpa [#allocation4], 1
    %1107 = vsyncpa [#allocation9], 1

// kernel: dcdisc_forward.10
$region0: #{dcdisc_forward.10}
  #allocation0 [shape = 'u32[]', space=smem, size = 0x4, offset = 0x4, fixed_abs, tag = 'smem constant byte address 0x4 - core index']
  #allocation1 [shape = 'u32[144,128]{1,0:T(1,128)}', space=vmem, size = 0x12000, scoped, tag = 'internal scratch']
  %s0 = inlined_call_operand.hbm [shape: f32[512,16], index: 0, kind: input, shape index: {}]
  %s1 = inlined_call_operand.hbm [shape: f32[1,16], index: 1, kind: input, shape index: {}]
  %s2 = inlined_call_operand.hbm [shape: f32[1,16], index: 2, kind: input, shape index: {}]
  %s3 = inlined_call_operand.hbm [shape: f32[1,16], index: 3, kind: input, shape index: {}]
  %s4 = inlined_call_operand.hbm [shape: f32[1,16], index: 4, kind: input, shape index: {}]
  %s5 = inlined_call_operand.hbm [shape: bf16[512,16], index: 5, kind: output, shape index: {}]
  %s6 = sld [smem:[#allocation0]]
  $region50: #{dcdisc_forward.10} parent=0
    _
  %s8 = ssub.s32 1, %s6
  %s9 = scalar_select 0, %s8, %s6
  $region1: #{dcdisc_forward.10} parent=0
    #allocation2 [shape = 'u8[262144]{0}', space=vmem, size = 0x40000, scoped, tag = 'input window, operand 0, single buffered']
    #allocation3 [shape = 's32[1]{0}', space=sflag, size = 0x4, scoped, tag = 'scoped memory for dcdisc_forward.10']
    #allocation4 [shape = 's32[1]{0}', space=sflag, size = 0x4, scoped, tag = 'scoped memory for dcdisc_forward.10']
    #allocation5 [shape = 'u8[512]{0}', space=vmem, size = 0x400, scoped, tag = 'input window, operand 1, single buffered']
    #allocation6 [shape = 's32[1]{0}', space=sflag, size = 0x4, scoped, tag = 'scoped memory for dcdisc_forward.10']
    #allocation7 [shape = 'u8[512]{0}', space=vmem, size = 0x400, scoped, tag = 'input window, operand 2, single buffered']
    #allocation8 [shape = 'u8[512]{0}', space=vmem, size = 0x400, scoped, tag = 'input window, operand 3, single buffered']
    #allocation9 [shape = 's32[1]{0}', space=sflag, size = 0x4, scoped, tag = 'scoped memory for dcdisc_forward.10']
    #allocation10 [shape = 'u8[512]{0}', space=vmem, size = 0x400, scoped, tag = 'input window, operand 4, single buffered']
    #allocation11 [shape = 'u8[131072]{0}', space=vmem, size = 0x20000, scoped, tag = 'output window, operand 0, single buffered']
    %10 = vsyncpa [#allocation3], 0
    %11 = vsyncpa [#allocation6], 0
    %12 = vsyncpa [#allocation9], 0
    %13 = vsyncpa [#allocation4], 0
    // Predicated region
    $region2: #{dcdisc_forward.10} parent=1 // pred_check
      _
    $region3: #{dcdisc_forward.10} parent=1 // pred_check_branch
      %15 = sbr.rel (0) target = $region5
    $region4: #{dcdisc_forward.10} parent=1 // pred_region
      %s17 = ssub.s32 8192, 8192
      %18 = vsyncadd [#allocation3], %s17
      %s19 = sshll.u32 [#allocation2], 4
      %s20 = int_to_ptr.vmem [resolvable:$true] %s19
      %25 = dma.hbm_to_vmem [thread:$0]  %s0, 8192, %s20, [#allocation3], 128, 128, 8
    $region5: #{dcdisc_forward.10} parent=1 // pred_fallthru
      _
    // Predicated region
    $region6: #{dcdisc_forward.10} parent=1 // pred_check
      _
    $region7: #{dcdisc_forward.10} parent=1 // pred_check_branch
      %27 = sbr.rel (0) target = $region9
    $region8: #{dcdisc_forward.10} parent=1 // pred_region
      %s29 = ssub.s32 16, 16
      %30 = vsyncadd [#allocation6], %s29
      %s32 = sshll.u32 [#allocation5], 4
      %s33 = int_to_ptr.vmem [resolvable:$true] %s32
      %35 = dma.hbm_to_vmem [thread:$0]  %s1, 16, %s33, [#allocation6]
    $region9: #{dcdisc_forward.10} parent=1 // pred_fallthru
      _
    // Predicated region
    $region10: #{dcdisc_forward.10} parent=1 // pred_check
      _
    $region11: #{dcdisc_forward.10} parent=1 // pred_check_branch
      %37 = sbr.rel (0) target = $region13
    $region12: #{dcdisc_forward.10} parent=1 // pred_region
      %s39 = ssub.s32 16, 16
      %40 = vsyncadd [#allocation6], %s39
      %s42 = sshll.u32 [#allocation7], 4
      %s43 = int_to_ptr.vmem [resolvable:$true] %s42
      %45 = dma.hbm_to_vmem [thread:$0]  %s2, 16, %s43, [#allocation6]
    $region13: #{dcdisc_forward.10} parent=1 // pred_fallthru
      _
    // Predicated region
    $region14: #{dcdisc_forward.10} parent=1 // pred_check
      _
    $region15: #{dcdisc_forward.10} parent=1 // pred_check_branch
      %47 = sbr.rel (0) target = $region17
    $region16: #{dcdisc_forward.10} parent=1 // pred_region
      %s49 = ssub.s32 16, 16
      %50 = vsyncadd [#allocation9], %s49
      %s52 = sshll.u32 [#allocation8], 4
      %s53 = int_to_ptr.vmem [resolvable:$true] %s52
      %55 = dma.hbm_to_vmem [thread:$0]  %s3, 16, %s53, [#allocation9]
    $region17: #{dcdisc_forward.10} parent=1 // pred_fallthru
      _
    // Predicated region
    $region18: #{dcdisc_forward.10} parent=1 // pred_check
      _
    $region19: #{dcdisc_forward.10} parent=1 // pred_check_branch
      %57 = sbr.rel (0) target = $region21
    $region20: #{dcdisc_forward.10} parent=1 // pred_region
      %s59 = ssub.s32 16, 16
      %60 = vsyncadd [#allocation9], %s59
      %s62 = sshll.u32 [#allocation10], 4
      %s63 = int_to_ptr.vmem [resolvable:$true] %s62
      %65 = dma.hbm_to_vmem [thread:$0]  %s4, 16, %s63, [#allocation9]
    $region21: #{dcdisc_forward.10} parent=1 // pred_fallthru
      _
    // Predicated region
    $region22: #{dcdisc_forward.10} parent=1 // pred_check
      _
    $region23: #{dcdisc_forward.10} parent=1 // pred_check_branch
      %67 = sbr.rel (0) target = $region25
    $region24: #{dcdisc_forward.10} parent=1 // pred_region
      %68 = dma.done [#allocation3], 8192
    $region25: #{dcdisc_forward.10} parent=1 // pred_fallthru
      _
    // Predicated region
    $region26: #{dcdisc_forward.10} parent=1 // pred_check
      _
    $region27: #{dcdisc_forward.10} parent=1 // pred_check_branch
      %70 = sbr.rel (0) target = $region29
    $region28: #{dcdisc_forward.10} parent=1 // pred_region
      %71 = dma.done [#allocation6], 16
    $region29: #{dcdisc_forward.10} parent=1 // pred_fallthru
      _
    // Predicated region
    $region30: #{dcdisc_forward.10} parent=1 // pred_check
      _
    $region31: #{dcdisc_forward.10} parent=1 // pred_check_branch
      %73 = sbr.rel (0) target = $region33
    $region32: #{dcdisc_forward.10} parent=1 // pred_region
      %74 = dma.done [#allocation6], 16
    $region33: #{dcdisc_forward.10} parent=1 // pred_fallthru
      _
    // Predicated region
    $region34: #{dcdisc_forward.10} parent=1 // pred_check
      _
    $region35: #{dcdisc_forward.10} parent=1 // pred_check_branch
      %76 = sbr.rel (0) target = $region37
    $region36: #{dcdisc_forward.10} parent=1 // pred_region
      %77 = dma.done [#allocation9], 16
    $region37: #{dcdisc_forward.10} parent=1 // pred_fallthru
      _
    // Predicated region
    $region38: #{dcdisc_forward.10} parent=1 // pred_check
      _
    $region39: #{dcdisc_forward.10} parent=1 // pred_check_branch
      %79 = sbr.rel (0) target = $region41
    $region40: #{dcdisc_forward.10} parent=1 // pred_region
      %80 = dma.done [#allocation9], 16
    $region41: #{dcdisc_forward.10} parent=1 // pred_fallthru
      _
    %v81 = vld [vmem:[#allocation5] sm:$0x1]
    %v82 = vmul.f32 %v81, 0.001953125
    %v83 = vld [vmem:[#allocation7] sm:$0x1]
    %v84 = vmul.f32 %v83, 0.001953125
    %v85 = vmul.f32 %v82, %v82
    %v86 = vsub.f32 %v84, %v85
    %v87 = vmax.f32 %v86, 0.0
    %v88 = vld [vmem:[#allocation8] sm:$0x1]
    %v89 = vadd.f32 %v87, 1e-05
    %v90 = vrsqrt.pop %v89
    %v91 = vmul.f32 %v88, %v90
    %v92 = vld [vmem:[#allocation10] sm:$0x1]
    %v93 = vmul.f32 %v82, %v91
    %v94 = vsub.f32 %v92, %v93
    %v95 = vld [vmem:[#allocation2] sm:$0xff]
    %v96 = vld [vmem:[#allocation2 + $0x8] sm:$0xff]
    %v97 = vld [vmem:[#allocation2 + $0x10] sm:$0xff]
    %v98 = vld [vmem:[#allocation2 + $0x18] sm:$0xff]
    %v99 = vld [vmem:[#allocation2 + $0x20] sm:$0xff]
    %v100 = vld [vmem:[#allocation2 + $0x28] sm:$0xff]
    %v101 = vld [vmem:[#allocation2 + $0x30] sm:$0xff]
    %v102 = vld [vmem:[#allocation2 + $0x38] sm:$0xff]
    %v103 = vld [vmem:[#allocation2 + $0x40] sm:$0xff]
    %v104 = vld [vmem:[#allocation2 + $0x48] sm:$0xff]
    %v105 = vld [vmem:[#allocation2 + $0x50] sm:$0xff]
    %v106 = vld [vmem:[#allocation2 + $0x58] sm:$0xff]
    %v107 = vld [vmem:[#allocation2 + $0x60] sm:$0xff]
    %v108 = vld [vmem:[#allocation2 + $0x68] sm:$0xff]
    %v109 = vld [vmem:[#allocation2 + $0x70] sm:$0xff]
    %v110 = vld [vmem:[#allocation2 + $0x78] sm:$0xff]
    %v111 = vld [vmem:[#allocation2 + $0x80] sm:$0xff]
    %v112 = vld [vmem:[#allocation2 + $0x88] sm:$0xff]
    %v113 = vld [vmem:[#allocation2 + $0x90] sm:$0xff]
    %v114 = vld [vmem:[#allocation2 + $0x98] sm:$0xff]
    %v115 = vld [vmem:[#allocation2 + $0xa0] sm:$0xff]
    %v116 = vld [vmem:[#allocation2 + $0xa8] sm:$0xff]
    %v117 = vld [vmem:[#allocation2 + $0xb0] sm:$0xff]
    %v118 = vld [vmem:[#allocation2 + $0xb8] sm:$0xff]
    %v119 = vld [vmem:[#allocation2 + $0xc0] sm:$0xff]
    %v120 = vld [vmem:[#allocation2 + $0xc8] sm:$0xff]
    %v121 = vld [vmem:[#allocation2 + $0xd0] sm:$0xff]
    %v122 = vld [vmem:[#allocation2 + $0xd8] sm:$0xff]
    %v123 = vld [vmem:[#allocation2 + $0xe0] sm:$0xff]
    %v124 = vld [vmem:[#allocation2 + $0xe8] sm:$0xff]
    %v125 = vld [vmem:[#allocation2 + $0xf0] sm:$0xff]
    %v126 = vld [vmem:[#allocation2 + $0xf8] sm:$0xff]
    %v127 = vld [vmem:[#allocation2 + $0x100] sm:$0xff]
    %v128 = vld [vmem:[#allocation2 + $0x108] sm:$0xff]
    %v129 = vld [vmem:[#allocation2 + $0x110] sm:$0xff]
    %v130 = vld [vmem:[#allocation2 + $0x118] sm:$0xff]
    %v131 = vld [vmem:[#allocation2 + $0x120] sm:$0xff]
    %v132 = vld [vmem:[#allocation2 + $0x128] sm:$0xff]
    %v133 = vld [vmem:[#allocation2 + $0x130] sm:$0xff]
    %v134 = vld [vmem:[#allocation2 + $0x138] sm:$0xff]
    %v135 = vld [vmem:[#allocation2 + $0x140] sm:$0xff]
    %v136 = vld [vmem:[#allocation2 + $0x148] sm:$0xff]
    %v137 = vld [vmem:[#allocation2 + $0x150] sm:$0xff]
    %v138 = vld [vmem:[#allocation2 + $0x158] sm:$0xff]
    %v139 = vld [vmem:[#allocation2 + $0x160] sm:$0xff]
    %v140 = vld [vmem:[#allocation2 + $0x168] sm:$0xff]
    %v141 = vld [vmem:[#allocation2 + $0x170] sm:$0xff]
    %v142 = vld [vmem:[#allocation2 + $0x178] sm:$0xff]
    %v143 = vld [vmem:[#allocation2 + $0x180] sm:$0xff]
    %v144 = vld [vmem:[#allocation2 + $0x188] sm:$0xff]
    %v145 = vld [vmem:[#allocation2 + $0x190] sm:$0xff]
    %v146 = vld [vmem:[#allocation2 + $0x198] sm:$0xff]
    %v147 = vld [vmem:[#allocation2 + $0x1a0] sm:$0xff]
    %v148 = vld [vmem:[#allocation2 + $0x1a8] sm:$0xff]
    %v149 = vld [vmem:[#allocation2 + $0x1b0] sm:$0xff]
    %v150 = vld [vmem:[#allocation2 + $0x1b8] sm:$0xff]
    %v151 = vld [vmem:[#allocation2 + $0x1c0] sm:$0xff]
    %v152 = vld [vmem:[#allocation2 + $0x1c8] sm:$0xff]
    %v153 = vld [vmem:[#allocation2 + $0x1d0] sm:$0xff]
    %v154 = vld [vmem:[#allocation2 + $0x1d8] sm:$0xff]
    %v155 = vld [vmem:[#allocation2 + $0x1e0] sm:$0xff]
    %v156 = vld [vmem:[#allocation2 + $0x1e8] sm:$0xff]
    %v157 = vld [vmem:[#allocation2 + $0x1f0] sm:$0xff]
    %v158 = vld [vmem:[#allocation2 + $0x1f8] sm:$0xff]
    %v160 = vlaneseq
    %v161 = vshrl.u32 %v160, 7
    %v162 = vsub.s32 0, %v161
    %v163 = vrot.slane %v91, %v162
    %v165 = vmul.f32 %v95, %v163
    %v166 = vmul.f32 %v96, %v163
    %v167 = vmul.f32 %v97, %v163
    %v168 = vmul.f32 %v98, %v163
    %v169 = vmul.f32 %v99, %v163
    %v170 = vmul.f32 %v100, %v163
    %v171 = vmul.f32 %v101, %v163
    %v172 = vmul.f32 %v102, %v163
    %v173 = vmul.f32 %v103, %v163
    %v174 = vmul.f32 %v104, %v163
    %v175 = vmul.f32 %v105, %v163
    %v176 = vmul.f32 %v106, %v163
    %v177 = vmul.f32 %v107, %v163
    %v178 = vmul.f32 %v108, %v163
    %v179 = vmul.f32 %v109, %v163
    %v180 = vmul.f32 %v110, %v163
    %v181 = vmul.f32 %v111, %v163
    %v182 = vmul.f32 %v112, %v163
    %v183 = vmul.f32 %v113, %v163
    %v184 = vmul.f32 %v114, %v163
    %v185 = vmul.f32 %v115, %v163
    %v186 = vmul.f32 %v116, %v163
    %v187 = vmul.f32 %v117, %v163
    %v188 = vmul.f32 %v118, %v163
    %v189 = vmul.f32 %v119, %v163
    %v190 = vmul.f32 %v120, %v163
    %v191 = vmul.f32 %v121, %v163
    %v192 = vmul.f32 %v122, %v163
    %v193 = vmul.f32 %v123, %v163
    %v194 = vmul.f32 %v124, %v163
    %v195 = vmul.f32 %v125, %v163
    %v196 = vmul.f32 %v126, %v163
    %v197 = vmul.f32 %v127, %v163
    %v198 = vmul.f32 %v128, %v163
    %v199 = vmul.f32 %v129, %v163
    %v200 = vmul.f32 %v130, %v163
    %v201 = vmul.f32 %v131, %v163
    %v202 = vmul.f32 %v132, %v163
    %v203 = vmul.f32 %v133, %v163
    %v204 = vmul.f32 %v134, %v163
    %v205 = vmul.f32 %v135, %v163
    %v206 = vmul.f32 %v136, %v163
    %v207 = vmul.f32 %v137, %v163
    %v208 = vmul.f32 %v138, %v163
    %v209 = vmul.f32 %v139, %v163
    %v210 = vmul.f32 %v140, %v163
    %v211 = vmul.f32 %v141, %v163
    %v212 = vmul.f32 %v142, %v163
    %v213 = vmul.f32 %v143, %v163
    %v214 = vmul.f32 %v144, %v163
    %v215 = vmul.f32 %v145, %v163
    %v216 = vmul.f32 %v146, %v163
    %v217 = vmul.f32 %v147, %v163
    %v218 = vmul.f32 %v148, %v163
    %v219 = vmul.f32 %v149, %v163
    %v220 = vmul.f32 %v150, %v163
    %v221 = vmul.f32 %v151, %v163
    %v222 = vmul.f32 %v152, %v163
    %v223 = vmul.f32 %v153, %v163
    %v224 = vmul.f32 %v154, %v163
    %v225 = vmul.f32 %v155, %v163
    %v226 = vmul.f32 %v156, %v163
    %v227 = vmul.f32 %v157, %v163
    %v228 = vmul.f32 %v158, %v163
    %v230 = vlaneseq
    %v231 = vshrl.u32 %v230, 7
    %v232 = vsub.s32 0, %v231
    %v233 = vrot.slane %v94, %v232
    %v235 = vadd.f32 %v165, %v233
    %v236 = vadd.f32 %v166, %v233
    %v237 = vadd.f32 %v167, %v233
    %v238 = vadd.f32 %v168, %v233
    %v239 = vadd.f32 %v169, %v233
    %v240 = vadd.f32 %v170, %v233
    %v241 = vadd.f32 %v171, %v233
    %v242 = vadd.f32 %v172, %v233
    %v243 = vadd.f32 %v173, %v233
    %v244 = vadd.f32 %v174, %v233
    %v245 = vadd.f32 %v175, %v233
    %v246 = vadd.f32 %v176, %v233
    %v247 = vadd.f32 %v177, %v233
    %v248 = vadd.f32 %v178, %v233
    %v249 = vadd.f32 %v179, %v233
    %v250 = vadd.f32 %v180, %v233
    %v251 = vadd.f32 %v181, %v233
    %v252 = vadd.f32 %v182, %v233
    %v253 = vadd.f32 %v183, %v233
    %v254 = vadd.f32 %v184, %v233
    %v255 = vadd.f32 %v185, %v233
    %v256 = vadd.f32 %v186, %v233
    %v257 = vadd.f32 %v187, %v233
    %v258 = vadd.f32 %v188, %v233
    %v259 = vadd.f32 %v189, %v233
    %v260 = vadd.f32 %v190, %v233
    %v261 = vadd.f32 %v191, %v233
    %v262 = vadd.f32 %v192, %v233
    %v263 = vadd.f32 %v193, %v233
    %v264 = vadd.f32 %v194, %v233
    %v265 = vadd.f32 %v195, %v233
    %v266 = vadd.f32 %v196, %v233
    %v267 = vadd.f32 %v197, %v233
    %v268 = vadd.f32 %v198, %v233
    %v269 = vadd.f32 %v199, %v233
    %v270 = vadd.f32 %v200, %v233
    %v271 = vadd.f32 %v201, %v233
    %v272 = vadd.f32 %v202, %v233
    %v273 = vadd.f32 %v203, %v233
    %v274 = vadd.f32 %v204, %v233
    %v275 = vadd.f32 %v205, %v233
    %v276 = vadd.f32 %v206, %v233
    %v277 = vadd.f32 %v207, %v233
    %v278 = vadd.f32 %v208, %v233
    %v279 = vadd.f32 %v209, %v233
    %v280 = vadd.f32 %v210, %v233
    %v281 = vadd.f32 %v211, %v233
    %v282 = vadd.f32 %v212, %v233
    %v283 = vadd.f32 %v213, %v233
    %v284 = vadd.f32 %v214, %v233
    %v285 = vadd.f32 %v215, %v233
    %v286 = vadd.f32 %v216, %v233
    %v287 = vadd.f32 %v217, %v233
    %v288 = vadd.f32 %v218, %v233
    %v289 = vadd.f32 %v219, %v233
    %v290 = vadd.f32 %v220, %v233
    %v291 = vadd.f32 %v221, %v233
    %v292 = vadd.f32 %v222, %v233
    %v293 = vadd.f32 %v223, %v233
    %v294 = vadd.f32 %v224, %v233
    %v295 = vadd.f32 %v225, %v233
    %v296 = vadd.f32 %v226, %v233
    %v297 = vadd.f32 %v227, %v233
    %v298 = vadd.f32 %v228, %v233
    %vm299 = vcmp.ge.f32.partialorder %v235, 0.0
    %vm300 = vcmp.ge.f32.partialorder %v236, 0.0
    %vm301 = vcmp.ge.f32.partialorder %v237, 0.0
    %vm302 = vcmp.ge.f32.partialorder %v238, 0.0
    %vm303 = vcmp.ge.f32.partialorder %v239, 0.0
    %vm304 = vcmp.ge.f32.partialorder %v240, 0.0
    %vm305 = vcmp.ge.f32.partialorder %v241, 0.0
    %vm306 = vcmp.ge.f32.partialorder %v242, 0.0
    %vm307 = vcmp.ge.f32.partialorder %v243, 0.0
    %vm308 = vcmp.ge.f32.partialorder %v244, 0.0
    %vm309 = vcmp.ge.f32.partialorder %v245, 0.0
    %vm310 = vcmp.ge.f32.partialorder %v246, 0.0
    %vm311 = vcmp.ge.f32.partialorder %v247, 0.0
    %vm312 = vcmp.ge.f32.partialorder %v248, 0.0
    %vm313 = vcmp.ge.f32.partialorder %v249, 0.0
    %vm314 = vcmp.ge.f32.partialorder %v250, 0.0
    %vm315 = vcmp.ge.f32.partialorder %v251, 0.0
    %vm316 = vcmp.ge.f32.partialorder %v252, 0.0
    %vm317 = vcmp.ge.f32.partialorder %v253, 0.0
    %vm318 = vcmp.ge.f32.partialorder %v254, 0.0
    %vm319 = vcmp.ge.f32.partialorder %v255, 0.0
    %vm320 = vcmp.ge.f32.partialorder %v256, 0.0
    %vm321 = vcmp.ge.f32.partialorder %v257, 0.0
    %vm322 = vcmp.ge.f32.partialorder %v258, 0.0
    %vm323 = vcmp.ge.f32.partialorder %v259, 0.0
    %vm324 = vcmp.ge.f32.partialorder %v260, 0.0
    %vm325 = vcmp.ge.f32.partialorder %v261, 0.0
    %vm326 = vcmp.ge.f32.partialorder %v262, 0.0
    %vm327 = vcmp.ge.f32.partialorder %v263, 0.0
    %vm328 = vcmp.ge.f32.partialorder %v264, 0.0
    %vm329 = vcmp.ge.f32.partialorder %v265, 0.0
    %vm330 = vcmp.ge.f32.partialorder %v266, 0.0
    %vm331 = vcmp.ge.f32.partialorder %v267, 0.0
    %vm332 = vcmp.ge.f32.partialorder %v268, 0.0
    %vm333 = vcmp.ge.f32.partialorder %v269, 0.0
    %vm334 = vcmp.ge.f32.partialorder %v270, 0.0
    %vm335 = vcmp.ge.f32.partialorder %v271, 0.0
    %vm336 = vcmp.ge.f32.partialorder %v272, 0.0
    %vm337 = vcmp.ge.f32.partialorder %v273, 0.0
    %vm338 = vcmp.ge.f32.partialorder %v274, 0.0
    %vm339 = vcmp.ge.f32.partialorder %v275, 0.0
    %vm340 = vcmp.ge.f32.partialorder %v276, 0.0
    %vm341 = vcmp.ge.f32.partialorder %v277, 0.0
    %vm342 = vcmp.ge.f32.partialorder %v278, 0.0
    %vm343 = vcmp.ge.f32.partialorder %v279, 0.0
    %vm344 = vcmp.ge.f32.partialorder %v280, 0.0
    %vm345 = vcmp.ge.f32.partialorder %v281, 0.0
    %vm346 = vcmp.ge.f32.partialorder %v282, 0.0
    %vm347 = vcmp.ge.f32.partialorder %v283, 0.0
    %vm348 = vcmp.ge.f32.partialorder %v284, 0.0
    %vm349 = vcmp.ge.f32.partialorder %v285, 0.0
    %vm350 = vcmp.ge.f32.partialorder %v286, 0.0
    %vm351 = vcmp.ge.f32.partialorder %v287, 0.0
    %vm352 = vcmp.ge.f32.partialorder %v288, 0.0
    %vm353 = vcmp.ge.f32.partialorder %v289, 0.0
    %vm354 = vcmp.ge.f32.partialorder %v290, 0.0
    %vm355 = vcmp.ge.f32.partialorder %v291, 0.0
    %vm356 = vcmp.ge.f32.partialorder %v292, 0.0
    %vm357 = vcmp.ge.f32.partialorder %v293, 0.0
    %vm358 = vcmp.ge.f32.partialorder %v294, 0.0
    %vm359 = vcmp.ge.f32.partialorder %v295, 0.0
    %vm360 = vcmp.ge.f32.partialorder %v296, 0.0
    %vm361 = vcmp.ge.f32.partialorder %v297, 0.0
    %vm362 = vcmp.ge.f32.partialorder %v298, 0.0
    %v363 = vmul.f32 %v235, 0.2
    %v364 = vmul.f32 %v236, 0.2
    %v365 = vmul.f32 %v237, 0.2
    %v366 = vmul.f32 %v238, 0.2
    %v367 = vmul.f32 %v239, 0.2
    %v368 = vmul.f32 %v240, 0.2
    %v369 = vmul.f32 %v241, 0.2
    %v370 = vmul.f32 %v242, 0.2
    %v371 = vmul.f32 %v243, 0.2
    %v372 = vmul.f32 %v244, 0.2
    %v373 = vmul.f32 %v245, 0.2
    %v374 = vmul.f32 %v246, 0.2
    %v375 = vmul.f32 %v247, 0.2
    %v376 = vmul.f32 %v248, 0.2
    %v377 = vmul.f32 %v249, 0.2
    %v378 = vmul.f32 %v250, 0.2
    %v379 = vmul.f32 %v251, 0.2
    %v380 = vmul.f32 %v252, 0.2
    %v381 = vmul.f32 %v253, 0.2
    %v382 = vmul.f32 %v254, 0.2
    %v383 = vmul.f32 %v255, 0.2
    %v384 = vmul.f32 %v256, 0.2
    %v385 = vmul.f32 %v257, 0.2
    %v386 = vmul.f32 %v258, 0.2
    %v387 = vmul.f32 %v259, 0.2
    %v388 = vmul.f32 %v260, 0.2
    %v389 = vmul.f32 %v261, 0.2
    %v390 = vmul.f32 %v262, 0.2
    %v391 = vmul.f32 %v263, 0.2
    %v392 = vmul.f32 %v264, 0.2
    %v393 = vmul.f32 %v265, 0.2
    %v394 = vmul.f32 %v266, 0.2
    %v395 = vmul.f32 %v267, 0.2
    %v396 = vmul.f32 %v268, 0.2
    %v397 = vmul.f32 %v269, 0.2
    %v398 = vmul.f32 %v270, 0.2
    %v399 = vmul.f32 %v271, 0.2
    %v400 = vmul.f32 %v272, 0.2
    %v401 = vmul.f32 %v273, 0.2
    %v402 = vmul.f32 %v274, 0.2
    %v403 = vmul.f32 %v275, 0.2
    %v404 = vmul.f32 %v276, 0.2
    %v405 = vmul.f32 %v277, 0.2
    %v406 = vmul.f32 %v278, 0.2
    %v407 = vmul.f32 %v279, 0.2
    %v408 = vmul.f32 %v280, 0.2
    %v409 = vmul.f32 %v281, 0.2
    %v410 = vmul.f32 %v282, 0.2
    %v411 = vmul.f32 %v283, 0.2
    %v412 = vmul.f32 %v284, 0.2
    %v413 = vmul.f32 %v285, 0.2
    %v414 = vmul.f32 %v286, 0.2
    %v415 = vmul.f32 %v287, 0.2
    %v416 = vmul.f32 %v288, 0.2
    %v417 = vmul.f32 %v289, 0.2
    %v418 = vmul.f32 %v290, 0.2
    %v419 = vmul.f32 %v291, 0.2
    %v420 = vmul.f32 %v292, 0.2
    %v421 = vmul.f32 %v293, 0.2
    %v422 = vmul.f32 %v294, 0.2
    %v423 = vmul.f32 %v295, 0.2
    %v424 = vmul.f32 %v296, 0.2
    %v425 = vmul.f32 %v297, 0.2
    %v426 = vmul.f32 %v298, 0.2
    %v427 = vsel %vm299, %v235, %v363
    %v428 = vsel %vm300, %v236, %v364
    %v429 = vsel %vm301, %v237, %v365
    %v430 = vsel %vm302, %v238, %v366
    %v431 = vsel %vm303, %v239, %v367
    %v432 = vsel %vm304, %v240, %v368
    %v433 = vsel %vm305, %v241, %v369
    %v434 = vsel %vm306, %v242, %v370
    %v435 = vsel %vm307, %v243, %v371
    %v436 = vsel %vm308, %v244, %v372
    %v437 = vsel %vm309, %v245, %v373
    %v438 = vsel %vm310, %v246, %v374
    %v439 = vsel %vm311, %v247, %v375
    %v440 = vsel %vm312, %v248, %v376
    %v441 = vsel %vm313, %v249, %v377
    %v442 = vsel %vm314, %v250, %v378
    %v443 = vsel %vm315, %v251, %v379
    %v444 = vsel %vm316, %v252, %v380
    %v445 = vsel %vm317, %v253, %v381
    %v446 = vsel %vm318, %v254, %v382
    %v447 = vsel %vm319, %v255, %v383
    %v448 = vsel %vm320, %v256, %v384
    %v449 = vsel %vm321, %v257, %v385
    %v450 = vsel %vm322, %v258, %v386
    %v451 = vsel %vm323, %v259, %v387
    %v452 = vsel %vm324, %v260, %v388
    %v453 = vsel %vm325, %v261, %v389
    %v454 = vsel %vm326, %v262, %v390
    %v455 = vsel %vm327, %v263, %v391
    %v456 = vsel %vm328, %v264, %v392
    %v457 = vsel %vm329, %v265, %v393
    %v458 = vsel %vm330, %v266, %v394
    %v459 = vsel %vm331, %v267, %v395
    %v460 = vsel %vm332, %v268, %v396
    %v461 = vsel %vm333, %v269, %v397
    %v462 = vsel %vm334, %v270, %v398
    %v463 = vsel %vm335, %v271, %v399
    %v464 = vsel %vm336, %v272, %v400
    %v465 = vsel %vm337, %v273, %v401
    %v466 = vsel %vm338, %v274, %v402
    %v467 = vsel %vm339, %v275, %v403
    %v468 = vsel %vm340, %v276, %v404
    %v469 = vsel %vm341, %v277, %v405
    %v470 = vsel %vm342, %v278, %v406
    %v471 = vsel %vm343, %v279, %v407
    %v472 = vsel %vm344, %v280, %v408
    %v473 = vsel %vm345, %v281, %v409
    %v474 = vsel %vm346, %v282, %v410
    %v475 = vsel %vm347, %v283, %v411
    %v476 = vsel %vm348, %v284, %v412
    %v477 = vsel %vm349, %v285, %v413
    %v478 = vsel %vm350, %v286, %v414
    %v479 = vsel %vm351, %v287, %v415
    %v480 = vsel %vm352, %v288, %v416
    %v481 = vsel %vm353, %v289, %v417
    %v482 = vsel %vm354, %v290, %v418
    %v483 = vsel %vm355, %v291, %v419
    %v484 = vsel %vm356, %v292, %v420
    %v485 = vsel %vm357, %v293, %v421
    %v486 = vsel %vm358, %v294, %v422
    %v487 = vsel %vm359, %v295, %v423
    %v488 = vsel %vm360, %v296, %v424
    %v489 = vsel %vm361, %v297, %v425
    %v490 = vsel %vm362, %v298, %v426
    %v491 = vpack.c.bf16 %v428, %v427
    %v492 = vpack.c.bf16 %v430, %v429
    %v493 = vpack.c.bf16 %v432, %v431
    %v494 = vpack.c.bf16 %v434, %v433
    %v495 = vpack.c.bf16 %v436, %v435
    %v496 = vpack.c.bf16 %v438, %v437
    %v497 = vpack.c.bf16 %v440, %v439
    %v498 = vpack.c.bf16 %v442, %v441
    %v499 = vpack.c.bf16 %v444, %v443
    %v500 = vpack.c.bf16 %v446, %v445
    %v501 = vpack.c.bf16 %v448, %v447
    %v502 = vpack.c.bf16 %v450, %v449
    %v503 = vpack.c.bf16 %v452, %v451
    %v504 = vpack.c.bf16 %v454, %v453
    %v505 = vpack.c.bf16 %v456, %v455
    %v506 = vpack.c.bf16 %v458, %v457
    %v507 = vpack.c.bf16 %v460, %v459
    %v508 = vpack.c.bf16 %v462, %v461
    %v509 = vpack.c.bf16 %v464, %v463
    %v510 = vpack.c.bf16 %v466, %v465
    %v511 = vpack.c.bf16 %v468, %v467
    %v512 = vpack.c.bf16 %v470, %v469
    %v513 = vpack.c.bf16 %v472, %v471
    %v514 = vpack.c.bf16 %v474, %v473
    %v515 = vpack.c.bf16 %v476, %v475
    %v516 = vpack.c.bf16 %v478, %v477
    %v517 = vpack.c.bf16 %v480, %v479
    %v518 = vpack.c.bf16 %v482, %v481
    %v519 = vpack.c.bf16 %v484, %v483
    %v520 = vpack.c.bf16 %v486, %v485
    %v521 = vpack.c.bf16 %v488, %v487
    %v522 = vpack.c.bf16 %v490, %v489
    %v555 = vunpack.c.l.b16 %v491
    %v556 = vunpack.c.h.b16 %v491
    %v557 = vunpack.c.l.b16 %v492
    %v558 = vunpack.c.h.b16 %v492
    %v559 = vunpack.c.l.b16 %v493
    %v560 = vunpack.c.h.b16 %v493
    %v561 = vunpack.c.l.b16 %v494
    %v562 = vunpack.c.h.b16 %v494
    %v563 = vunpack.c.l.b16 %v495
    %v564 = vunpack.c.h.b16 %v495
    %v565 = vunpack.c.l.b16 %v496
    %v566 = vunpack.c.h.b16 %v496
    %v567 = vunpack.c.l.b16 %v497
    %v568 = vunpack.c.h.b16 %v497
    %v569 = vunpack.c.l.b16 %v498
    %v570 = vunpack.c.h.b16 %v498
    %v571 = vunpack.c.l.b16 %v499
    %v572 = vunpack.c.h.b16 %v499
    %v573 = vunpack.c.l.b16 %v500
    %v574 = vunpack.c.h.b16 %v500
    %v575 = vunpack.c.l.b16 %v501
    %v576 = vunpack.c.h.b16 %v501
    %v577 = vunpack.c.l.b16 %v502
    %v578 = vunpack.c.h.b16 %v502
    %v579 = vunpack.c.l.b16 %v503
    %v580 = vunpack.c.h.b16 %v503
    %v581 = vunpack.c.l.b16 %v504
    %v582 = vunpack.c.h.b16 %v504
    %v583 = vunpack.c.l.b16 %v505
    %v584 = vunpack.c.h.b16 %v505
    %v585 = vunpack.c.l.b16 %v506
    %v586 = vunpack.c.h.b16 %v506
    %v587 = vunpack.c.l.b16 %v507
    %v588 = vunpack.c.h.b16 %v507
    %v589 = vunpack.c.l.b16 %v508
    %v590 = vunpack.c.h.b16 %v508
    %v591 = vunpack.c.l.b16 %v509
    %v592 = vunpack.c.h.b16 %v509
    %v593 = vunpack.c.l.b16 %v510
    %v594 = vunpack.c.h.b16 %v510
    %v595 = vunpack.c.l.b16 %v511
    %v596 = vunpack.c.h.b16 %v511
    %v597 = vunpack.c.l.b16 %v512
    %v598 = vunpack.c.h.b16 %v512
    %v599 = vunpack.c.l.b16 %v513
    %v600 = vunpack.c.h.b16 %v513
    %v601 = vunpack.c.l.b16 %v514
    %v602 = vunpack.c.h.b16 %v514
    %v603 = vunpack.c.l.b16 %v515
    %v604 = vunpack.c.h.b16 %v515
    %v605 = vunpack.c.l.b16 %v516
    %v606 = vunpack.c.h.b16 %v516
    %v607 = vunpack.c.l.b16 %v517
    %v608 = vunpack.c.h.b16 %v517
    %v609 = vunpack.c.l.b16 %v518
    %v610 = vunpack.c.h.b16 %v518
    %v611 = vunpack.c.l.b16 %v519
    %v612 = vunpack.c.h.b16 %v519
    %v613 = vunpack.c.l.b16 %v520
    %v614 = vunpack.c.h.b16 %v520
    %v615 = vunpack.c.l.b16 %v521
    %v616 = vunpack.c.h.b16 %v521
    %v617 = vunpack.c.l.b16 %v522
    %v618 = vunpack.c.h.b16 %v522
    %v619 = vpack.c.b16 %v555, %v555
    %v620 = vpack.c.b16 %v556, %v556
    %v621 = vpack.c.b16 %v557, %v557
    %v622 = vpack.c.b16 %v558, %v558
    %v623 = vpack.c.b16 %v559, %v559
    %v624 = vpack.c.b16 %v560, %v560
    %v625 = vpack.c.b16 %v561, %v561
    %v626 = vpack.c.b16 %v562, %v562
    %v627 = vpack.c.b16 %v563, %v563
    %v628 = vpack.c.b16 %v564, %v564
    %v629 = vpack.c.b16 %v565, %v565
    %v630 = vpack.c.b16 %v566, %v566
    %v631 = vpack.c.b16 %v567, %v567
    %v632 = vpack.c.b16 %v568, %v568
    %v633 = vpack.c.b16 %v569, %v569
    %v634 = vpack.c.b16 %v570, %v570
    %v635 = vpack.c.b16 %v571, %v571
    %v636 = vpack.c.b16 %v572, %v572
    %v637 = vpack.c.b16 %v573, %v573
    %v638 = vpack.c.b16 %v574, %v574
    %v639 = vpack.c.b16 %v575, %v575
    %v640 = vpack.c.b16 %v576, %v576
    %v641 = vpack.c.b16 %v577, %v577
    %v642 = vpack.c.b16 %v578, %v578
    %v643 = vpack.c.b16 %v579, %v579
    %v644 = vpack.c.b16 %v580, %v580
    %v645 = vpack.c.b16 %v581, %v581
    %v646 = vpack.c.b16 %v582, %v582
    %v647 = vpack.c.b16 %v583, %v583
    %v648 = vpack.c.b16 %v584, %v584
    %v649 = vpack.c.b16 %v585, %v585
    %v650 = vpack.c.b16 %v586, %v586
    %v651 = vpack.c.b16 %v587, %v587
    %v652 = vpack.c.b16 %v588, %v588
    %v653 = vpack.c.b16 %v589, %v589
    %v654 = vpack.c.b16 %v590, %v590
    %v655 = vpack.c.b16 %v591, %v591
    %v656 = vpack.c.b16 %v592, %v592
    %v657 = vpack.c.b16 %v593, %v593
    %v658 = vpack.c.b16 %v594, %v594
    %v659 = vpack.c.b16 %v595, %v595
    %v660 = vpack.c.b16 %v596, %v596
    %v661 = vpack.c.b16 %v597, %v597
    %v662 = vpack.c.b16 %v598, %v598
    %v663 = vpack.c.b16 %v599, %v599
    %v664 = vpack.c.b16 %v600, %v600
    %v665 = vpack.c.b16 %v601, %v601
    %v666 = vpack.c.b16 %v602, %v602
    %v667 = vpack.c.b16 %v603, %v603
    %v668 = vpack.c.b16 %v604, %v604
    %v669 = vpack.c.b16 %v605, %v605
    %v670 = vpack.c.b16 %v606, %v606
    %v671 = vpack.c.b16 %v607, %v607
    %v672 = vpack.c.b16 %v608, %v608
    %v673 = vpack.c.b16 %v609, %v609
    %v674 = vpack.c.b16 %v610, %v610
    %v675 = vpack.c.b16 %v611, %v611
    %v676 = vpack.c.b16 %v612, %v612
    %v677 = vpack.c.b16 %v613, %v613
    %v678 = vpack.c.b16 %v614, %v614
    %v679 = vpack.c.b16 %v615, %v615
    %v680 = vpack.c.b16 %v616, %v616
    %v681 = vpack.c.b16 %v617, %v617
    %v682 = vpack.c.b16 %v618, %v618
    %vm747 = vcmask 125952
    %748 = vst.msk [vmem:[#allocation11] sm:$0xf] %vm747, %v619
    %749 = vst.msk [vmem:[#allocation11 + $0x4] sm:$0xf] %vm747, %v620
    %750 = vst.msk [vmem:[#allocation11 + $0x8] sm:$0xf] %vm747, %v621
    %751 = vst.msk [vmem:[#allocation11 + $0xc] sm:$0xf] %vm747, %v622
    %752 = vst.msk [vmem:[#allocation11 + $0x10] sm:$0xf] %vm747, %v623
    %753 = vst.msk [vmem:[#allocation11 + $0x14] sm:$0xf] %vm747, %v624
    %754 = vst.msk [vmem:[#allocation11 + $0x18] sm:$0xf] %vm747, %v625
    %755 = vst.msk [vmem:[#allocation11 + $0x1c] sm:$0xf] %vm747, %v626
    %756 = vst.msk [vmem:[#allocation11 + $0x20] sm:$0xf] %vm747, %v627
    %757 = vst.msk [vmem:[#allocation11 + $0x24] sm:$0xf] %vm747, %v628
    %758 = vst.msk [vmem:[#allocation11 + $0x28] sm:$0xf] %vm747, %v629
    %759 = vst.msk [vmem:[#allocation11 + $0x2c] sm:$0xf] %vm747, %v630
    %760 = vst.msk [vmem:[#allocation11 + $0x30] sm:$0xf] %vm747, %v631
    %761 = vst.msk [vmem:[#allocation11 + $0x34] sm:$0xf] %vm747, %v632
    %762 = vst.msk [vmem:[#allocation11 + $0x38] sm:$0xf] %vm747, %v633
    %763 = vst.msk [vmem:[#allocation11 + $0x3c] sm:$0xf] %vm747, %v634
    %764 = vst.msk [vmem:[#allocation11 + $0x40] sm:$0xf] %vm747, %v635
    %765 = vst.msk [vmem:[#allocation11 + $0x44] sm:$0xf] %vm747, %v636
    %766 = vst.msk [vmem:[#allocation11 + $0x48] sm:$0xf] %vm747, %v637
    %767 = vst.msk [vmem:[#allocation11 + $0x4c] sm:$0xf] %vm747, %v638
    %768 = vst.msk [vmem:[#allocation11 + $0x50] sm:$0xf] %vm747, %v639
    %769 = vst.msk [vmem:[#allocation11 + $0x54] sm:$0xf] %vm747, %v640
    %770 = vst.msk [vmem:[#allocation11 + $0x58] sm:$0xf] %vm747, %v641
    %771 = vst.msk [vmem:[#allocation11 + $0x5c] sm:$0xf] %vm747, %v642
    %772 = vst.msk [vmem:[#allocation11 + $0x60] sm:$0xf] %vm747, %v643
    %773 = vst.msk [vmem:[#allocation11 + $0x64] sm:$0xf] %vm747, %v644
    %774 = vst.msk [vmem:[#allocation11 + $0x68] sm:$0xf] %vm747, %v645
    %775 = vst.msk [vmem:[#allocation11 + $0x6c] sm:$0xf] %vm747, %v646
    %776 = vst.msk [vmem:[#allocation11 + $0x70] sm:$0xf] %vm747, %v647
    %777 = vst.msk [vmem:[#allocation11 + $0x74] sm:$0xf] %vm747, %v648
    %778 = vst.msk [vmem:[#allocation11 + $0x78] sm:$0xf] %vm747, %v649
    %779 = vst.msk [vmem:[#allocation11 + $0x7c] sm:$0xf] %vm747, %v650
    %780 = vst.msk [vmem:[#allocation11 + $0x80] sm:$0xf] %vm747, %v651
    %781 = vst.msk [vmem:[#allocation11 + $0x84] sm:$0xf] %vm747, %v652
    %782 = vst.msk [vmem:[#allocation11 + $0x88] sm:$0xf] %vm747, %v653
    %783 = vst.msk [vmem:[#allocation11 + $0x8c] sm:$0xf] %vm747, %v654
    %784 = vst.msk [vmem:[#allocation11 + $0x90] sm:$0xf] %vm747, %v655
    %785 = vst.msk [vmem:[#allocation11 + $0x94] sm:$0xf] %vm747, %v656
    %786 = vst.msk [vmem:[#allocation11 + $0x98] sm:$0xf] %vm747, %v657
    %787 = vst.msk [vmem:[#allocation11 + $0x9c] sm:$0xf] %vm747, %v658
    %788 = vst.msk [vmem:[#allocation11 + $0xa0] sm:$0xf] %vm747, %v659
    %789 = vst.msk [vmem:[#allocation11 + $0xa4] sm:$0xf] %vm747, %v660
    %790 = vst.msk [vmem:[#allocation11 + $0xa8] sm:$0xf] %vm747, %v661
    %791 = vst.msk [vmem:[#allocation11 + $0xac] sm:$0xf] %vm747, %v662
    %792 = vst.msk [vmem:[#allocation11 + $0xb0] sm:$0xf] %vm747, %v663
    %793 = vst.msk [vmem:[#allocation11 + $0xb4] sm:$0xf] %vm747, %v664
    %794 = vst.msk [vmem:[#allocation11 + $0xb8] sm:$0xf] %vm747, %v665
    %795 = vst.msk [vmem:[#allocation11 + $0xbc] sm:$0xf] %vm747, %v666
    %796 = vst.msk [vmem:[#allocation11 + $0xc0] sm:$0xf] %vm747, %v667
    %797 = vst.msk [vmem:[#allocation11 + $0xc4] sm:$0xf] %vm747, %v668
    %798 = vst.msk [vmem:[#allocation11 + $0xc8] sm:$0xf] %vm747, %v669
    %799 = vst.msk [vmem:[#allocation11 + $0xcc] sm:$0xf] %vm747, %v670
    %800 = vst.msk [vmem:[#allocation11 + $0xd0] sm:$0xf] %vm747, %v671
    %801 = vst.msk [vmem:[#allocation11 + $0xd4] sm:$0xf] %vm747, %v672
    %802 = vst.msk [vmem:[#allocation11 + $0xd8] sm:$0xf] %vm747, %v673
    %803 = vst.msk [vmem:[#allocation11 + $0xdc] sm:$0xf] %vm747, %v674
    %804 = vst.msk [vmem:[#allocation11 + $0xe0] sm:$0xf] %vm747, %v675
    %805 = vst.msk [vmem:[#allocation11 + $0xe4] sm:$0xf] %vm747, %v676
    %806 = vst.msk [vmem:[#allocation11 + $0xe8] sm:$0xf] %vm747, %v677
    %807 = vst.msk [vmem:[#allocation11 + $0xec] sm:$0xf] %vm747, %v678
    %808 = vst.msk [vmem:[#allocation11 + $0xf0] sm:$0xf] %vm747, %v679
    %809 = vst.msk [vmem:[#allocation11 + $0xf4] sm:$0xf] %vm747, %v680
    %810 = vst.msk [vmem:[#allocation11 + $0xf8] sm:$0xf] %vm747, %v681
    %811 = vst.msk [vmem:[#allocation11 + $0xfc] sm:$0xf] %vm747, %v682
    // Predicated region
    $region42: #{dcdisc_forward.10} parent=1 // pred_check
      _
    $region43: #{dcdisc_forward.10} parent=1 // pred_check_branch
      %813 = sbr.rel (0) target = $region45
    $region44: #{dcdisc_forward.10} parent=1 // pred_region
      %s815 = ssub.s32 4096, 4096
      %816 = vsyncadd [#allocation4], %s815
      %s817 = sshll.u32 [#allocation11], 4
      %s818 = int_to_ptr.vmem [resolvable:$true] %s817
      %823 = dma.vmem_to_hbm [thread:$0]  %s818, 4096, %s5, [#allocation4], 64, 64, 4
    $region45: #{dcdisc_forward.10} parent=1 // pred_fallthru
      _
    // Predicated region
    $region46: #{dcdisc_forward.10} parent=1 // pred_check
      _
    $region47: #{dcdisc_forward.10} parent=1 // pred_check_branch
      %825 = sbr.rel (0) target = $region49
    $region48: #{dcdisc_forward.10} parent=1 // pred_region
      %826 = dma.done [#allocation4], 4096
    $region49: #{dcdisc_forward.10} parent=1 // pred_fallthru
      _
    %827 = vsyncpa [#allocation3], 1
    %828 = vsyncpa [#allocation6], 1
    %829 = vsyncpa [#allocation9], 1
    %830 = vsyncpa [#allocation4], 1

// kernel: dcdisc_forward.11
$region0: #{dcdisc_forward.11}
  #allocation0 [shape = 'u32[]', space=smem, size = 0x4, offset = 0x4, fixed_abs, tag = 'smem constant byte address 0x4 - core index']
  #allocation1 [shape = 'u32[144,128]{1,0:T(1,128)}', space=vmem, size = 0x12000, scoped, tag = 'internal scratch']
  %s0 = inlined_call_operand.hbm [shape: bf16[128,256], index: 0, kind: input, shape index: {}]
  %s1 = inlined_call_operand.hbm [shape: bf16[256,32], index: 1, kind: input, shape index: {}]
  %s2 = inlined_call_operand.hbm [shape: f32[128,32], index: 2, kind: output, shape index: {0}]
  %s3 = inlined_call_operand.hbm [shape: f32[1,32], index: 3, kind: output, shape index: {1}]
  %s4 = inlined_call_operand.hbm [shape: f32[1,32], index: 4, kind: output, shape index: {2}]
  %5 = xla_tuple %s2, %s3, %s4
  %s6 = sld [smem:[#allocation0]]
  $region46: #{dcdisc_forward.11} parent=0
    _
  %s8 = ssub.s32 1, %s6
  %s9 = scalar_select 0, %s8, %s6
  $region1: #{dcdisc_forward.11} parent=0
    #allocation2 [shape = 'u8[65536]{0}', space=vmem, size = 0x10000, scoped, tag = 'input window, operand 0, single buffered']
    #allocation3 [shape = 's32[1]{0}', space=sflag, size = 0x4, scoped, tag = 'scoped memory for dcdisc_forward.11']
    #allocation4 [shape = 's32[1]{0}', space=sflag, size = 0x4, scoped, tag = 'scoped memory for dcdisc_forward.11']
    #allocation5 [shape = 'u8[65536]{0}', space=vmem, size = 0x10000, scoped, tag = 'input window, operand 1, single buffered']
    #allocation6 [shape = 's32[1]{0}', space=sflag, size = 0x4, scoped, tag = 'scoped memory for dcdisc_forward.11']
    #allocation7 [shape = 'u8[65536]{0}', space=vmem, size = 0x10000, scoped, tag = 'output window, operand 0, single buffered']
    #allocation8 [shape = 'u8[512]{0}', space=vmem, size = 0x400, scoped, tag = 'output window, operand 1, single buffered']
    #allocation9 [shape = 's32[1]{0}', space=sflag, size = 0x4, scoped, tag = 'scoped memory for dcdisc_forward.11']
    #allocation10 [shape = 'u8[512]{0}', space=vmem, size = 0x400, scoped, tag = 'output window, operand 2, single buffered']
    %10 = vsyncpa [#allocation3], 0
    %11 = vsyncpa [#allocation6], 0
    %12 = vsyncpa [#allocation4], 0
    %13 = vsyncpa [#allocation9], 0
    // Predicated region
    $region2: #{dcdisc_forward.11} parent=1 // pred_check
      _
    $region3: #{dcdisc_forward.11} parent=1 // pred_check_branch
      %15 = sbr.rel (0) target = $region5
    $region4: #{dcdisc_forward.11} parent=1 // pred_region
      %s17 = ssub.s32 2048, 2048
      %18 = vsyncadd [#allocation3], %s17
      %s19 = sshll.u32 [#allocation2], 4
      %s20 = int_to_ptr.vmem [resolvable:$true] %s19
      %25 = dma.hbm_to_vmem [thread:$0]  %s0, 2048, %s20, [#allocation3], 128, 128, 8
    $region5: #{dcdisc_forward.11} parent=1 // pred_fallthru
      _
    // Predicated region
    $region6: #{dcdisc_forward.11} parent=1 // pred_check
      _
    $region7: #{dcdisc_forward.11} parent=1 // pred_check_branch
      %27 = sbr.rel (0) target = $region9
    $region8: #{dcdisc_forward.11} parent=1 // pred_region
      %s29 = ssub.s32 2048, 2048
      %30 = vsyncadd [#allocation6], %s29
      %s31 = sshll.u32 [#allocation5], 4
      %s32 = int_to_ptr.vmem [resolvable:$true] %s31
      %37 = dma.hbm_to_vmem [thread:$0]  %s1, 2048, %s32, [#allocation6], 64, 64, 4
    $region9: #{dcdisc_forward.11} parent=1 // pred_fallthru
      _
    // Predicated region
    $region10: #{dcdisc_forward.11} parent=1 // pred_check
      _
    $region11: #{dcdisc_forward.11} parent=1 // pred_check_branch
      %39 = sbr.rel (0) target = $region13
    $region12: #{dcdisc_forward.11} parent=1 // pred_region
      %40 = dma.done [#allocation3], 2048
    $region13: #{dcdisc_forward.11} parent=1 // pred_fallthru
      _
    // Predicated region
    $region14: #{dcdisc_forward.11} parent=1 // pred_check
      _
    $region15: #{dcdisc_forward.11} parent=1 // pred_check_branch
      %42 = sbr.rel (0) target = $region17
    $region16: #{dcdisc_forward.11} parent=1 // pred_region
      %43 = dma.done [#allocation6], 2048
    $region17: #{dcdisc_forward.11} parent=1 // pred_fallthru
      _
    %p45 = scmp.eq.s32.totalorder 0, 0
    // Predicated region
    $region18: #{dcdisc_forward.11} parent=1 // pred_check
      %p46 = pneg %p45
    $region19: #{dcdisc_forward.11} parent=1 // pred_check_branch
      %48 = sbr.rel (%p46) target = $region21
    $region20: #{dcdisc_forward.11} parent=1 // pred_region
      %vm49 = vcmask 253952
      %50 = vst.msk [vmem:[#allocation8] sm:$0x1] %vm49, 0.0
      %51 = vst.msk [vmem:[#allocation10] sm:$0x1] %vm49, 0.0
    $region21: #{dcdisc_forward.11} parent=1 // pred_fallthru
      _
    %v52 = vld [vmem:[#allocation2] sm:$0xff]
    %v53 = vld [vmem:[#allocation2 + $0x8] sm:$0xff]
    %v54 = vld [vmem:[#allocation2 + $0x10] sm:$0xff]
    %v55 = vld [vmem:[#allocation2 + $0x18] sm:$0xff]
    %v56 = vld [vmem:[#allocation2 + $0x20] sm:$0xff]
    %v57 = vld [vmem:[#allocation2 + $0x28] sm:$0xff]
    %v58 = vld [vmem:[#allocation2 + $0x30] sm:$0xff]
    %v59 = vld [vmem:[#allocation2 + $0x38] sm:$0xff]
    %v60 = vld [vmem:[#allocation2 + $0x40] sm:$0xff]
    %v61 = vld [vmem:[#allocation2 + $0x48] sm:$0xff]
    %v62 = vld [vmem:[#allocation2 + $0x50] sm:$0xff]
    %v63 = vld [vmem:[#allocation2 + $0x58] sm:$0xff]
    %v64 = vld [vmem:[#allocation2 + $0x60] sm:$0xff]
    %v65 = vld [vmem:[#allocation2 + $0x68] sm:$0xff]
    %v66 = vld [vmem:[#allocation2 + $0x70] sm:$0xff]
    %v67 = vld [vmem:[#allocation2 + $0x78] sm:$0xff]
    %v68 = vld [vmem:[#allocation5] sm:$0xf]
    %v69 = vld [vmem:[#allocation5 + $0x4] sm:$0xf]
    %v70 = vld [vmem:[#allocation5 + $0x8] sm:$0xf]
    %v71 = vld [vmem:[#allocation5 + $0xc] sm:$0xf]
    %v72 = vld [vmem:[#allocation5 + $0x10] sm:$0xf]
    %v73 = vld [vmem:[#allocation5 + $0x14] sm:$0xf]
    %v74 = vld [vmem:[#allocation5 + $0x18] sm:$0xf]
    %v75 = vld [vmem:[#allocation5 + $0x1c] sm:$0xf]
    %v76 = vld [vmem:[#allocation5 + $0x20] sm:$0xf]
    %v77 = vld [vmem:[#allocation5 + $0x24] sm:$0xf]
    %v78 = vld [vmem:[#allocation5 + $0x28] sm:$0xf]
    %v79 = vld [vmem:[#allocation5 + $0x2c] sm:$0xf]
    %v80 = vld [vmem:[#allocation5 + $0x30] sm:$0xf]
    %v81 = vld [vmem:[#allocation5 + $0x34] sm:$0xf]
    %v82 = vld [vmem:[#allocation5 + $0x38] sm:$0xf]
    %v83 = vld [vmem:[#allocation5 + $0x3c] sm:$0xf]
    %v84 = vld [vmem:[#allocation5 + $0x40] sm:$0xf]
    %v85 = vld [vmem:[#allocation5 + $0x44] sm:$0xf]
    %v86 = vld [vmem:[#allocation5 + $0x48] sm:$0xf]
    %v87 = vld [vmem:[#allocation5 + $0x4c] sm:$0xf]
    %v88 = vld [vmem:[#allocation5 + $0x50] sm:$0xf]
    %v89 = vld [vmem:[#allocation5 + $0x54] sm:$0xf]
    %v90 = vld [vmem:[#allocation5 + $0x58] sm:$0xf]
    %v91 = vld [vmem:[#allocation5 + $0x5c] sm:$0xf]
    %v92 = vld [vmem:[#allocation5 + $0x60] sm:$0xf]
    %v93 = vld [vmem:[#allocation5 + $0x64] sm:$0xf]
    %v94 = vld [vmem:[#allocation5 + $0x68] sm:$0xf]
    %v95 = vld [vmem:[#allocation5 + $0x6c] sm:$0xf]
    %v96 = vld [vmem:[#allocation5 + $0x70] sm:$0xf]
    %v97 = vld [vmem:[#allocation5 + $0x74] sm:$0xf]
    %v98 = vld [vmem:[#allocation5 + $0x78] sm:$0xf]
    %v99 = vld [vmem:[#allocation5 + $0x7c] sm:$0xf]
    %v116 = vunpack.c.l.b16 %v52
    %v117 = vunpack.c.h.b16 %v52
    %v118 = vunpack.c.l.b16 %v53
    %v119 = vunpack.c.h.b16 %v53
    %v120 = vunpack.c.l.b16 %v54
    %v121 = vunpack.c.h.b16 %v54
    %v122 = vunpack.c.l.b16 %v55
    %v123 = vunpack.c.h.b16 %v55
    %v124 = vunpack.c.l.b16 %v56
    %v125 = vunpack.c.h.b16 %v56
    %v126 = vunpack.c.l.b16 %v57
    %v127 = vunpack.c.h.b16 %v57
    %v128 = vunpack.c.l.b16 %v58
    %v129 = vunpack.c.h.b16 %v58
    %v130 = vunpack.c.l.b16 %v59
    %v131 = vunpack.c.h.b16 %v59
    %v132 = vunpack.c.l.b16 %v60
    %v133 = vunpack.c.h.b16 %v60
    %v134 = vunpack.c.l.b16 %v61
    %v135 = vunpack.c.h.b16 %v61
    %v136 = vunpack.c.l.b16 %v62
    %v137 = vunpack.c.h.b16 %v62
    %v138 = vunpack.c.l.b16 %v63
    %v139 = vunpack.c.h.b16 %v63
    %v140 = vunpack.c.l.b16 %v64
    %v141 = vunpack.c.h.b16 %v64
    %v142 = vunpack.c.l.b16 %v65
    %v143 = vunpack.c.h.b16 %v65
    %v144 = vunpack.c.l.b16 %v66
    %v145 = vunpack.c.h.b16 %v66
    %v146 = vunpack.c.l.b16 %v67
    %v147 = vunpack.c.h.b16 %v67
    %v148 = vpack.c.b16 %v118, %v116
    %v149 = vpack.c.b16 %v119, %v117
    %v150 = vpack.c.b16 %v122, %v120
    %v151 = vpack.c.b16 %v123, %v121
    %v152 = vpack.c.b16 %v126, %v124
    %v153 = vpack.c.b16 %v127, %v125
    %v154 = vpack.c.b16 %v130, %v128
    %v155 = vpack.c.b16 %v131, %v129
    %v156 = vpack.c.b16 %v134, %v132
    %v157 = vpack.c.b16 %v135, %v133
    %v158 = vpack.c.b16 %v138, %v136
    %v159 = vpack.c.b16 %v139, %v137
    %v160 = vpack.c.b16 %v142, %v140
    %v161 = vpack.c.b16 %v143, %v141
    %v162 = vpack.c.b16 %v146, %v144
    %v163 = vpack.c.b16 %v147, %v145
    %v212 = vunpack.c.l.b16 %v68
    %v213 = vunpack.c.l.b16 %v69
    %v214 = vunpack.c.l.b16 %v70
    %v215 = vunpack.c.l.b16 %v71
    %v216 = vunpack.c.l.b16 %v72
    %v217 = vunpack.c.l.b16 %v73
    %v218 = vunpack.c.l.b16 %v74
    %v219 = vunpack.c.l.b16 %v75
    %v220 = vunpack.c.l.b16 %v76
    %v221 = vunpack.c.l.b16 %v77
    %v222 = vunpack.c.l.b16 %v78
    %v223 = vunpack.c.l.b16 %v79
    %v224 = vunpack.c.l.b16 %v80
    %v225 = vunpack.c.l.b16 %v81
    %v226 = vunpack.c.l.b16 %v82
    %v227 = vunpack.c.l.b16 %v83
    %v228 = vunpack.c.l.b16 %v84
    %v229 = vunpack.c.l.b16 %v85
    %v230 = vunpack.c.l.b16 %v86
    %v231 = vunpack.c.l.b16 %v87
    %v232 = vunpack.c.l.b16 %v88
    %v233 = vunpack.c.l.b16 %v89
    %v234 = vunpack.c.l.b16 %v90
    %v235 = vunpack.c.l.b16 %v91
    %v236 = vunpack.c.l.b16 %v92
    %v237 = vunpack.c.l.b16 %v93
    %v238 = vunpack.c.l.b16 %v94
    %v239 = vunpack.c.l.b16 %v95
    %v240 = vunpack.c.l.b16 %v96
    %v241 = vunpack.c.l.b16 %v97
    %v242 = vunpack.c.l.b16 %v98
    %v243 = vunpack.c.l.b16 %v99
    %v244 = vpack.c.b16 %v213, %v212
    %v245 = vpack.c.b16 %v215, %v214
    %v246 = vpack.c.b16 %v217, %v216
    %v247 = vpack.c.b16 %v219, %v218
    %v248 = vpack.c.b16 %v221, %v220
    %v249 = vpack.c.b16 %v223, %v222
    %v250 = vpack.c.b16 %v225, %v224
    %v251 = vpack.c.b16 %v227, %v226
    %v252 = vpack.c.b16 %v229, %v228
    %v253 = vpack.c.b16 %v231, %v230
    %v254 = vpack.c.b16 %v233, %v232
    %v255 = vpack.c.b16 %v235, %v234
    %v256 = vpack.c.b16 %v237, %v236
    %v257 = vpack.c.b16 %v239, %v238
    %v258 = vpack.c.b16 %v241, %v240
    %v259 = vpack.c.b16 %v243, %v242
    %276 = vmatprep.subr.bf16.mxu0 0
    %277 = vmatpush1.bf16.msra.mxu0 %v244
    %278 = vmatprep.subr.bf16.mxu0 0
    %279 = vmatpush1.bf16.msra.mxu0 %v245
    %280 = vmatprep.subr.bf16.mxu0 0
    %281 = vmatpush1.bf16.msra.mxu0 %v246
    %282 = vmatprep.subr.bf16.mxu0 0
    %283 = vmatpush1.bf16.msra.mxu0 %v247
    %284 = vmatprep.subr.bf16.mxu0 0
    %285 = vmatpush1.bf16.msra.mxu0 %v248
    %286 = vmatprep.subr.bf16.mxu0 0
    %287 = vmatpush1.bf16.msra.mxu0 %v249
    %288 = vmatprep.subr.bf16.mxu0 0
    %289 = vmatpush1.bf16.msra.mxu0 %v250
    %290 = vmatprep.subr.bf16.mxu0 0
    %291 = vmatpush1.bf16.msra.mxu0 %v251
    %292 = vmatprep.subr.bf16.mxu0 0
    %293 = vmatpush1.bf16.msra.mxu0 %v252
    %294 = vmatprep.subr.bf16.mxu0 0
    %295 = vmatpush1.bf16.msra.mxu0 %v253
    %296 = vmatprep.subr.bf16.mxu0 0
    %297 = vmatpush1.bf16.msra.mxu0 %v254
    %298 = vmatprep.subr.bf16.mxu0 0
    %299 = vmatpush1.bf16.msra.mxu0 %v255
    %300 = vmatprep.subr.bf16.mxu0 0
    %301 = vmatpush1.bf16.msra.mxu0 %v256
    %302 = vmatprep.subr.bf16.mxu0 0
    %303 = vmatpush1.bf16.msra.mxu0 %v257
    %304 = vmatprep.subr.bf16.mxu0 0
    %305 = vmatpush1.bf16.msra.mxu0 %v258
    %306 = vmatprep.subr.bf16.mxu0 0
    %307 = vmatpush1.bf16.msra.mxu0 %v259
    %308 = vmatprep.mubr.bf16.mxu0 %v149
    %309 = vmatmul.mubr.bf16.gmra.mrb[0].mxu0 %v148
    %v310 = vpop.f32.mrb[0].mxu0
    %v311 = vadd.f32 0.0, %v310
    %v312 = vpop.f32.mrb[0].mxu0
    %v313 = vpop.f32.mrb[0].mxu0
    %v314 = vadd.f32 0.0, %v313
    %v315 = vpop.f32.mrb[0].mxu0
    %316 = vmatprep.mubr.bf16.mxu0 %v151
    %317 = vmatmul.mubr.bf16.gmra.mrb[0].mxu0 %v150
    %v318 = vpop.f32.mrb[0].mxu0
    %v319 = vadd.f32 0.0, %v318
    %v320 = vpop.f32.mrb[0].mxu0
    %v321 = vpop.f32.mrb[0].mxu0
    %v322 = vadd.f32 0.0, %v321
    %v323 = vpop.f32.mrb[0].mxu0
    %324 = vmatprep.mubr.bf16.mxu0 %v153
    %325 = vmatmul.mubr.bf16.gmra.mrb[0].mxu0 %v152
    %v326 = vpop.f32.mrb[0].mxu0
    %v327 = vadd.f32 0.0, %v326
    %v328 = vpop.f32.mrb[0].mxu0
    %v329 = vpop.f32.mrb[0].mxu0
    %v330 = vadd.f32 0.0, %v329
    %v331 = vpop.f32.mrb[0].mxu0
    %332 = vmatprep.mubr.bf16.mxu0 %v155
    %333 = vmatmul.mubr.bf16.gmra.mrb[0].mxu0 %v154
    %v334 = vpop.f32.mrb[0].mxu0
    %v335 = vadd.f32 0.0, %v334
    %v336 = vpop.f32.mrb[0].mxu0
    %v337 = vpop.f32.mrb[0].mxu0
    %v338 = vadd.f32 0.0, %v337
    %v339 = vpop.f32.mrb[0].mxu0
    %340 = vmatprep.mubr.bf16.mxu0 %v157
    %341 = vmatmul.mubr.bf16.gmra.mrb[0].mxu0 %v156
    %v342 = vpop.f32.mrb[0].mxu0
    %v343 = vadd.f32 0.0, %v342
    %v344 = vpop.f32.mrb[0].mxu0
    %v345 = vpop.f32.mrb[0].mxu0
    %v346 = vadd.f32 0.0, %v345
    %v347 = vpop.f32.mrb[0].mxu0
    %348 = vmatprep.mubr.bf16.mxu0 %v159
    %349 = vmatmul.mubr.bf16.gmra.mrb[0].mxu0 %v158
    %v350 = vpop.f32.mrb[0].mxu0
    %v351 = vadd.f32 0.0, %v350
    %v352 = vpop.f32.mrb[0].mxu0
    %v353 = vpop.f32.mrb[0].mxu0
    %v354 = vadd.f32 0.0, %v353
    %v355 = vpop.f32.mrb[0].mxu0
    %356 = vmatprep.mubr.bf16.mxu0 %v161
    %357 = vmatmul.mubr.bf16.gmra.mrb[0].mxu0 %v160
    %v358 = vpop.f32.mrb[0].mxu0
    %v359 = vadd.f32 0.0, %v358
    %v360 = vpop.f32.mrb[0].mxu0
    %v361 = vpop.f32.mrb[0].mxu0
    %v362 = vadd.f32 0.0, %v361
    %v363 = vpop.f32.mrb[0].mxu0
    %364 = vmatprep.mubr.bf16.mxu0 %v163
    %365 = vmatmul.mubr.bf16.gmra.mrb[0].mxu0 %v162
    %v366 = vpop.f32.mrb[0].mxu0
    %v367 = vadd.f32 0.0, %v366
    %v368 = vpop.f32.mrb[0].mxu0
    %v369 = vpop.f32.mrb[0].mxu0
    %v370 = vadd.f32 0.0, %v369
    %v371 = vpop.f32.mrb[0].mxu0
    %372 = vdwg.mxu0
    %vm373 = vcmask 261120
    %374 = vst.msk [vmem:[#allocation7] sm:$0xff] %vm373, %v311
    %375 = vst.msk [vmem:[#allocation7 + $0x8] sm:$0xff] %vm373, %v314
    %376 = vst.msk [vmem:[#allocation7 + $0x10] sm:$0xff] %vm373, %v319
    %377 = vst.msk [vmem:[#allocation7 + $0x18] sm:$0xff] %vm373, %v322
    %378 = vst.msk [vmem:[#allocation7 + $0x20] sm:$0xff] %vm373, %v327
    %379 = vst.msk [vmem:[#allocation7 + $0x28] sm:$0xff] %vm373, %v330
    %380 = vst.msk [vmem:[#allocation7 + $0x30] sm:$0xff] %vm373, %v335
    %381 = vst.msk [vmem:[#allocation7 + $0x38] sm:$0xff] %vm373, %v338
    %382 = vst.msk [vmem:[#allocation7 + $0x40] sm:$0xff] %vm373, %v343
    %383 = vst.msk [vmem:[#allocation7 + $0x48] sm:$0xff] %vm373, %v346
    %384 = vst.msk [vmem:[#allocation7 + $0x50] sm:$0xff] %vm373, %v351
    %385 = vst.msk [vmem:[#allocation7 + $0x58] sm:$0xff] %vm373, %v354
    %386 = vst.msk [vmem:[#allocation7 + $0x60] sm:$0xff] %vm373, %v359
    %387 = vst.msk [vmem:[#allocation7 + $0x68] sm:$0xff] %vm373, %v362
    %388 = vst.msk [vmem:[#allocation7 + $0x70] sm:$0xff] %vm373, %v367
    %389 = vst.msk [vmem:[#allocation7 + $0x78] sm:$0xff] %vm373, %v370
    %v390 = vld [vmem:[#allocation8] sm:$0x1]
    %v391 = vsel %vm373, %v311, 0.0
    %v392 = vsel %vm373, %v314, 0.0
    %v393 = vadd.f32 %v391, %v392
    %v394 = vsel %vm373, %v319, 0.0
    %v395 = vadd.f32 %v393, %v394
    %v396 = vsel %vm373, %v322, 0.0
    %v397 = vadd.f32 %v395, %v396
    %v398 = vsel %vm373, %v327, 0.0
    %v399 = vadd.f32 %v397, %v398
    %v400 = vsel %vm373, %v330, 0.0
    %v401 = vadd.f32 %v399, %v400
    %v402 = vsel %vm373, %v335, 0.0
    %v403 = vadd.f32 %v401, %v402
    %v404 = vsel %vm373, %v338, 0.0
    %v405 = vadd.f32 %v403, %v404
    %v406 = vsel %vm373, %v343, 0.0
    %v407 = vadd.f32 %v405, %v406
    %v408 = vsel %vm373, %v346, 0.0
    %v409 = vadd.f32 %v407, %v408
    %v410 = vsel %vm373, %v351, 0.0
    %v411 = vadd.f32 %v409, %v410
    %v412 = vsel %vm373, %v354, 0.0
    %v413 = vadd.f32 %v411, %v412
    %v414 = vsel %vm373, %v359, 0.0
    %v415 = vadd.f32 %v413, %v414
    %v416 = vsel %vm373, %v362, 0.0
    %v417 = vadd.f32 %v415, %v416
    %v418 = vsel %vm373, %v367, 0.0
    %v419 = vadd.f32 %v417, %v418
    %v420 = vsel %vm373, %v370, 0.0
    %v421 = vadd.f32 %v419, %v420
    %v422 = vrot.slane %v421, 4
    %v423 = vadd.f32 %v421, %v422
    %v424 = vrot.slane %v423, 2
    %v425 = vadd.f32 %v423, %v424
    %v426 = vrot.slane %v425, 1
    %v427 = vadd.f32 %v425, %v426
    %v428 = vadd.f32 %v390, %v427
    %vm429 = vcmask 253952
    %430 = vst.msk [vmem:[#allocation8] sm:$0x1] %vm429, %v428
    %v431 = vld [vmem:[#allocation10] sm:$0x1]
    %v432 = vmul.f32 %v311, %v311
    %v433 = vmul.f32 %v314, %v314
    %v434 = vmul.f32 %v319, %v319
    %v435 = vmul.f32 %v322, %v322
    %v436 = vmul.f32 %v327, %v327
    %v437 = vmul.f32 %v330, %v330
    %v438 = vmul.f32 %v335, %v335
    %v439 = vmul.f32 %v338, %v338
    %v440 = vmul.f32 %v343, %v343
    %v441 = vmul.f32 %v346, %v346
    %v442 = vmul.f32 %v351, %v351
    %v443 = vmul.f32 %v354, %v354
    %v444 = vmul.f32 %v359, %v359
    %v445 = vmul.f32 %v362, %v362
    %v446 = vmul.f32 %v367, %v367
    %v447 = vmul.f32 %v370, %v370
    %v448 = vsel %vm373, %v432, 0.0
    %v449 = vsel %vm373, %v433, 0.0
    %v450 = vadd.f32 %v448, %v449
    %v451 = vsel %vm373, %v434, 0.0
    %v452 = vadd.f32 %v450, %v451
    %v453 = vsel %vm373, %v435, 0.0
    %v454 = vadd.f32 %v452, %v453
    %v455 = vsel %vm373, %v436, 0.0
    %v456 = vadd.f32 %v454, %v455
    %v457 = vsel %vm373, %v437, 0.0
    %v458 = vadd.f32 %v456, %v457
    %v459 = vsel %vm373, %v438, 0.0
    %v460 = vadd.f32 %v458, %v459
    %v461 = vsel %vm373, %v439, 0.0
    %v462 = vadd.f32 %v460, %v461
    %v463 = vsel %vm373, %v440, 0.0
    %v464 = vadd.f32 %v462, %v463
    %v465 = vsel %vm373, %v441, 0.0
    %v466 = vadd.f32 %v464, %v465
    %v467 = vsel %vm373, %v442, 0.0
    %v468 = vadd.f32 %v466, %v467
    %v469 = vsel %vm373, %v443, 0.0
    %v470 = vadd.f32 %v468, %v469
    %v471 = vsel %vm373, %v444, 0.0
    %v472 = vadd.f32 %v470, %v471
    %v473 = vsel %vm373, %v445, 0.0
    %v474 = vadd.f32 %v472, %v473
    %v475 = vsel %vm373, %v446, 0.0
    %v476 = vadd.f32 %v474, %v475
    %v477 = vsel %vm373, %v447, 0.0
    %v478 = vadd.f32 %v476, %v477
    %v479 = vrot.slane %v478, 4
    %v480 = vadd.f32 %v478, %v479
    %v481 = vrot.slane %v480, 2
    %v482 = vadd.f32 %v480, %v481
    %v483 = vrot.slane %v482, 1
    %v484 = vadd.f32 %v482, %v483
    %v485 = vadd.f32 %v431, %v484
    %486 = vst.msk [vmem:[#allocation10] sm:$0x1] %vm429, %v485
    // Predicated region
    $region22: #{dcdisc_forward.11} parent=1 // pred_check
      _
    $region23: #{dcdisc_forward.11} parent=1 // pred_check_branch
      %488 = sbr.rel (0) target = $region25
    $region24: #{dcdisc_forward.11} parent=1 // pred_region
      %s490 = ssub.s32 2048, 2048
      %491 = vsyncadd [#allocation4], %s490
      %s492 = sshll.u32 [#allocation7], 4
      %s493 = int_to_ptr.vmem [resolvable:$true] %s492
      %498 = dma.vmem_to_hbm [thread:$0]  %s493, 2048, %s2, [#allocation4], 128, 128, 8
    $region25: #{dcdisc_forward.11} parent=1 // pred_fallthru
      _
    // Predicated region
    $region26: #{dcdisc_forward.11} parent=1 // pred_check
      _
    $region27: #{dcdisc_forward.11} parent=1 // pred_check_branch
      %500 = sbr.rel (0) target = $region29
    $region28: #{dcdisc_forward.11} parent=1 // pred_region
      %s502 = ssub.s32 16, 16
      %503 = vsyncadd [#allocation9], %s502
      %s505 = sshll.u32 [#allocation8], 4
      %s506 = int_to_ptr.vmem [resolvable:$true] %s505
      %508 = dma.vmem_to_hbm [thread:$0]  %s506, 16, %s3, [#allocation9]
    $region29: #{dcdisc_forward.11} parent=1 // pred_fallthru
      _
    // Predicated region
    $region30: #{dcdisc_forward.11} parent=1 // pred_check
      _
    $region31: #{dcdisc_forward.11} parent=1 // pred_check_branch
      %510 = sbr.rel (0) target = $region33
    $region32: #{dcdisc_forward.11} parent=1 // pred_region
      %s512 = ssub.s32 16, 16
      %513 = vsyncadd [#allocation9], %s512
      %s515 = sshll.u32 [#allocation10], 4
      %s516 = int_to_ptr.vmem [resolvable:$true] %s515
      %518 = dma.vmem_to_hbm [thread:$0]  %s516, 16, %s4, [#allocation9]
    $region33: #{dcdisc_forward.11} parent=1 // pred_fallthru
      _
    // Predicated region
    $region34: #{dcdisc_forward.11} parent=1 // pred_check
      _
    $region35: #{dcdisc_forward.11} parent=1 // pred_check_branch
      %520 = sbr.rel (0) target = $region37
    $region36: #{dcdisc_forward.11} parent=1 // pred_region
      %521 = dma.done [#allocation4], 2048
    $region37: #{dcdisc_forward.11} parent=1 // pred_fallthru
      _
    // Predicated region
    $region38: #{dcdisc_forward.11} parent=1 // pred_check
      _
    $region39: #{dcdisc_forward.11} parent=1 // pred_check_branch
      %523 = sbr.rel (0) target = $region41
    $region40: #{dcdisc_forward.11} parent=1 // pred_region
      %524 = dma.done [#allocation9], 16
    $region41: #{dcdisc_forward.11} parent=1 // pred_fallthru
      _
    // Predicated region
    $region42: #{dcdisc_forward.11} parent=1 // pred_check
      _
    $region43: #{dcdisc_forward.11} parent=1 // pred_check_branch
      %526 = sbr.rel (0) target = $region45
    $region44: #{dcdisc_forward.11} parent=1 // pred_region
      %527 = dma.done [#allocation9], 16
    $region45: #{dcdisc_forward.11} parent=1 // pred_fallthru
      _
    %528 = vsyncpa [#allocation3], 1
    %529 = vsyncpa [#allocation6], 1
    %530 = vsyncpa [#allocation4], 1
    %531 = vsyncpa [#allocation9], 1

// kernel: dcdisc_forward.12
$region0: #{dcdisc_forward.12}
  #allocation0 [shape = 'u32[]', space=smem, size = 0x4, offset = 0x4, fixed_abs, tag = 'smem constant byte address 0x4 - core index']
  #allocation1 [shape = 'u32[144,128]{1,0:T(1,128)}', space=vmem, size = 0x12000, scoped, tag = 'internal scratch']
  %s0 = inlined_call_operand.hbm [shape: f32[128,32], index: 0, kind: input, shape index: {}]
  %s1 = inlined_call_operand.hbm [shape: f32[1,32], index: 1, kind: input, shape index: {}]
  %s2 = inlined_call_operand.hbm [shape: f32[1,32], index: 2, kind: input, shape index: {}]
  %s3 = inlined_call_operand.hbm [shape: f32[1,32], index: 3, kind: input, shape index: {}]
  %s4 = inlined_call_operand.hbm [shape: f32[1,32], index: 4, kind: input, shape index: {}]
  %s5 = inlined_call_operand.hbm [shape: bf16[128,32], index: 5, kind: output, shape index: {}]
  %s6 = sld [smem:[#allocation0]]
  $region50: #{dcdisc_forward.12} parent=0
    _
  %s8 = ssub.s32 1, %s6
  %s9 = scalar_select 0, %s8, %s6
  $region1: #{dcdisc_forward.12} parent=0
    #allocation2 [shape = 'u8[65536]{0}', space=vmem, size = 0x10000, scoped, tag = 'input window, operand 0, single buffered']
    #allocation3 [shape = 's32[1]{0}', space=sflag, size = 0x4, scoped, tag = 'scoped memory for dcdisc_forward.12']
    #allocation4 [shape = 's32[1]{0}', space=sflag, size = 0x4, scoped, tag = 'scoped memory for dcdisc_forward.12']
    #allocation5 [shape = 'u8[512]{0}', space=vmem, size = 0x400, scoped, tag = 'input window, operand 1, single buffered']
    #allocation6 [shape = 's32[1]{0}', space=sflag, size = 0x4, scoped, tag = 'scoped memory for dcdisc_forward.12']
    #allocation7 [shape = 'u8[512]{0}', space=vmem, size = 0x400, scoped, tag = 'input window, operand 2, single buffered']
    #allocation8 [shape = 'u8[512]{0}', space=vmem, size = 0x400, scoped, tag = 'input window, operand 3, single buffered']
    #allocation9 [shape = 's32[1]{0}', space=sflag, size = 0x4, scoped, tag = 'scoped memory for dcdisc_forward.12']
    #allocation10 [shape = 'u8[512]{0}', space=vmem, size = 0x400, scoped, tag = 'input window, operand 4, single buffered']
    #allocation11 [shape = 'u8[32768]{0}', space=vmem, size = 0x8000, scoped, tag = 'output window, operand 0, single buffered']
    %10 = vsyncpa [#allocation3], 0
    %11 = vsyncpa [#allocation6], 0
    %12 = vsyncpa [#allocation9], 0
    %13 = vsyncpa [#allocation4], 0
    // Predicated region
    $region2: #{dcdisc_forward.12} parent=1 // pred_check
      _
    $region3: #{dcdisc_forward.12} parent=1 // pred_check_branch
      %15 = sbr.rel (0) target = $region5
    $region4: #{dcdisc_forward.12} parent=1 // pred_region
      %s17 = ssub.s32 2048, 2048
      %18 = vsyncadd [#allocation3], %s17
      %s19 = sshll.u32 [#allocation2], 4
      %s20 = int_to_ptr.vmem [resolvable:$true] %s19
      %25 = dma.hbm_to_vmem [thread:$0]  %s0, 2048, %s20, [#allocation3], 128, 128, 8
    $region5: #{dcdisc_forward.12} parent=1 // pred_fallthru
      _
    // Predicated region
    $region6: #{dcdisc_forward.12} parent=1 // pred_check
      _
    $region7: #{dcdisc_forward.12} parent=1 // pred_check_branch
      %27 = sbr.rel (0) target = $region9
    $region8: #{dcdisc_forward.12} parent=1 // pred_region
      %s29 = ssub.s32 16, 16
      %30 = vsyncadd [#allocation6], %s29
      %s32 = sshll.u32 [#allocation5], 4
      %s33 = int_to_ptr.vmem [resolvable:$true] %s32
      %35 = dma.hbm_to_vmem [thread:$0]  %s1, 16, %s33, [#allocation6]
    $region9: #{dcdisc_forward.12} parent=1 // pred_fallthru
      _
    // Predicated region
    $region10: #{dcdisc_forward.12} parent=1 // pred_check
      _
    $region11: #{dcdisc_forward.12} parent=1 // pred_check_branch
      %37 = sbr.rel (0) target = $region13
    $region12: #{dcdisc_forward.12} parent=1 // pred_region
      %s39 = ssub.s32 16, 16
      %40 = vsyncadd [#allocation6], %s39
      %s42 = sshll.u32 [#allocation7], 4
      %s43 = int_to_ptr.vmem [resolvable:$true] %s42
      %45 = dma.hbm_to_vmem [thread:$0]  %s2, 16, %s43, [#allocation6]
    $region13: #{dcdisc_forward.12} parent=1 // pred_fallthru
      _
    // Predicated region
    $region14: #{dcdisc_forward.12} parent=1 // pred_check
      _
    $region15: #{dcdisc_forward.12} parent=1 // pred_check_branch
      %47 = sbr.rel (0) target = $region17
    $region16: #{dcdisc_forward.12} parent=1 // pred_region
      %s49 = ssub.s32 16, 16
      %50 = vsyncadd [#allocation9], %s49
      %s52 = sshll.u32 [#allocation8], 4
      %s53 = int_to_ptr.vmem [resolvable:$true] %s52
      %55 = dma.hbm_to_vmem [thread:$0]  %s3, 16, %s53, [#allocation9]
    $region17: #{dcdisc_forward.12} parent=1 // pred_fallthru
      _
    // Predicated region
    $region18: #{dcdisc_forward.12} parent=1 // pred_check
      _
    $region19: #{dcdisc_forward.12} parent=1 // pred_check_branch
      %57 = sbr.rel (0) target = $region21
    $region20: #{dcdisc_forward.12} parent=1 // pred_region
      %s59 = ssub.s32 16, 16
      %60 = vsyncadd [#allocation9], %s59
      %s62 = sshll.u32 [#allocation10], 4
      %s63 = int_to_ptr.vmem [resolvable:$true] %s62
      %65 = dma.hbm_to_vmem [thread:$0]  %s4, 16, %s63, [#allocation9]
    $region21: #{dcdisc_forward.12} parent=1 // pred_fallthru
      _
    // Predicated region
    $region22: #{dcdisc_forward.12} parent=1 // pred_check
      _
    $region23: #{dcdisc_forward.12} parent=1 // pred_check_branch
      %67 = sbr.rel (0) target = $region25
    $region24: #{dcdisc_forward.12} parent=1 // pred_region
      %68 = dma.done [#allocation3], 2048
    $region25: #{dcdisc_forward.12} parent=1 // pred_fallthru
      _
    // Predicated region
    $region26: #{dcdisc_forward.12} parent=1 // pred_check
      _
    $region27: #{dcdisc_forward.12} parent=1 // pred_check_branch
      %70 = sbr.rel (0) target = $region29
    $region28: #{dcdisc_forward.12} parent=1 // pred_region
      %71 = dma.done [#allocation6], 16
    $region29: #{dcdisc_forward.12} parent=1 // pred_fallthru
      _
    // Predicated region
    $region30: #{dcdisc_forward.12} parent=1 // pred_check
      _
    $region31: #{dcdisc_forward.12} parent=1 // pred_check_branch
      %73 = sbr.rel (0) target = $region33
    $region32: #{dcdisc_forward.12} parent=1 // pred_region
      %74 = dma.done [#allocation6], 16
    $region33: #{dcdisc_forward.12} parent=1 // pred_fallthru
      _
    // Predicated region
    $region34: #{dcdisc_forward.12} parent=1 // pred_check
      _
    $region35: #{dcdisc_forward.12} parent=1 // pred_check_branch
      %76 = sbr.rel (0) target = $region37
    $region36: #{dcdisc_forward.12} parent=1 // pred_region
      %77 = dma.done [#allocation9], 16
    $region37: #{dcdisc_forward.12} parent=1 // pred_fallthru
      _
    // Predicated region
    $region38: #{dcdisc_forward.12} parent=1 // pred_check
      _
    $region39: #{dcdisc_forward.12} parent=1 // pred_check_branch
      %79 = sbr.rel (0) target = $region41
    $region40: #{dcdisc_forward.12} parent=1 // pred_region
      %80 = dma.done [#allocation9], 16
    $region41: #{dcdisc_forward.12} parent=1 // pred_fallthru
      _
    %v81 = vld [vmem:[#allocation5] sm:$0x1]
    %v82 = vmul.f32 %v81, 0.0078125
    %v83 = vld [vmem:[#allocation7] sm:$0x1]
    %v84 = vmul.f32 %v83, 0.0078125
    %v85 = vmul.f32 %v82, %v82
    %v86 = vsub.f32 %v84, %v85
    %v87 = vmax.f32 %v86, 0.0
    %v88 = vld [vmem:[#allocation8] sm:$0x1]
    %v89 = vadd.f32 %v87, 1e-05
    %v90 = vrsqrt.pop %v89
    %v91 = vmul.f32 %v88, %v90
    %v92 = vld [vmem:[#allocation10] sm:$0x1]
    %v93 = vmul.f32 %v82, %v91
    %v94 = vsub.f32 %v92, %v93
    %v95 = vld [vmem:[#allocation2] sm:$0xff]
    %v96 = vld [vmem:[#allocation2 + $0x8] sm:$0xff]
    %v97 = vld [vmem:[#allocation2 + $0x10] sm:$0xff]
    %v98 = vld [vmem:[#allocation2 + $0x18] sm:$0xff]
    %v99 = vld [vmem:[#allocation2 + $0x20] sm:$0xff]
    %v100 = vld [vmem:[#allocation2 + $0x28] sm:$0xff]
    %v101 = vld [vmem:[#allocation2 + $0x30] sm:$0xff]
    %v102 = vld [vmem:[#allocation2 + $0x38] sm:$0xff]
    %v103 = vld [vmem:[#allocation2 + $0x40] sm:$0xff]
    %v104 = vld [vmem:[#allocation2 + $0x48] sm:$0xff]
    %v105 = vld [vmem:[#allocation2 + $0x50] sm:$0xff]
    %v106 = vld [vmem:[#allocation2 + $0x58] sm:$0xff]
    %v107 = vld [vmem:[#allocation2 + $0x60] sm:$0xff]
    %v108 = vld [vmem:[#allocation2 + $0x68] sm:$0xff]
    %v109 = vld [vmem:[#allocation2 + $0x70] sm:$0xff]
    %v110 = vld [vmem:[#allocation2 + $0x78] sm:$0xff]
    %v112 = vlaneseq
    %v113 = vshrl.u32 %v112, 7
    %v114 = vsub.s32 0, %v113
    %v115 = vrot.slane %v91, %v114
    %v117 = vmul.f32 %v95, %v115
    %v118 = vmul.f32 %v96, %v115
    %v119 = vmul.f32 %v97, %v115
    %v120 = vmul.f32 %v98, %v115
    %v121 = vmul.f32 %v99, %v115
    %v122 = vmul.f32 %v100, %v115
    %v123 = vmul.f32 %v101, %v115
    %v124 = vmul.f32 %v102, %v115
    %v125 = vmul.f32 %v103, %v115
    %v126 = vmul.f32 %v104, %v115
    %v127 = vmul.f32 %v105, %v115
    %v128 = vmul.f32 %v106, %v115
    %v129 = vmul.f32 %v107, %v115
    %v130 = vmul.f32 %v108, %v115
    %v131 = vmul.f32 %v109, %v115
    %v132 = vmul.f32 %v110, %v115
    %v134 = vlaneseq
    %v135 = vshrl.u32 %v134, 7
    %v136 = vsub.s32 0, %v135
    %v137 = vrot.slane %v94, %v136
    %v139 = vadd.f32 %v117, %v137
    %v140 = vadd.f32 %v118, %v137
    %v141 = vadd.f32 %v119, %v137
    %v142 = vadd.f32 %v120, %v137
    %v143 = vadd.f32 %v121, %v137
    %v144 = vadd.f32 %v122, %v137
    %v145 = vadd.f32 %v123, %v137
    %v146 = vadd.f32 %v124, %v137
    %v147 = vadd.f32 %v125, %v137
    %v148 = vadd.f32 %v126, %v137
    %v149 = vadd.f32 %v127, %v137
    %v150 = vadd.f32 %v128, %v137
    %v151 = vadd.f32 %v129, %v137
    %v152 = vadd.f32 %v130, %v137
    %v153 = vadd.f32 %v131, %v137
    %v154 = vadd.f32 %v132, %v137
    %vm155 = vcmp.ge.f32.partialorder %v139, 0.0
    %vm156 = vcmp.ge.f32.partialorder %v140, 0.0
    %vm157 = vcmp.ge.f32.partialorder %v141, 0.0
    %vm158 = vcmp.ge.f32.partialorder %v142, 0.0
    %vm159 = vcmp.ge.f32.partialorder %v143, 0.0
    %vm160 = vcmp.ge.f32.partialorder %v144, 0.0
    %vm161 = vcmp.ge.f32.partialorder %v145, 0.0
    %vm162 = vcmp.ge.f32.partialorder %v146, 0.0
    %vm163 = vcmp.ge.f32.partialorder %v147, 0.0
    %vm164 = vcmp.ge.f32.partialorder %v148, 0.0
    %vm165 = vcmp.ge.f32.partialorder %v149, 0.0
    %vm166 = vcmp.ge.f32.partialorder %v150, 0.0
    %vm167 = vcmp.ge.f32.partialorder %v151, 0.0
    %vm168 = vcmp.ge.f32.partialorder %v152, 0.0
    %vm169 = vcmp.ge.f32.partialorder %v153, 0.0
    %vm170 = vcmp.ge.f32.partialorder %v154, 0.0
    %v171 = vmul.f32 %v139, 0.2
    %v172 = vmul.f32 %v140, 0.2
    %v173 = vmul.f32 %v141, 0.2
    %v174 = vmul.f32 %v142, 0.2
    %v175 = vmul.f32 %v143, 0.2
    %v176 = vmul.f32 %v144, 0.2
    %v177 = vmul.f32 %v145, 0.2
    %v178 = vmul.f32 %v146, 0.2
    %v179 = vmul.f32 %v147, 0.2
    %v180 = vmul.f32 %v148, 0.2
    %v181 = vmul.f32 %v149, 0.2
    %v182 = vmul.f32 %v150, 0.2
    %v183 = vmul.f32 %v151, 0.2
    %v184 = vmul.f32 %v152, 0.2
    %v185 = vmul.f32 %v153, 0.2
    %v186 = vmul.f32 %v154, 0.2
    %v187 = vsel %vm155, %v139, %v171
    %v188 = vsel %vm156, %v140, %v172
    %v189 = vsel %vm157, %v141, %v173
    %v190 = vsel %vm158, %v142, %v174
    %v191 = vsel %vm159, %v143, %v175
    %v192 = vsel %vm160, %v144, %v176
    %v193 = vsel %vm161, %v145, %v177
    %v194 = vsel %vm162, %v146, %v178
    %v195 = vsel %vm163, %v147, %v179
    %v196 = vsel %vm164, %v148, %v180
    %v197 = vsel %vm165, %v149, %v181
    %v198 = vsel %vm166, %v150, %v182
    %v199 = vsel %vm167, %v151, %v183
    %v200 = vsel %vm168, %v152, %v184
    %v201 = vsel %vm169, %v153, %v185
    %v202 = vsel %vm170, %v154, %v186
    %v203 = vpack.c.bf16 %v188, %v187
    %v204 = vpack.c.bf16 %v190, %v189
    %v205 = vpack.c.bf16 %v192, %v191
    %v206 = vpack.c.bf16 %v194, %v193
    %v207 = vpack.c.bf16 %v196, %v195
    %v208 = vpack.c.bf16 %v198, %v197
    %v209 = vpack.c.bf16 %v200, %v199
    %v210 = vpack.c.bf16 %v202, %v201
    %v219 = vunpack.c.l.b16 %v203
    %v220 = vunpack.c.h.b16 %v203
    %v221 = vunpack.c.l.b16 %v204
    %v222 = vunpack.c.h.b16 %v204
    %v223 = vunpack.c.l.b16 %v205
    %v224 = vunpack.c.h.b16 %v205
    %v225 = vunpack.c.l.b16 %v206
    %v226 = vunpack.c.h.b16 %v206
    %v227 = vunpack.c.l.b16 %v207
    %v228 = vunpack.c.h.b16 %v207
    %v229 = vunpack.c.l.b16 %v208
    %v230 = vunpack.c.h.b16 %v208
    %v231 = vunpack.c.l.b16 %v209
    %v232 = vunpack.c.h.b16 %v209
    %v233 = vunpack.c.l.b16 %v210
    %v234 = vunpack.c.h.b16 %v210
    %v235 = vpack.c.b16 %v219, %v219
    %v236 = vpack.c.b16 %v220, %v220
    %v237 = vpack.c.b16 %v221, %v221
    %v238 = vpack.c.b16 %v222, %v222
    %v239 = vpack.c.b16 %v223, %v223
    %v240 = vpack.c.b16 %v224, %v224
    %v241 = vpack.c.b16 %v225, %v225
    %v242 = vpack.c.b16 %v226, %v226
    %v243 = vpack.c.b16 %v227, %v227
    %v244 = vpack.c.b16 %v228, %v228
    %v245 = vpack.c.b16 %v229, %v229
    %v246 = vpack.c.b16 %v230, %v230
    %v247 = vpack.c.b16 %v231, %v231
    %v248 = vpack.c.b16 %v232, %v232
    %v249 = vpack.c.b16 %v233, %v233
    %v250 = vpack.c.b16 %v234, %v234
    %vm267 = vcmask 257024
    %268 = vst.msk [vmem:[#allocation11] sm:$0xf] %vm267, %v235
    %269 = vst.msk [vmem:[#allocation11 + $0x4] sm:$0xf] %vm267, %v236
    %270 = vst.msk [vmem:[#allocation11 + $0x8] sm:$0xf] %vm267, %v237
    %271 = vst.msk [vmem:[#allocation11 + $0xc] sm:$0xf] %vm267, %v238
    %272 = vst.msk [vmem:[#allocation11 + $0x10] sm:$0xf] %vm267, %v239
    %273 = vst.msk [vmem:[#allocation11 + $0x14] sm:$0xf] %vm267, %v240
    %274 = vst.msk [vmem:[#allocation11 + $0x18] sm:$0xf] %vm267, %v241
    %275 = vst.msk [vmem:[#allocation11 + $0x1c] sm:$0xf] %vm267, %v242
    %276 = vst.msk [vmem:[#allocation11 + $0x20] sm:$0xf] %vm267, %v243
    %277 = vst.msk [vmem:[#allocation11 + $0x24] sm:$0xf] %vm267, %v244
    %278 = vst.msk [vmem:[#allocation11 + $0x28] sm:$0xf] %vm267, %v245
    %279 = vst.msk [vmem:[#allocation11 + $0x2c] sm:$0xf] %vm267, %v246
    %280 = vst.msk [vmem:[#allocation11 + $0x30] sm:$0xf] %vm267, %v247
    %281 = vst.msk [vmem:[#allocation11 + $0x34] sm:$0xf] %vm267, %v248
    %282 = vst.msk [vmem:[#allocation11 + $0x38] sm:$0xf] %vm267, %v249
    %283 = vst.msk [vmem:[#allocation11 + $0x3c] sm:$0xf] %vm267, %v250
    // Predicated region
    $region42: #{dcdisc_forward.12} parent=1 // pred_check
      _
    $region43: #{dcdisc_forward.12} parent=1 // pred_check_branch
      %285 = sbr.rel (0) target = $region45
    $region44: #{dcdisc_forward.12} parent=1 // pred_region
      %s287 = ssub.s32 1024, 1024
      %288 = vsyncadd [#allocation4], %s287
      %s289 = sshll.u32 [#allocation11], 4
      %s290 = int_to_ptr.vmem [resolvable:$true] %s289
      %295 = dma.vmem_to_hbm [thread:$0]  %s290, 1024, %s5, [#allocation4], 64, 64, 4
    $region45: #{dcdisc_forward.12} parent=1 // pred_fallthru
      _
    // Predicated region
    $region46: #{dcdisc_forward.12} parent=1 // pred_check
      _
    $region47: #{dcdisc_forward.12} parent=1 // pred_check_branch
      %297 = sbr.rel (0) target = $region49
    $region48: #{dcdisc_forward.12} parent=1 // pred_region
      %298 = dma.done [#allocation4], 1024
    $region49: #{dcdisc_forward.12} parent=1 // pred_fallthru
      _
    %299 = vsyncpa [#allocation3], 1
    %300 = vsyncpa [#allocation6], 1
    %301 = vsyncpa [#allocation9], 1
    %302 = vsyncpa [#allocation4], 1

// kernel: dcdisc_forward.13
$region0: #{dcdisc_forward.13}
  #allocation0 [shape = 'u32[]', space=smem, size = 0x4, offset = 0x4, fixed_abs, tag = 'smem constant byte address 0x4 - core index']
  #allocation1 [shape = 'u32[144,128]{1,0:T(1,128)}', space=vmem, size = 0x12000, scoped, tag = 'internal scratch']
  %s0 = inlined_call_operand.hbm [shape: bf16[32,512], index: 0, kind: input, shape index: {}]
  %s1 = inlined_call_operand.hbm [shape: bf16[512,64], index: 1, kind: input, shape index: {}]
  %s2 = inlined_call_operand.hbm [shape: f32[32,64], index: 2, kind: output, shape index: {0}]
  %s3 = inlined_call_operand.hbm [shape: f32[1,64], index: 3, kind: output, shape index: {1}]
  %s4 = inlined_call_operand.hbm [shape: f32[1,64], index: 4, kind: output, shape index: {2}]
  %5 = xla_tuple %s2, %s3, %s4
  %s6 = sld [smem:[#allocation0]]
  $region46: #{dcdisc_forward.13} parent=0
    _
  %s8 = ssub.s32 1, %s6
  %s9 = scalar_select 0, %s8, %s6
  $region1: #{dcdisc_forward.13} parent=0
    #allocation2 [shape = 'u8[32768]{0}', space=vmem, size = 0x8000, scoped, tag = 'input window, operand 0, single buffered']
    #allocation3 [shape = 's32[1]{0}', space=sflag, size = 0x4, scoped, tag = 'scoped memory for dcdisc_forward.13']
    #allocation4 [shape = 's32[1]{0}', space=sflag, size = 0x4, scoped, tag = 'scoped memory for dcdisc_forward.13']
    #allocation5 [shape = 'u8[131072]{0}', space=vmem, size = 0x20000, scoped, tag = 'input window, operand 1, single buffered']
    #allocation6 [shape = 's32[1]{0}', space=sflag, size = 0x4, scoped, tag = 'scoped memory for dcdisc_forward.13']
    #allocation7 [shape = 'u8[16384]{0}', space=vmem, size = 0x4000, scoped, tag = 'output window, operand 0, single buffered']
    #allocation8 [shape = 'u8[512]{0}', space=vmem, size = 0x400, scoped, tag = 'output window, operand 1, single buffered']
    #allocation9 [shape = 's32[1]{0}', space=sflag, size = 0x4, scoped, tag = 'scoped memory for dcdisc_forward.13']
    #allocation10 [shape = 'u8[512]{0}', space=vmem, size = 0x400, scoped, tag = 'output window, operand 2, single buffered']
    %10 = vsyncpa [#allocation3], 0
    %11 = vsyncpa [#allocation6], 0
    %12 = vsyncpa [#allocation4], 0
    %13 = vsyncpa [#allocation9], 0
    // Predicated region
    $region2: #{dcdisc_forward.13} parent=1 // pred_check
      _
    $region3: #{dcdisc_forward.13} parent=1 // pred_check_branch
      %15 = sbr.rel (0) target = $region5
    $region4: #{dcdisc_forward.13} parent=1 // pred_region
      %s17 = ssub.s32 1024, 1024
      %18 = vsyncadd [#allocation3], %s17
      %s19 = sshll.u32 [#allocation2], 4
      %s20 = int_to_ptr.vmem [resolvable:$true] %s19
      %25 = dma.hbm_to_vmem [thread:$0]  %s0, 1024, %s20, [#allocation3], 256, 256, 16
    $region5: #{dcdisc_forward.13} parent=1 // pred_fallthru
      _
    // Predicated region
    $region6: #{dcdisc_forward.13} parent=1 // pred_check
      _
    $region7: #{dcdisc_forward.13} parent=1 // pred_check_branch
      %27 = sbr.rel (0) target = $region9
    $region8: #{dcdisc_forward.13} parent=1 // pred_region
      %s29 = ssub.s32 4096, 4096
      %30 = vsyncadd [#allocation6], %s29
      %s31 = sshll.u32 [#allocation5], 4
      %s32 = int_to_ptr.vmem [resolvable:$true] %s31
      %37 = dma.hbm_to_vmem [thread:$0]  %s1, 4096, %s32, [#allocation6], 64, 64, 4
    $region9: #{dcdisc_forward.13} parent=1 // pred_fallthru
      _
    // Predicated region
    $region10: #{dcdisc_forward.13} parent=1 // pred_check
      _
    $region11: #{dcdisc_forward.13} parent=1 // pred_check_branch
      %39 = sbr.rel (0) target = $region13
    $region12: #{dcdisc_forward.13} parent=1 // pred_region
      %40 = dma.done [#allocation3], 1024
    $region13: #{dcdisc_forward.13} parent=1 // pred_fallthru
      _
    // Predicated region
    $region14: #{dcdisc_forward.13} parent=1 // pred_check
      _
    $region15: #{dcdisc_forward.13} parent=1 // pred_check_branch
      %42 = sbr.rel (0) target = $region17
    $region16: #{dcdisc_forward.13} parent=1 // pred_region
      %43 = dma.done [#allocation6], 4096
    $region17: #{dcdisc_forward.13} parent=1 // pred_fallthru
      _
    %p45 = scmp.eq.s32.totalorder 0, 0
    // Predicated region
    $region18: #{dcdisc_forward.13} parent=1 // pred_check
      %p46 = pneg %p45
    $region19: #{dcdisc_forward.13} parent=1 // pred_check_branch
      %48 = sbr.rel (%p46) target = $region21
    $region20: #{dcdisc_forward.13} parent=1 // pred_region
      %vm49 = vcmask 516096
      %50 = vst.msk [vmem:[#allocation8] sm:$0x1] %vm49, 0.0
      %51 = vst.msk [vmem:[#allocation10] sm:$0x1] %vm49, 0.0
    $region21: #{dcdisc_forward.13} parent=1 // pred_fallthru
      _
    %v52 = vld [vmem:[#allocation2] sm:$0xff]
    %v53 = vld [vmem:[#allocation2 + $0x8] sm:$0xff]
    %v54 = vld [vmem:[#allocation2 + $0x10] sm:$0xff]
    %v55 = vld [vmem:[#allocation2 + $0x18] sm:$0xff]
    %v56 = vld [vmem:[#allocation2 + $0x20] sm:$0xff]
    %v57 = vld [vmem:[#allocation2 + $0x28] sm:$0xff]
    %v58 = vld [vmem:[#allocation2 + $0x30] sm:$0xff]
    %v59 = vld [vmem:[#allocation2 + $0x38] sm:$0xff]
    %v60 = vld [vmem:[#allocation5] sm:$0xf]
    %v61 = vld [vmem:[#allocation5 + $0x4] sm:$0xf]
    %v62 = vld [vmem:[#allocation5 + $0x8] sm:$0xf]
    %v63 = vld [vmem:[#allocation5 + $0xc] sm:$0xf]
    %v64 = vld [vmem:[#allocation5 + $0x10] sm:$0xf]
    %v65 = vld [vmem:[#allocation5 + $0x14] sm:$0xf]
    %v66 = vld [vmem:[#allocation5 + $0x18] sm:$0xf]
    %v67 = vld [vmem:[#allocation5 + $0x1c] sm:$0xf]
    %v68 = vld [vmem:[#allocation5 + $0x20] sm:$0xf]
    %v69 = vld [vmem:[#allocation5 + $0x24] sm:$0xf]
    %v70 = vld [vmem:[#allocation5 + $0x28] sm:$0xf]
    %v71 = vld [vmem:[#allocation5 + $0x2c] sm:$0xf]
    %v72 = vld [vmem:[#allocation5 + $0x30] sm:$0xf]
    %v73 = vld [vmem:[#allocation5 + $0x34] sm:$0xf]
    %v74 = vld [vmem:[#allocation5 + $0x38] sm:$0xf]
    %v75 = vld [vmem:[#allocation5 + $0x3c] sm:$0xf]
    %v76 = vld [vmem:[#allocation5 + $0x40] sm:$0xf]
    %v77 = vld [vmem:[#allocation5 + $0x44] sm:$0xf]
    %v78 = vld [vmem:[#allocation5 + $0x48] sm:$0xf]
    %v79 = vld [vmem:[#allocation5 + $0x4c] sm:$0xf]
    %v80 = vld [vmem:[#allocation5 + $0x50] sm:$0xf]
    %v81 = vld [vmem:[#allocation5 + $0x54] sm:$0xf]
    %v82 = vld [vmem:[#allocation5 + $0x58] sm:$0xf]
    %v83 = vld [vmem:[#allocation5 + $0x5c] sm:$0xf]
    %v84 = vld [vmem:[#allocation5 + $0x60] sm:$0xf]
    %v85 = vld [vmem:[#allocation5 + $0x64] sm:$0xf]
    %v86 = vld [vmem:[#allocation5 + $0x68] sm:$0xf]
    %v87 = vld [vmem:[#allocation5 + $0x6c] sm:$0xf]
    %v88 = vld [vmem:[#allocation5 + $0x70] sm:$0xf]
    %v89 = vld [vmem:[#allocation5 + $0x74] sm:$0xf]
    %v90 = vld [vmem:[#allocation5 + $0x78] sm:$0xf]
    %v91 = vld [vmem:[#allocation5 + $0x7c] sm:$0xf]
    %v92 = vld [vmem:[#allocation5 + $0x80] sm:$0xf]
    %v93 = vld [vmem:[#allocation5 + $0x84] sm:$0xf]
    %v94 = vld [vmem:[#allocation5 + $0x88] sm:$0xf]
    %v95 = vld [vmem:[#allocation5 + $0x8c] sm:$0xf]
    %v96 = vld [vmem:[#allocation5 + $0x90] sm:$0xf]
    %v97 = vld [vmem:[#allocation5 + $0x94] sm:$0xf]
    %v98 = vld [vmem:[#allocation5 + $0x98] sm:$0xf]
    %v99 = vld [vmem:[#allocation5 + $0x9c] sm:$0xf]
    %v100 = vld [vmem:[#allocation5 + $0xa0] sm:$0xf]
    %v101 = vld [vmem:[#allocation5 + $0xa4] sm:$0xf]
    %v102 = vld [vmem:[#allocation5 + $0xa8] sm:$0xf]
    %v103 = vld [vmem:[#allocation5 + $0xac] sm:$0xf]
    %v104 = vld [vmem:[#allocation5 + $0xb0] sm:$0xf]
    %v105 = vld [vmem:[#allocation5 + $0xb4] sm:$0xf]
    %v106 = vld [vmem:[#allocation5 + $0xb8] sm:$0xf]
    %v107 = vld [vmem:[#allocation5 + $0xbc] sm:$0xf]
    %v108 = vld [vmem:[#allocation5 + $0xc0] sm:$0xf]
    %v109 = vld [vmem:[#allocation5 + $0xc4] sm:$0xf]
    %v110 = vld [vmem:[#allocation5 + $0xc8] sm:$0xf]
    %v111 = vld [vmem:[#allocation5 + $0xcc] sm:$0xf]
    %v112 = vld [vmem:[#allocation5 + $0xd0] sm:$0xf]
    %v113 = vld [vmem:[#allocation5 + $0xd4] sm:$0xf]
    %v114 = vld [vmem:[#allocation5 + $0xd8] sm:$0xf]
    %v115 = vld [vmem:[#allocation5 + $0xdc] sm:$0xf]
    %v116 = vld [vmem:[#allocation5 + $0xe0] sm:$0xf]
    %v117 = vld [vmem:[#allocation5 + $0xe4] sm:$0xf]
    %v118 = vld [vmem:[#allocation5 + $0xe8] sm:$0xf]
    %v119 = vld [vmem:[#allocation5 + $0xec] sm:$0xf]
    %v120 = vld [vmem:[#allocation5 + $0xf0] sm:$0xf]
    %v121 = vld [vmem:[#allocation5 + $0xf4] sm:$0xf]
    %v122 = vld [vmem:[#allocation5 + $0xf8] sm:$0xf]
    %v123 = vld [vmem:[#allocation5 + $0xfc] sm:$0xf]
    %v132 = vunpack.c.l.b16 %v52
    %v133 = vunpack.c.h.b16 %v52
    %v134 = vunpack.c.l.b16 %v53
    %v135 = vunpack.c.h.b16 %v53
    %v136 = vunpack.c.l.b16 %v54
    %v137 = vunpack.c.h.b16 %v54
    %v138 = vunpack.c.l.b16 %v55
    %v139 = vunpack.c.h.b16 %v55
    %v140 = vunpack.c.l.b16 %v56
    %v141 = vunpack.c.h.b16 %v56
    %v142 = vunpack.c.l.b16 %v57
    %v143 = vunpack.c.h.b16 %v57
    %v144 = vunpack.c.l.b16 %v58
    %v145 = vunpack.c.h.b16 %v58
    %v146 = vunpack.c.l.b16 %v59
    %v147 = vunpack.c.h.b16 %v59
    %v148 = vpack.c.b16 %v136, %v132
    %v149 = vpack.c.b16 %v137, %v133
    %v150 = vpack.c.b16 %v138, %v134
    %v151 = vpack.c.b16 %v139, %v135
    %v152 = vpack.c.b16 %v144, %v140
    %v153 = vpack.c.b16 %v145, %v141
    %v154 = vpack.c.b16 %v146, %v142
    %v155 = vpack.c.b16 %v147, %v143
    %v228 = vunpack.c.l.b16 %v60
    %v229 = vunpack.c.l.b16 %v61
    %v230 = vunpack.c.l.b16 %v62
    %v231 = vunpack.c.l.b16 %v63
    %v232 = vunpack.c.l.b16 %v64
    %v233 = vunpack.c.l.b16 %v65
    %v234 = vunpack.c.l.b16 %v66
    %v235 = vunpack.c.l.b16 %v67
    %v236 = vunpack.c.l.b16 %v68
    %v237 = vunpack.c.l.b16 %v69
    %v238 = vunpack.c.l.b16 %v70
    %v239 = vunpack.c.l.b16 %v71
    %v240 = vunpack.c.l.b16 %v72
    %v241 = vunpack.c.l.b16 %v73
    %v242 = vunpack.c.l.b16 %v74
    %v243 = vunpack.c.l.b16 %v75
    %v244 = vunpack.c.l.b16 %v76
    %v245 = vunpack.c.l.b16 %v77
    %v246 = vunpack.c.l.b16 %v78
    %v247 = vunpack.c.l.b16 %v79
    %v248 = vunpack.c.l.b16 %v80
    %v249 = vunpack.c.l.b16 %v81
    %v250 = vunpack.c.l.b16 %v82
    %v251 = vunpack.c.l.b16 %v83
    %v252 = vunpack.c.l.b16 %v84
    %v253 = vunpack.c.l.b16 %v85
    %v254 = vunpack.c.l.b16 %v86
    %v255 = vunpack.c.l.b16 %v87
    %v256 = vunpack.c.l.b16 %v88
    %v257 = vunpack.c.l.b16 %v89
    %v258 = vunpack.c.l.b16 %v90
    %v259 = vunpack.c.l.b16 %v91
    %v260 = vunpack.c.l.b16 %v92
    %v261 = vunpack.c.l.b16 %v93
    %v262 = vunpack.c.l.b16 %v94
    %v263 = vunpack.c.l.b16 %v95
    %v264 = vunpack.c.l.b16 %v96
    %v265 = vunpack.c.l.b16 %v97
    %v266 = vunpack.c.l.b16 %v98
    %v267 = vunpack.c.l.b16 %v99
    %v268 = vunpack.c.l.b16 %v100
    %v269 = vunpack.c.l.b16 %v101
    %v270 = vunpack.c.l.b16 %v102
    %v271 = vunpack.c.l.b16 %v103
    %v272 = vunpack.c.l.b16 %v104
    %v273 = vunpack.c.l.b16 %v105
    %v274 = vunpack.c.l.b16 %v106
    %v275 = vunpack.c.l.b16 %v107
    %v276 = vunpack.c.l.b16 %v108
    %v277 = vunpack.c.l.b16 %v109
    %v278 = vunpack.c.l.b16 %v110
    %v279 = vunpack.c.l.b16 %v111
    %v280 = vunpack.c.l.b16 %v112
    %v281 = vunpack.c.l.b16 %v113
    %v282 = vunpack.c.l.b16 %v114
    %v283 = vunpack.c.l.b16 %v115
    %v284 = vunpack.c.l.b16 %v116
    %v285 = vunpack.c.l.b16 %v117
    %v286 = vunpack.c.l.b16 %v118
    %v287 = vunpack.c.l.b16 %v119
    %v288 = vunpack.c.l.b16 %v120
    %v289 = vunpack.c.l.b16 %v121
    %v290 = vunpack.c.l.b16 %v122
    %v291 = vunpack.c.l.b16 %v123
    %v292 = vpack.c.b16 %v229, %v228
    %v293 = vpack.c.b16 %v231, %v230
    %v294 = vpack.c.b16 %v233, %v232
    %v295 = vpack.c.b16 %v235, %v234
    %v296 = vpack.c.b16 %v237, %v236
    %v297 = vpack.c.b16 %v239, %v238
    %v298 = vpack.c.b16 %v241, %v240
    %v299 = vpack.c.b16 %v243, %v242
    %v300 = vpack.c.b16 %v245, %v244
    %v301 = vpack.c.b16 %v247, %v246
    %v302 = vpack.c.b16 %v249, %v248
    %v303 = vpack.c.b16 %v251, %v250
    %v304 = vpack.c.b16 %v253, %v252
    %v305 = vpack.c.b16 %v255, %v254
    %v306 = vpack.c.b16 %v257, %v256
    %v307 = vpack.c.b16 %v259, %v258
    %v308 = vpack.c.b16 %v261, %v260
    %v309 = vpack.c.b16 %v263, %v262
    %v310 = vpack.c.b16 %v265, %v264
    %v311 = vpack.c.b16 %v267, %v266
    %v312 = vpack.c.b16 %v269, %v268
    %v313 = vpack.c.b16 %v271, %v270
    %v314 = vpack.c.b16 %v273, %v272
    %v315 = vpack.c.b16 %v275, %v274
    %v316 = vpack.c.b16 %v277, %v276
    %v317 = vpack.c.b16 %v279, %v278
    %v318 = vpack.c.b16 %v281, %v280
    %v319 = vpack.c.b16 %v283, %v282
    %v320 = vpack.c.b16 %v285, %v284
    %v321 = vpack.c.b16 %v287, %v286
    %v322 = vpack.c.b16 %v289, %v288
    %v323 = vpack.c.b16 %v291, %v290
    %356 = vmatprep.subr.bf16.mxu0 0
    %357 = vmatpush1.bf16.msra.mxu0 %v292
    %358 = vmatprep.subr.bf16.mxu0 0
    %359 = vmatpush1.bf16.msra.mxu0 %v293
    %360 = vmatprep.subr.bf16.mxu0 0
    %361 = vmatpush1.bf16.msra.mxu0 %v294
    %362 = vmatprep.subr.bf16.mxu0 0
    %363 = vmatpush1.bf16.msra.mxu0 %v295
    %364 = vmatprep.subr.bf16.mxu0 0
    %365 = vmatpush1.bf16.msra.mxu0 %v296
    %366 = vmatprep.subr.bf16.mxu0 0
    %367 = vmatpush1.bf16.msra.mxu0 %v297
    %368 = vmatprep.subr.bf16.mxu0 0
    %369 = vmatpush1.bf16.msra.mxu0 %v298
    %370 = vmatprep.subr.bf16.mxu0 0
    %371 = vmatpush1.bf16.msra.mxu0 %v299
    %372 = vmatprep.subr.bf16.mxu0 0
    %373 = vmatpush1.bf16.msra.mxu0 %v300
    %374 = vmatprep.subr.bf16.mxu0 0
    %375 = vmatpush1.bf16.msra.mxu0 %v301
    %376 = vmatprep.subr.bf16.mxu0 0
    %377 = vmatpush1.bf16.msra.mxu0 %v302
    %378 = vmatprep.subr.bf16.mxu0 0
    %379 = vmatpush1.bf16.msra.mxu0 %v303
    %380 = vmatprep.subr.bf16.mxu0 0
    %381 = vmatpush1.bf16.msra.mxu0 %v304
    %382 = vmatprep.subr.bf16.mxu0 0
    %383 = vmatpush1.bf16.msra.mxu0 %v305
    %384 = vmatprep.subr.bf16.mxu0 0
    %385 = vmatpush1.bf16.msra.mxu0 %v306
    %386 = vmatprep.subr.bf16.mxu0 0
    %387 = vmatpush1.bf16.msra.mxu0 %v307
    %388 = vmatprep.mubr.bf16.mxu0 %v149
    %389 = vmatmul.mubr.bf16.gmra.mrb[0].mxu0 %v148
    %v390 = vpop.f32.mrb[0].mxu0
    %v391 = vadd.f32 0.0, %v390
    %v392 = vpop.f32.mrb[0].mxu0
    %v393 = vpop.f32.mrb[0].mxu0
    %v394 = vadd.f32 0.0, %v393
    %v395 = vpop.f32.mrb[0].mxu0
    %396 = vmatprep.mubr.bf16.mxu0 %v153
    %397 = vmatmul.mubr.bf16.gmra.mrb[0].mxu0 %v152
    %v398 = vpop.f32.mrb[0].mxu0
    %v399 = vadd.f32 0.0, %v398
    %v400 = vpop.f32.mrb[0].mxu0
    %v401 = vpop.f32.mrb[0].mxu0
    %v402 = vadd.f32 0.0, %v401
    %v403 = vpop.f32.mrb[0].mxu0
    %404 = vdwg.mxu0
    %405 = vmatprep.subr.bf16.mxu0 0
    %406 = vmatpush1.bf16.msra.mxu0 %v308
    %407 = vmatprep.subr.bf16.mxu0 0
    %408 = vmatpush1.bf16.msra.mxu0 %v309
    %409 = vmatprep.subr.bf16.mxu0 0
    %410 = vmatpush1.bf16.msra.mxu0 %v310
    %411 = vmatprep.subr.bf16.mxu0 0
    %412 = vmatpush1.bf16.msra.mxu0 %v311
    %413 = vmatprep.subr.bf16.mxu0 0
    %414 = vmatpush1.bf16.msra.mxu0 %v312
    %415 = vmatprep.subr.bf16.mxu0 0
    %416 = vmatpush1.bf16.msra.mxu0 %v313
    %417 = vmatprep.subr.bf16.mxu0 0
    %418 = vmatpush1.bf16.msra.mxu0 %v314
    %419 = vmatprep.subr.bf16.mxu0 0
    %420 = vmatpush1.bf16.msra.mxu0 %v315
    %421 = vmatprep.subr.bf16.mxu0 0
    %422 = vmatpush1.bf16.msra.mxu0 %v316
    %423 = vmatprep.subr.bf16.mxu0 0
    %424 = vmatpush1.bf16.msra.mxu0 %v317
    %425 = vmatprep.subr.bf16.mxu0 0
    %426 = vmatpush1.bf16.msra.mxu0 %v318
    %427 = vmatprep.subr.bf16.mxu0 0
    %428 = vmatpush1.bf16.msra.mxu0 %v319
    %429 = vmatprep.subr.bf16.mxu0 0
    %430 = vmatpush1.bf16.msra.mxu0 %v320
    %431 = vmatprep.subr.bf16.mxu0 0
    %432 = vmatpush1.bf16.msra.mxu0 %v321
    %433 = vmatprep.subr.bf16.mxu0 0
    %434 = vmatpush1.bf16.msra.mxu0 %v322
    %435 = vmatprep.subr.bf16.mxu0 0
    %436 = vmatpush1.bf16.msra.mxu0 %v323
    %437 = vmatprep.mubr.bf16.mxu0 %v151
    %438 = vmatmul.mubr.bf16.gmra.mrb[0].mxu0 %v150
    %v439 = vpop.f32.mrb[0].mxu0
    %v440 = vadd.f32 %v391, %v439
    %v441 = vpop.f32.mrb[0].mxu0
    %v442 = vpop.f32.mrb[0].mxu0
    %v443 = vadd.f32 %v394, %v442
    %v444 = vpop.f32.mrb[0].mxu0
    %445 = vmatprep.mubr.bf16.mxu0 %v155
    %446 = vmatmul.mubr.bf16.gmra.mrb[0].mxu0 %v154
    %v447 = vpop.f32.mrb[0].mxu0
    %v448 = vadd.f32 %v399, %v447
    %v449 = vpop.f32.mrb[0].mxu0
    %v450 = vpop.f32.mrb[0].mxu0
    %v451 = vadd.f32 %v402, %v450
    %v452 = vpop.f32.mrb[0].mxu0
    %453 = vdwg.mxu0
    %vm454 = vcmask 523264
    %455 = vst.msk [vmem:[#allocation7] sm:$0xff] %vm454, %v440
    %456 = vst.msk [vmem:[#allocation7 + $0x8] sm:$0xff] %vm454, %v443
    %457 = vst.msk [vmem:[#allocation7 + $0x10] sm:$0xff] %vm454, %v448
    %458 = vst.msk [vmem:[#allocation7 + $0x18] sm:$0xff] %vm454, %v451
    %v459 = vld [vmem:[#allocation8] sm:$0x1]
    %v460 = vsel %vm454, %v440, 0.0
    %v461 = vsel %vm454, %v443, 0.0
    %v462 = vadd.f32 %v460, %v461
    %v463 = vsel %vm454, %v448, 0.0
    %v464 = vadd.f32 %v462, %v463
    %v465 = vsel %vm454, %v451, 0.0
    %v466 = vadd.f32 %v464, %v465
    %v467 = vrot.slane %v466, 4
    %v468 = vadd.f32 %v466, %v467
    %v469 = vrot.slane %v468, 2
    %v470 = vadd.f32 %v468, %v469
    %v471 = vrot.slane %v470, 1
    %v472 = vadd.f32 %v470, %v471
    %v473 = vadd.f32 %v459, %v472
    %vm474 = vcmask 516096
    %475 = vst.msk [vmem:[#allocation8] sm:$0x1] %vm474, %v473
    %v476 = vld [vmem:[#allocation10] sm:$0x1]
    %v477 = vmul.f32 %v440, %v440
    %v478 = vmul.f32 %v443, %v443
    %v479 = vmul.f32 %v448, %v448
    %v480 = vmul.f32 %v451, %v451
    %v481 = vsel %vm454, %v477, 0.0
    %v482 = vsel %vm454, %v478, 0.0
    %v483 = vadd.f32 %v481, %v482
    %v484 = vsel %vm454, %v479, 0.0
    %v485 = vadd.f32 %v483, %v484
    %v486 = vsel %vm454, %v480, 0.0
    %v487 = vadd.f32 %v485, %v486
    %v488 = vrot.slane %v487, 4
    %v489 = vadd.f32 %v487, %v488
    %v490 = vrot.slane %v489, 2
    %v491 = vadd.f32 %v489, %v490
    %v492 = vrot.slane %v491, 1
    %v493 = vadd.f32 %v491, %v492
    %v494 = vadd.f32 %v476, %v493
    %495 = vst.msk [vmem:[#allocation10] sm:$0x1] %vm474, %v494
    // Predicated region
    $region22: #{dcdisc_forward.13} parent=1 // pred_check
      _
    $region23: #{dcdisc_forward.13} parent=1 // pred_check_branch
      %497 = sbr.rel (0) target = $region25
    $region24: #{dcdisc_forward.13} parent=1 // pred_region
      %s499 = ssub.s32 512, 512
      %500 = vsyncadd [#allocation4], %s499
      %s501 = sshll.u32 [#allocation7], 4
      %s502 = int_to_ptr.vmem [resolvable:$true] %s501
      %507 = dma.vmem_to_hbm [thread:$0]  %s502, 512, %s2, [#allocation4], 128, 128, 8
    $region25: #{dcdisc_forward.13} parent=1 // pred_fallthru
      _
    // Predicated region
    $region26: #{dcdisc_forward.13} parent=1 // pred_check
      _
    $region27: #{dcdisc_forward.13} parent=1 // pred_check_branch
      %509 = sbr.rel (0) target = $region29
    $region28: #{dcdisc_forward.13} parent=1 // pred_region
      %s511 = ssub.s32 16, 16
      %512 = vsyncadd [#allocation9], %s511
      %s514 = sshll.u32 [#allocation8], 4
      %s515 = int_to_ptr.vmem [resolvable:$true] %s514
      %517 = dma.vmem_to_hbm [thread:$0]  %s515, 16, %s3, [#allocation9]
    $region29: #{dcdisc_forward.13} parent=1 // pred_fallthru
      _
    // Predicated region
    $region30: #{dcdisc_forward.13} parent=1 // pred_check
      _
    $region31: #{dcdisc_forward.13} parent=1 // pred_check_branch
      %519 = sbr.rel (0) target = $region33
    $region32: #{dcdisc_forward.13} parent=1 // pred_region
      %s521 = ssub.s32 16, 16
      %522 = vsyncadd [#allocation9], %s521
      %s524 = sshll.u32 [#allocation10], 4
      %s525 = int_to_ptr.vmem [resolvable:$true] %s524
      %527 = dma.vmem_to_hbm [thread:$0]  %s525, 16, %s4, [#allocation9]
    $region33: #{dcdisc_forward.13} parent=1 // pred_fallthru
      _
    // Predicated region
    $region34: #{dcdisc_forward.13} parent=1 // pred_check
      _
    $region35: #{dcdisc_forward.13} parent=1 // pred_check_branch
      %529 = sbr.rel (0) target = $region37
    $region36: #{dcdisc_forward.13} parent=1 // pred_region
      %530 = dma.done [#allocation4], 512
    $region37: #{dcdisc_forward.13} parent=1 // pred_fallthru
      _
    // Predicated region
    $region38: #{dcdisc_forward.13} parent=1 // pred_check
      _
    $region39: #{dcdisc_forward.13} parent=1 // pred_check_branch
      %532 = sbr.rel (0) target = $region41
    $region40: #{dcdisc_forward.13} parent=1 // pred_region
      %533 = dma.done [#allocation9], 16
    $region41: #{dcdisc_forward.13} parent=1 // pred_fallthru
      _
    // Predicated region
    $region42: #{dcdisc_forward.13} parent=1 // pred_check
      _
    $region43: #{dcdisc_forward.13} parent=1 // pred_check_branch
      %535 = sbr.rel (0) target = $region45
    $region44: #{dcdisc_forward.13} parent=1 // pred_region
      %536 = dma.done [#allocation9], 16
    $region45: #{dcdisc_forward.13} parent=1 // pred_fallthru
      _
    %537 = vsyncpa [#allocation3], 1
    %538 = vsyncpa [#allocation6], 1
    %539 = vsyncpa [#allocation4], 1
    %540 = vsyncpa [#allocation9], 1

// kernel: dcdisc_forward.14
$region0: #{dcdisc_forward.14}
  #allocation0 [shape = 'u32[]', space=smem, size = 0x4, offset = 0x4, fixed_abs, tag = 'smem constant byte address 0x4 - core index']
  #allocation1 [shape = 'u32[144,128]{1,0:T(1,128)}', space=vmem, size = 0x12000, scoped, tag = 'internal scratch']
  %s0 = inlined_call_operand.hbm [shape: f32[32,64], index: 0, kind: input, shape index: {}]
  %s1 = inlined_call_operand.hbm [shape: f32[1,64], index: 1, kind: input, shape index: {}]
  %s2 = inlined_call_operand.hbm [shape: f32[1,64], index: 2, kind: input, shape index: {}]
  %s3 = inlined_call_operand.hbm [shape: f32[1,64], index: 3, kind: input, shape index: {}]
  %s4 = inlined_call_operand.hbm [shape: f32[1,64], index: 4, kind: input, shape index: {}]
  %s5 = inlined_call_operand.hbm [shape: bf16[32,64], index: 5, kind: output, shape index: {}]
  %s6 = sld [smem:[#allocation0]]
  $region50: #{dcdisc_forward.14} parent=0
    _
  %s8 = ssub.s32 1, %s6
  %s9 = scalar_select 0, %s8, %s6
  $region1: #{dcdisc_forward.14} parent=0
    #allocation2 [shape = 'u8[16384]{0}', space=vmem, size = 0x4000, scoped, tag = 'input window, operand 0, single buffered']
    #allocation3 [shape = 's32[1]{0}', space=sflag, size = 0x4, scoped, tag = 'scoped memory for dcdisc_forward.14']
    #allocation4 [shape = 's32[1]{0}', space=sflag, size = 0x4, scoped, tag = 'scoped memory for dcdisc_forward.14']
    #allocation5 [shape = 'u8[512]{0}', space=vmem, size = 0x400, scoped, tag = 'input window, operand 1, single buffered']
    #allocation6 [shape = 's32[1]{0}', space=sflag, size = 0x4, scoped, tag = 'scoped memory for dcdisc_forward.14']
    #allocation7 [shape = 'u8[512]{0}', space=vmem, size = 0x400, scoped, tag = 'input window, operand 2, single buffered']
    #allocation8 [shape = 'u8[512]{0}', space=vmem, size = 0x400, scoped, tag = 'input window, operand 3, single buffered']
    #allocation9 [shape = 's32[1]{0}', space=sflag, size = 0x4, scoped, tag = 'scoped memory for dcdisc_forward.14']
    #allocation10 [shape = 'u8[512]{0}', space=vmem, size = 0x400, scoped, tag = 'input window, operand 4, single buffered']
    #allocation11 [shape = 'u8[8192]{0}', space=vmem, size = 0x2000, scoped, tag = 'output window, operand 0, single buffered']
    %10 = vsyncpa [#allocation3], 0
    %11 = vsyncpa [#allocation6], 0
    %12 = vsyncpa [#allocation9], 0
    %13 = vsyncpa [#allocation4], 0
    // Predicated region
    $region2: #{dcdisc_forward.14} parent=1 // pred_check
      _
    $region3: #{dcdisc_forward.14} parent=1 // pred_check_branch
      %15 = sbr.rel (0) target = $region5
    $region4: #{dcdisc_forward.14} parent=1 // pred_region
      %s17 = ssub.s32 512, 512
      %18 = vsyncadd [#allocation3], %s17
      %s19 = sshll.u32 [#allocation2], 4
      %s20 = int_to_ptr.vmem [resolvable:$true] %s19
      %25 = dma.hbm_to_vmem [thread:$0]  %s0, 512, %s20, [#allocation3], 128, 128, 8
    $region5: #{dcdisc_forward.14} parent=1 // pred_fallthru
      _
    // Predicated region
    $region6: #{dcdisc_forward.14} parent=1 // pred_check
      _
    $region7: #{dcdisc_forward.14} parent=1 // pred_check_branch
      %27 = sbr.rel (0) target = $region9
    $region8: #{dcdisc_forward.14} parent=1 // pred_region
      %s29 = ssub.s32 16, 16
      %30 = vsyncadd [#allocation6], %s29
      %s32 = sshll.u32 [#allocation5], 4
      %s33 = int_to_ptr.vmem [resolvable:$true] %s32
      %35 = dma.hbm_to_vmem [thread:$0]  %s1, 16, %s33, [#allocation6]
    $region9: #{dcdisc_forward.14} parent=1 // pred_fallthru
      _
    // Predicated region
    $region10: #{dcdisc_forward.14} parent=1 // pred_check
      _
    $region11: #{dcdisc_forward.14} parent=1 // pred_check_branch
      %37 = sbr.rel (0) target = $region13
    $region12: #{dcdisc_forward.14} parent=1 // pred_region
      %s39 = ssub.s32 16, 16
      %40 = vsyncadd [#allocation6], %s39
      %s42 = sshll.u32 [#allocation7], 4
      %s43 = int_to_ptr.vmem [resolvable:$true] %s42
      %45 = dma.hbm_to_vmem [thread:$0]  %s2, 16, %s43, [#allocation6]
    $region13: #{dcdisc_forward.14} parent=1 // pred_fallthru
      _
    // Predicated region
    $region14: #{dcdisc_forward.14} parent=1 // pred_check
      _
    $region15: #{dcdisc_forward.14} parent=1 // pred_check_branch
      %47 = sbr.rel (0) target = $region17
    $region16: #{dcdisc_forward.14} parent=1 // pred_region
      %s49 = ssub.s32 16, 16
      %50 = vsyncadd [#allocation9], %s49
      %s52 = sshll.u32 [#allocation8], 4
      %s53 = int_to_ptr.vmem [resolvable:$true] %s52
      %55 = dma.hbm_to_vmem [thread:$0]  %s3, 16, %s53, [#allocation9]
    $region17: #{dcdisc_forward.14} parent=1 // pred_fallthru
      _
    // Predicated region
    $region18: #{dcdisc_forward.14} parent=1 // pred_check
      _
    $region19: #{dcdisc_forward.14} parent=1 // pred_check_branch
      %57 = sbr.rel (0) target = $region21
    $region20: #{dcdisc_forward.14} parent=1 // pred_region
      %s59 = ssub.s32 16, 16
      %60 = vsyncadd [#allocation9], %s59
      %s62 = sshll.u32 [#allocation10], 4
      %s63 = int_to_ptr.vmem [resolvable:$true] %s62
      %65 = dma.hbm_to_vmem [thread:$0]  %s4, 16, %s63, [#allocation9]
    $region21: #{dcdisc_forward.14} parent=1 // pred_fallthru
      _
    // Predicated region
    $region22: #{dcdisc_forward.14} parent=1 // pred_check
      _
    $region23: #{dcdisc_forward.14} parent=1 // pred_check_branch
      %67 = sbr.rel (0) target = $region25
    $region24: #{dcdisc_forward.14} parent=1 // pred_region
      %68 = dma.done [#allocation3], 512
    $region25: #{dcdisc_forward.14} parent=1 // pred_fallthru
      _
    // Predicated region
    $region26: #{dcdisc_forward.14} parent=1 // pred_check
      _
    $region27: #{dcdisc_forward.14} parent=1 // pred_check_branch
      %70 = sbr.rel (0) target = $region29
    $region28: #{dcdisc_forward.14} parent=1 // pred_region
      %71 = dma.done [#allocation6], 16
    $region29: #{dcdisc_forward.14} parent=1 // pred_fallthru
      _
    // Predicated region
    $region30: #{dcdisc_forward.14} parent=1 // pred_check
      _
    $region31: #{dcdisc_forward.14} parent=1 // pred_check_branch
      %73 = sbr.rel (0) target = $region33
    $region32: #{dcdisc_forward.14} parent=1 // pred_region
      %74 = dma.done [#allocation6], 16
    $region33: #{dcdisc_forward.14} parent=1 // pred_fallthru
      _
    // Predicated region
    $region34: #{dcdisc_forward.14} parent=1 // pred_check
      _
    $region35: #{dcdisc_forward.14} parent=1 // pred_check_branch
      %76 = sbr.rel (0) target = $region37
    $region36: #{dcdisc_forward.14} parent=1 // pred_region
      %77 = dma.done [#allocation9], 16
    $region37: #{dcdisc_forward.14} parent=1 // pred_fallthru
      _
    // Predicated region
    $region38: #{dcdisc_forward.14} parent=1 // pred_check
      _
    $region39: #{dcdisc_forward.14} parent=1 // pred_check_branch
      %79 = sbr.rel (0) target = $region41
    $region40: #{dcdisc_forward.14} parent=1 // pred_region
      %80 = dma.done [#allocation9], 16
    $region41: #{dcdisc_forward.14} parent=1 // pred_fallthru
      _
    %v81 = vld [vmem:[#allocation5] sm:$0x1]
    %v82 = vmul.f32 %v81, 0.03125
    %v83 = vld [vmem:[#allocation7] sm:$0x1]
    %v84 = vmul.f32 %v83, 0.03125
    %v85 = vmul.f32 %v82, %v82
    %v86 = vsub.f32 %v84, %v85
    %v87 = vmax.f32 %v86, 0.0
    %v88 = vld [vmem:[#allocation8] sm:$0x1]
    %v89 = vadd.f32 %v87, 1e-05
    %v90 = vrsqrt.pop %v89
    %v91 = vmul.f32 %v88, %v90
    %v92 = vld [vmem:[#allocation10] sm:$0x1]
    %v93 = vmul.f32 %v82, %v91
    %v94 = vsub.f32 %v92, %v93
    %v95 = vld [vmem:[#allocation2] sm:$0xff]
    %v96 = vld [vmem:[#allocation2 + $0x8] sm:$0xff]
    %v97 = vld [vmem:[#allocation2 + $0x10] sm:$0xff]
    %v98 = vld [vmem:[#allocation2 + $0x18] sm:$0xff]
    %v100 = vlaneseq
    %v101 = vshrl.u32 %v100, 7
    %v102 = vsub.s32 0, %v101
    %v103 = vrot.slane %v91, %v102
    %v105 = vmul.f32 %v95, %v103
    %v106 = vmul.f32 %v96, %v103
    %v107 = vmul.f32 %v97, %v103
    %v108 = vmul.f32 %v98, %v103
    %v110 = vlaneseq
    %v111 = vshrl.u32 %v110, 7
    %v112 = vsub.s32 0, %v111
    %v113 = vrot.slane %v94, %v112
    %v115 = vadd.f32 %v105, %v113
    %v116 = vadd.f32 %v106, %v113
    %v117 = vadd.f32 %v107, %v113
    %v118 = vadd.f32 %v108, %v113
    %vm119 = vcmp.ge.f32.partialorder %v115, 0.0
    %vm120 = vcmp.ge.f32.partialorder %v116, 0.0
    %vm121 = vcmp.ge.f32.partialorder %v117, 0.0
    %vm122 = vcmp.ge.f32.partialorder %v118, 0.0
    %v123 = vmul.f32 %v115, 0.2
    %v124 = vmul.f32 %v116, 0.2
    %v125 = vmul.f32 %v117, 0.2
    %v126 = vmul.f32 %v118, 0.2
    %v127 = vsel %vm119, %v115, %v123
    %v128 = vsel %vm120, %v116, %v124
    %v129 = vsel %vm121, %v117, %v125
    %v130 = vsel %vm122, %v118, %v126
    %v131 = vpack.c.bf16 %v128, %v127
    %v132 = vpack.c.bf16 %v130, %v129
    %v135 = vunpack.c.l.b16 %v131
    %v136 = vunpack.c.h.b16 %v131
    %v137 = vunpack.c.l.b16 %v132
    %v138 = vunpack.c.h.b16 %v132
    %v139 = vpack.c.b16 %v135, %v135
    %v140 = vpack.c.b16 %v136, %v136
    %v141 = vpack.c.b16 %v137, %v137
    %v142 = vpack.c.b16 %v138, %v138
    %vm147 = vcmask 519168
    %148 = vst.msk [vmem:[#allocation11] sm:$0xf] %vm147, %v139
    %149 = vst.msk [vmem:[#allocation11 + $0x4] sm:$0xf] %vm147, %v140
    %150 = vst.msk [vmem:[#allocation11 + $0x8] sm:$0xf] %vm147, %v141
    %151 = vst.msk [vmem:[#allocation11 + $0xc] sm:$0xf] %vm147, %v142
    // Predicated region
    $region42: #{dcdisc_forward.14} parent=1 // pred_check
      _
    $region43: #{dcdisc_forward.14} parent=1 // pred_check_branch
      %153 = sbr.rel (0) target = $region45
    $region44: #{dcdisc_forward.14} parent=1 // pred_region
      %s155 = ssub.s32 256, 256
      %156 = vsyncadd [#allocation4], %s155
      %s157 = sshll.u32 [#allocation11], 4
      %s158 = int_to_ptr.vmem [resolvable:$true] %s157
      %163 = dma.vmem_to_hbm [thread:$0]  %s158, 256, %s5, [#allocation4], 64, 64, 4
    $region45: #{dcdisc_forward.14} parent=1 // pred_fallthru
      _
    // Predicated region
    $region46: #{dcdisc_forward.14} parent=1 // pred_check
      _
    $region47: #{dcdisc_forward.14} parent=1 // pred_check_branch
      %165 = sbr.rel (0) target = $region49
    $region48: #{dcdisc_forward.14} parent=1 // pred_region
      %166 = dma.done [#allocation4], 256
    $region49: #{dcdisc_forward.14} parent=1 // pred_fallthru
      _
    %167 = vsyncpa [#allocation3], 1
    %168 = vsyncpa [#allocation6], 1
    %169 = vsyncpa [#allocation9], 1
    %170 = vsyncpa [#allocation4], 1

// kernel: dcdisc_forward.15
$region0: #{dcdisc_forward.15}
  #allocation0 [shape = 'u32[]', space=smem, size = 0x4, offset = 0x4, fixed_abs, tag = 'smem constant byte address 0x4 - core index']
  #allocation1 [shape = 'u32[144,128]{1,0:T(1,128)}', space=vmem, size = 0x12000, scoped, tag = 'internal scratch']
  %s0 = inlined_call_operand.hbm [shape: bf16[16,1024], index: 0, kind: input, shape index: {}]
  %s1 = inlined_call_operand.hbm [shape: bf16[1024,128], index: 1, kind: input, shape index: {}]
  %s2 = inlined_call_operand.hbm [shape: f32[1,128], index: 2, kind: input, shape index: {}]
  %s3 = inlined_call_operand.hbm [shape: f32[16,128], index: 3, kind: output, shape index: {}]
  %s4 = sld [smem:[#allocation0]]
  $region34: #{dcdisc_forward.15} parent=0
    _
  %s6 = ssub.s32 1, %s4
  %s7 = scalar_select 0, %s6, %s4
  $region1: #{dcdisc_forward.15} parent=0
    #allocation2 [shape = 'u8[32768]{0}', space=vmem, size = 0x8000, scoped, tag = 'input window, operand 0, single buffered']
    #allocation3 [shape = 's32[1]{0}', space=sflag, size = 0x4, scoped, tag = 'scoped memory for dcdisc_forward.15']
    #allocation4 [shape = 's32[1]{0}', space=sflag, size = 0x4, scoped, tag = 'scoped memory for dcdisc_forward.15']
    #allocation5 [shape = 'u8[262144]{0}', space=vmem, size = 0x40000, scoped, tag = 'input window, operand 1, single buffered']
    #allocation6 [shape = 's32[1]{0}', space=sflag, size = 0x4, scoped, tag = 'scoped memory for dcdisc_forward.15']
    #allocation7 [shape = 'u8[512]{0}', space=vmem, size = 0x400, scoped, tag = 'input window, operand 2, single buffered']
    #allocation8 [shape = 'u8[8192]{0}', space=vmem, size = 0x2000, scoped, tag = 'output window, operand 0, single buffered']
    %8 = vsyncpa [#allocation3], 0
    %9 = vsyncpa [#allocation6], 0
    %10 = vsyncpa [#allocation4], 0
    // Predicated region
    $region2: #{dcdisc_forward.15} parent=1 // pred_check
      _
    $region3: #{dcdisc_forward.15} parent=1 // pred_check_branch
      %12 = sbr.rel (0) target = $region5
    $region4: #{dcdisc_forward.15} parent=1 // pred_region
      %s14 = ssub.s32 1024, 1024
      %15 = vsyncadd [#allocation3], %s14
      %s16 = sshll.u32 [#allocation2], 4
      %s17 = int_to_ptr.vmem [resolvable:$true] %s16
      %22 = dma.hbm_to_vmem [thread:$0]  %s0, 1024, %s17, [#allocation3], 512, 512, 32
    $region5: #{dcdisc_forward.15} parent=1 // pred_fallthru
      _
    // Predicated region
    $region6: #{dcdisc_forward.15} parent=1 // pred_check
      _
    $region7: #{dcdisc_forward.15} parent=1 // pred_check_branch
      %24 = sbr.rel (0) target = $region9
    $region8: #{dcdisc_forward.15} parent=1 // pred_region
      %s26 = ssub.s32 8192, 8192
      %27 = vsyncadd [#allocation6], %s26
      %s28 = sshll.u32 [#allocation5], 4
      %s29 = int_to_ptr.vmem [resolvable:$true] %s28
      %34 = dma.hbm_to_vmem [thread:$0]  %s1, 8192, %s29, [#allocation6], 64, 64, 4
    $region9: #{dcdisc_forward.15} parent=1 // pred_fallthru
      _
    // Predicated region
    $region10: #{dcdisc_forward.15} parent=1 // pred_check
      _
    $region11: #{dcdisc_forward.15} parent=1 // pred_check_branch
      %36 = sbr.rel (0) target = $region13
    $region12: #{dcdisc_forward.15} parent=1 // pred_region
      %s38 = ssub.s32 16, 16
      %39 = vsyncadd [#allocation6], %s38
      %s41 = sshll.u32 [#allocation7], 4
      %s42 = int_to_ptr.vmem [resolvable:$true] %s41
      %44 = dma.hbm_to_vmem [thread:$0]  %s2, 16, %s42, [#allocation6]
    $region13: #{dcdisc_forward.15} parent=1 // pred_fallthru
      _
    // Predicated region
    $region14: #{dcdisc_forward.15} parent=1 // pred_check
      _
    $region15: #{dcdisc_forward.15} parent=1 // pred_check_branch
      %46 = sbr.rel (0) target = $region17
    $region16: #{dcdisc_forward.15} parent=1 // pred_region
      %47 = dma.done [#allocation3], 1024
    $region17: #{dcdisc_forward.15} parent=1 // pred_fallthru
      _
    // Predicated region
    $region18: #{dcdisc_forward.15} parent=1 // pred_check
      _
    $region19: #{dcdisc_forward.15} parent=1 // pred_check_branch
      %49 = sbr.rel (0) target = $region21
    $region20: #{dcdisc_forward.15} parent=1 // pred_region
      %50 = dma.done [#allocation6], 8192
    $region21: #{dcdisc_forward.15} parent=1 // pred_fallthru
      _
    // Predicated region
    $region22: #{dcdisc_forward.15} parent=1 // pred_check
      _
    $region23: #{dcdisc_forward.15} parent=1 // pred_check_branch
      %52 = sbr.rel (0) target = $region25
    $region24: #{dcdisc_forward.15} parent=1 // pred_region
      %53 = dma.done [#allocation6], 16
    $region25: #{dcdisc_forward.15} parent=1 // pred_fallthru
      _
    %v55 = vld [vmem:[#allocation2] sm:$0xff]
    %v56 = vld [vmem:[#allocation2 + $0x8] sm:$0xff]
    %v57 = vld [vmem:[#allocation2 + $0x10] sm:$0xff]
    %v58 = vld [vmem:[#allocation2 + $0x18] sm:$0xff]
    %v59 = vld [vmem:[#allocation2 + $0x20] sm:$0xff]
    %v60 = vld [vmem:[#allocation2 + $0x28] sm:$0xff]
    %v61 = vld [vmem:[#allocation2 + $0x30] sm:$0xff]
    %v62 = vld [vmem:[#allocation2 + $0x38] sm:$0xff]
    %v63 = vld [vmem:[#allocation5] sm:$0xf]
    %v64 = vld [vmem:[#allocation5 + $0x4] sm:$0xf]
    %v65 = vld [vmem:[#allocation5 + $0x8] sm:$0xf]
    %v66 = vld [vmem:[#allocation5 + $0xc] sm:$0xf]
    %v67 = vld [vmem:[#allocation5 + $0x10] sm:$0xf]
    %v68 = vld [vmem:[#allocation5 + $0x14] sm:$0xf]
    %v69 = vld [vmem:[#allocation5 + $0x18] sm:$0xf]
    %v70 = vld [vmem:[#allocation5 + $0x1c] sm:$0xf]
    %v71 = vld [vmem:[#allocation5 + $0x20] sm:$0xf]
    %v72 = vld [vmem:[#allocation5 + $0x24] sm:$0xf]
    %v73 = vld [vmem:[#allocation5 + $0x28] sm:$0xf]
    %v74 = vld [vmem:[#allocation5 + $0x2c] sm:$0xf]
    %v75 = vld [vmem:[#allocation5 + $0x30] sm:$0xf]
    %v76 = vld [vmem:[#allocation5 + $0x34] sm:$0xf]
    %v77 = vld [vmem:[#allocation5 + $0x38] sm:$0xf]
    %v78 = vld [vmem:[#allocation5 + $0x3c] sm:$0xf]
    %v79 = vld [vmem:[#allocation5 + $0x40] sm:$0xf]
    %v80 = vld [vmem:[#allocation5 + $0x44] sm:$0xf]
    %v81 = vld [vmem:[#allocation5 + $0x48] sm:$0xf]
    %v82 = vld [vmem:[#allocation5 + $0x4c] sm:$0xf]
    %v83 = vld [vmem:[#allocation5 + $0x50] sm:$0xf]
    %v84 = vld [vmem:[#allocation5 + $0x54] sm:$0xf]
    %v85 = vld [vmem:[#allocation5 + $0x58] sm:$0xf]
    %v86 = vld [vmem:[#allocation5 + $0x5c] sm:$0xf]
    %v87 = vld [vmem:[#allocation5 + $0x60] sm:$0xf]
    %v88 = vld [vmem:[#allocation5 + $0x64] sm:$0xf]
    %v89 = vld [vmem:[#allocation5 + $0x68] sm:$0xf]
    %v90 = vld [vmem:[#allocation5 + $0x6c] sm:$0xf]
    %v91 = vld [vmem:[#allocation5 + $0x70] sm:$0xf]
    %v92 = vld [vmem:[#allocation5 + $0x74] sm:$0xf]
    %v93 = vld [vmem:[#allocation5 + $0x78] sm:$0xf]
    %v94 = vld [vmem:[#allocation5 + $0x7c] sm:$0xf]
    %v95 = vld [vmem:[#allocation5 + $0x80] sm:$0xf]
    %v96 = vld [vmem:[#allocation5 + $0x84] sm:$0xf]
    %v97 = vld [vmem:[#allocation5 + $0x88] sm:$0xf]
    %v98 = vld [vmem:[#allocation5 + $0x8c] sm:$0xf]
    %v99 = vld [vmem:[#allocation5 + $0x90] sm:$0xf]
    %v100 = vld [vmem:[#allocation5 + $0x94] sm:$0xf]
    %v101 = vld [vmem:[#allocation5 + $0x98] sm:$0xf]
    %v102 = vld [vmem:[#allocation5 + $0x9c] sm:$0xf]
    %v103 = vld [vmem:[#allocation5 + $0xa0] sm:$0xf]
    %v104 = vld [vmem:[#allocation5 + $0xa4] sm:$0xf]
    %v105 = vld [vmem:[#allocation5 + $0xa8] sm:$0xf]
    %v106 = vld [vmem:[#allocation5 + $0xac] sm:$0xf]
    %v107 = vld [vmem:[#allocation5 + $0xb0] sm:$0xf]
    %v108 = vld [vmem:[#allocation5 + $0xb4] sm:$0xf]
    %v109 = vld [vmem:[#allocation5 + $0xb8] sm:$0xf]
    %v110 = vld [vmem:[#allocation5 + $0xbc] sm:$0xf]
    %v111 = vld [vmem:[#allocation5 + $0xc0] sm:$0xf]
    %v112 = vld [vmem:[#allocation5 + $0xc4] sm:$0xf]
    %v113 = vld [vmem:[#allocation5 + $0xc8] sm:$0xf]
    %v114 = vld [vmem:[#allocation5 + $0xcc] sm:$0xf]
    %v115 = vld [vmem:[#allocation5 + $0xd0] sm:$0xf]
    %v116 = vld [vmem:[#allocation5 + $0xd4] sm:$0xf]
    %v117 = vld [vmem:[#allocation5 + $0xd8] sm:$0xf]
    %v118 = vld [vmem:[#allocation5 + $0xdc] sm:$0xf]
    %v119 = vld [vmem:[#allocation5 + $0xe0] sm:$0xf]
    %v120 = vld [vmem:[#allocation5 + $0xe4] sm:$0xf]
    %v121 = vld [vmem:[#allocation5 + $0xe8] sm:$0xf]
    %v122 = vld [vmem:[#allocation5 + $0xec] sm:$0xf]
    %v123 = vld [vmem:[#allocation5 + $0xf0] sm:$0xf]
    %v124 = vld [vmem:[#allocation5 + $0xf4] sm:$0xf]
    %v125 = vld [vmem:[#allocation5 + $0xf8] sm:$0xf]
    %v126 = vld [vmem:[#allocation5 + $0xfc] sm:$0xf]
    %v127 = vld [vmem:[#allocation5 + $0x100] sm:$0xf]
    %v128 = vld [vmem:[#allocation5 + $0x104] sm:$0xf]
    %v129 = vld [vmem:[#allocation5 + $0x108] sm:$0xf]
    %v130 = vld [vmem:[#allocation5 + $0x10c] sm:$0xf]
    %v131 = vld [vmem:[#allocation5 + $0x110] sm:$0xf]
    %v132 = vld [vmem:[#allocation5 + $0x114] sm:$0xf]
    %v133 = vld [vmem:[#allocation5 + $0x118] sm:$0xf]
    %v134 = vld [vmem:[#allocation5 + $0x11c] sm:$0xf]
    %v135 = vld [vmem:[#allocation5 + $0x120] sm:$0xf]
    %v136 = vld [vmem:[#allocation5 + $0x124] sm:$0xf]
    %v137 = vld [vmem:[#allocation5 + $0x128] sm:$0xf]
    %v138 = vld [vmem:[#allocation5 + $0x12c] sm:$0xf]
    %v139 = vld [vmem:[#allocation5 + $0x130] sm:$0xf]
    %v140 = vld [vmem:[#allocation5 + $0x134] sm:$0xf]
    %v141 = vld [vmem:[#allocation5 + $0x138] sm:$0xf]
    %v142 = vld [vmem:[#allocation5 + $0x13c] sm:$0xf]
    %v143 = vld [vmem:[#allocation5 + $0x140] sm:$0xf]
    %v144 = vld [vmem:[#allocation5 + $0x144] sm:$0xf]
    %v145 = vld [vmem:[#allocation5 + $0x148] sm:$0xf]
    %v146 = vld [vmem:[#allocation5 + $0x14c] sm:$0xf]
    %v147 = vld [vmem:[#allocation5 + $0x150] sm:$0xf]
    %v148 = vld [vmem:[#allocation5 + $0x154] sm:$0xf]
    %v149 = vld [vmem:[#allocation5 + $0x158] sm:$0xf]
    %v150 = vld [vmem:[#allocation5 + $0x15c] sm:$0xf]
    %v151 = vld [vmem:[#allocation5 + $0x160] sm:$0xf]
    %v152 = vld [vmem:[#allocation5 + $0x164] sm:$0xf]
    %v153 = vld [vmem:[#allocation5 + $0x168] sm:$0xf]
    %v154 = vld [vmem:[#allocation5 + $0x16c] sm:$0xf]
    %v155 = vld [vmem:[#allocation5 + $0x170] sm:$0xf]
    %v156 = vld [vmem:[#allocation5 + $0x174] sm:$0xf]
    %v157 = vld [vmem:[#allocation5 + $0x178] sm:$0xf]
    %v158 = vld [vmem:[#allocation5 + $0x17c] sm:$0xf]
    %v159 = vld [vmem:[#allocation5 + $0x180] sm:$0xf]
    %v160 = vld [vmem:[#allocation5 + $0x184] sm:$0xf]
    %v161 = vld [vmem:[#allocation5 + $0x188] sm:$0xf]
    %v162 = vld [vmem:[#allocation5 + $0x18c] sm:$0xf]
    %v163 = vld [vmem:[#allocation5 + $0x190] sm:$0xf]
    %v164 = vld [vmem:[#allocation5 + $0x194] sm:$0xf]
    %v165 = vld [vmem:[#allocation5 + $0x198] sm:$0xf]
    %v166 = vld [vmem:[#allocation5 + $0x19c] sm:$0xf]
    %v167 = vld [vmem:[#allocation5 + $0x1a0] sm:$0xf]
    %v168 = vld [vmem:[#allocation5 + $0x1a4] sm:$0xf]
    %v169 = vld [vmem:[#allocation5 + $0x1a8] sm:$0xf]
    %v170 = vld [vmem:[#allocation5 + $0x1ac] sm:$0xf]
    %v171 = vld [vmem:[#allocation5 + $0x1b0] sm:$0xf]
    %v172 = vld [vmem:[#allocation5 + $0x1b4] sm:$0xf]
    %v173 = vld [vmem:[#allocation5 + $0x1b8] sm:$0xf]
    %v174 = vld [vmem:[#allocation5 + $0x1bc] sm:$0xf]
    %v175 = vld [vmem:[#allocation5 + $0x1c0] sm:$0xf]
    %v176 = vld [vmem:[#allocation5 + $0x1c4] sm:$0xf]
    %v177 = vld [vmem:[#allocation5 + $0x1c8] sm:$0xf]
    %v178 = vld [vmem:[#allocation5 + $0x1cc] sm:$0xf]
    %v179 = vld [vmem:[#allocation5 + $0x1d0] sm:$0xf]
    %v180 = vld [vmem:[#allocation5 + $0x1d4] sm:$0xf]
    %v181 = vld [vmem:[#allocation5 + $0x1d8] sm:$0xf]
    %v182 = vld [vmem:[#allocation5 + $0x1dc] sm:$0xf]
    %v183 = vld [vmem:[#allocation5 + $0x1e0] sm:$0xf]
    %v184 = vld [vmem:[#allocation5 + $0x1e4] sm:$0xf]
    %v185 = vld [vmem:[#allocation5 + $0x1e8] sm:$0xf]
    %v186 = vld [vmem:[#allocation5 + $0x1ec] sm:$0xf]
    %v187 = vld [vmem:[#allocation5 + $0x1f0] sm:$0xf]
    %v188 = vld [vmem:[#allocation5 + $0x1f4] sm:$0xf]
    %v189 = vld [vmem:[#allocation5 + $0x1f8] sm:$0xf]
    %v190 = vld [vmem:[#allocation5 + $0x1fc] sm:$0xf]
    %v191 = vld [vmem:[#allocation7] sm:$0x1]
    %v193 = vlaneseq
    %v194 = vshrl.u32 %v193, 7
    %v195 = vsub.s32 0, %v194
    %v196 = vrot.slane %v191, %v195
    %v206 = vunpack.c.l.b16 %v55
    %v207 = vunpack.c.h.b16 %v55
    %v208 = vunpack.c.l.b16 %v56
    %v209 = vunpack.c.h.b16 %v56
    %v210 = vunpack.c.l.b16 %v57
    %v211 = vunpack.c.h.b16 %v57
    %v212 = vunpack.c.l.b16 %v58
    %v213 = vunpack.c.h.b16 %v58
    %v214 = vunpack.c.l.b16 %v59
    %v215 = vunpack.c.h.b16 %v59
    %v216 = vunpack.c.l.b16 %v60
    %v217 = vunpack.c.h.b16 %v60
    %v218 = vunpack.c.l.b16 %v61
    %v219 = vunpack.c.h.b16 %v61
    %v220 = vunpack.c.l.b16 %v62
    %v221 = vunpack.c.h.b16 %v62
    %v222 = vpack.c.b16 %v214, %v206
    %v223 = vpack.c.b16 %v215, %v207
    %v224 = vpack.c.b16 %v216, %v208
    %v225 = vpack.c.b16 %v217, %v209
    %v226 = vpack.c.b16 %v218, %v210
    %v227 = vpack.c.b16 %v219, %v211
    %v228 = vpack.c.b16 %v220, %v212
    %v229 = vpack.c.b16 %v221, %v213
    %v366 = vunpack.c.l.b16 %v63
    %v367 = vunpack.c.l.b16 %v64
    %v368 = vunpack.c.l.b16 %v65
    %v369 = vunpack.c.l.b16 %v66
    %v370 = vunpack.c.l.b16 %v67
    %v371 = vunpack.c.l.b16 %v68
    %v372 = vunpack.c.l.b16 %v69
    %v373 = vunpack.c.l.b16 %v70
    %v374 = vunpack.c.l.b16 %v71
    %v375 = vunpack.c.l.b16 %v72
    %v376 = vunpack.c.l.b16 %v73
    %v377 = vunpack.c.l.b16 %v74
    %v378 = vunpack.c.l.b16 %v75
    %v379 = vunpack.c.l.b16 %v76
    %v380 = vunpack.c.l.b16 %v77
    %v381 = vunpack.c.l.b16 %v78
    %v382 = vunpack.c.l.b16 %v79
    %v383 = vunpack.c.l.b16 %v80
    %v384 = vunpack.c.l.b16 %v81
    %v385 = vunpack.c.l.b16 %v82
    %v386 = vunpack.c.l.b16 %v83
    %v387 = vunpack.c.l.b16 %v84
    %v388 = vunpack.c.l.b16 %v85
    %v389 = vunpack.c.l.b16 %v86
    %v390 = vunpack.c.l.b16 %v87
    %v391 = vunpack.c.l.b16 %v88
    %v392 = vunpack.c.l.b16 %v89
    %v393 = vunpack.c.l.b16 %v90
    %v394 = vunpack.c.l.b16 %v91
    %v395 = vunpack.c.l.b16 %v92
    %v396 = vunpack.c.l.b16 %v93
    %v397 = vunpack.c.l.b16 %v94
    %v398 = vunpack.c.l.b16 %v95
    %v399 = vunpack.c.l.b16 %v96
    %v400 = vunpack.c.l.b16 %v97
    %v401 = vunpack.c.l.b16 %v98
    %v402 = vunpack.c.l.b16 %v99
    %v403 = vunpack.c.l.b16 %v100
    %v404 = vunpack.c.l.b16 %v101
    %v405 = vunpack.c.l.b16 %v102
    %v406 = vunpack.c.l.b16 %v103
    %v407 = vunpack.c.l.b16 %v104
    %v408 = vunpack.c.l.b16 %v105
    %v409 = vunpack.c.l.b16 %v106
    %v410 = vunpack.c.l.b16 %v107
    %v411 = vunpack.c.l.b16 %v108
    %v412 = vunpack.c.l.b16 %v109
    %v413 = vunpack.c.l.b16 %v110
    %v414 = vunpack.c.l.b16 %v111
    %v415 = vunpack.c.l.b16 %v112
    %v416 = vunpack.c.l.b16 %v113
    %v417 = vunpack.c.l.b16 %v114
    %v418 = vunpack.c.l.b16 %v115
    %v419 = vunpack.c.l.b16 %v116
    %v420 = vunpack.c.l.b16 %v117
    %v421 = vunpack.c.l.b16 %v118
    %v422 = vunpack.c.l.b16 %v119
    %v423 = vunpack.c.l.b16 %v120
    %v424 = vunpack.c.l.b16 %v121
    %v425 = vunpack.c.l.b16 %v122
    %v426 = vunpack.c.l.b16 %v123
    %v427 = vunpack.c.l.b16 %v124
    %v428 = vunpack.c.l.b16 %v125
    %v429 = vunpack.c.l.b16 %v126
    %v430 = vunpack.c.l.b16 %v127
    %v431 = vunpack.c.l.b16 %v128
    %v432 = vunpack.c.l.b16 %v129
    %v433 = vunpack.c.l.b16 %v130
    %v434 = vunpack.c.l.b16 %v131
    %v435 = vunpack.c.l.b16 %v132
    %v436 = vunpack.c.l.b16 %v133
    %v437 = vunpack.c.l.b16 %v134
    %v438 = vunpack.c.l.b16 %v135
    %v439 = vunpack.c.l.b16 %v136
    %v440 = vunpack.c.l.b16 %v137
    %v441 = vunpack.c.l.b16 %v138
    %v442 = vunpack.c.l.b16 %v139
    %v443 = vunpack.c.l.b16 %v140
    %v444 = vunpack.c.l.b16 %v141
    %v445 = vunpack.c.l.b16 %v142
    %v446 = vunpack.c.l.b16 %v143
    %v447 = vunpack.c.l.b16 %v144
    %v448 = vunpack.c.l.b16 %v145
    %v449 = vunpack.c.l.b16 %v146
    %v450 = vunpack.c.l.b16 %v147
    %v451 = vunpack.c.l.b16 %v148
    %v452 = vunpack.c.l.b16 %v149
    %v453 = vunpack.c.l.b16 %v150
    %v454 = vunpack.c.l.b16 %v151
    %v455 = vunpack.c.l.b16 %v152
    %v456 = vunpack.c.l.b16 %v153
    %v457 = vunpack.c.l.b16 %v154
    %v458 = vunpack.c.l.b16 %v155
    %v459 = vunpack.c.l.b16 %v156
    %v460 = vunpack.c.l.b16 %v157
    %v461 = vunpack.c.l.b16 %v158
    %v462 = vunpack.c.l.b16 %v159
    %v463 = vunpack.c.l.b16 %v160
    %v464 = vunpack.c.l.b16 %v161
    %v465 = vunpack.c.l.b16 %v162
    %v466 = vunpack.c.l.b16 %v163
    %v467 = vunpack.c.l.b16 %v164
    %v468 = vunpack.c.l.b16 %v165
    %v469 = vunpack.c.l.b16 %v166
    %v470 = vunpack.c.l.b16 %v167
    %v471 = vunpack.c.l.b16 %v168
    %v472 = vunpack.c.l.b16 %v169
    %v473 = vunpack.c.l.b16 %v170
    %v474 = vunpack.c.l.b16 %v171
    %v475 = vunpack.c.l.b16 %v172
    %v476 = vunpack.c.l.b16 %v173
    %v477 = vunpack.c.l.b16 %v174
    %v478 = vunpack.c.l.b16 %v175
    %v479 = vunpack.c.l.b16 %v176
    %v480 = vunpack.c.l.b16 %v177
    %v481 = vunpack.c.l.b16 %v178
    %v482 = vunpack.c.l.b16 %v179
    %v483 = vunpack.c.l.b16 %v180
    %v484 = vunpack.c.l.b16 %v181
    %v485 = vunpack.c.l.b16 %v182
    %v486 = vunpack.c.l.b16 %v183
    %v487 = vunpack.c.l.b16 %v184
    %v488 = vunpack.c.l.b16 %v185
    %v489 = vunpack.c.l.b16 %v186
    %v490 = vunpack.c.l.b16 %v187
    %v491 = vunpack.c.l.b16 %v188
    %v492 = vunpack.c.l.b16 %v189
    %v493 = vunpack.c.l.b16 %v190
    %v494 = vpack.c.b16 %v367, %v366
    %v495 = vpack.c.b16 %v369, %v368
    %v496 = vpack.c.b16 %v371, %v370
    %v497 = vpack.c.b16 %v373, %v372
    %v498 = vpack.c.b16 %v375, %v374
    %v499 = vpack.c.b16 %v377, %v376
    %v500 = vpack.c.b16 %v379, %v378
    %v501 = vpack.c.b16 %v381, %v380
    %v502 = vpack.c.b16 %v383, %v382
    %v503 = vpack.c.b16 %v385, %v384
    %v504 = vpack.c.b16 %v387, %v386
    %v505 = vpack.c.b16 %v389, %v388
    %v506 = vpack.c.b16 %v391, %v390
    %v507 = vpack.c.b16 %v393, %v392
    %v508 = vpack.c.b16 %v395, %v394
    %v509 = vpack.c.b16 %v397, %v396
    %v510 = vpack.c.b16 %v399, %v398
    %v511 = vpack.c.b16 %v401, %v400
    %v512 = vpack.c.b16 %v403, %v402
    %v513 = vpack.c.b16 %v405, %v404
    %v514 = vpack.c.b16 %v407, %v406
    %v515 = vpack.c.b16 %v409, %v408
    %v516 = vpack.c.b16 %v411, %v410
    %v517 = vpack.c.b16 %v413, %v412
    %v518 = vpack.c.b16 %v415, %v414
    %v519 = vpack.c.b16 %v417, %v416
    %v520 = vpack.c.b16 %v419, %v418
    %v521 = vpack.c.b16 %v421, %v420
    %v522 = vpack.c.b16 %v423, %v422
    %v523 = vpack.c.b16 %v425, %v424
    %v524 = vpack.c.b16 %v427, %v426
    %v525 = vpack.c.b16 %v429, %v428
    %v526 = vpack.c.b16 %v431, %v430
    %v527 = vpack.c.b16 %v433, %v432
    %v528 = vpack.c.b16 %v435, %v434
    %v529 = vpack.c.b16 %v437, %v436
    %v530 = vpack.c.b16 %v439, %v438
    %v531 = vpack.c.b16 %v441, %v440
    %v532 = vpack.c.b16 %v443, %v442
    %v533 = vpack.c.b16 %v445, %v444
    %v534 = vpack.c.b16 %v447, %v446
    %v535 = vpack.c.b16 %v449, %v448
    %v536 = vpack.c.b16 %v451, %v450
    %v537 = vpack.c.b16 %v453, %v452
    %v538 = vpack.c.b16 %v455, %v454
    %v539 = vpack.c.b16 %v457, %v456
    %v540 = vpack.c.b16 %v459, %v458
    %v541 = vpack.c.b16 %v461, %v460
    %v542 = vpack.c.b16 %v463, %v462
    %v543 = vpack.c.b16 %v465, %v464
    %v544 = vpack.c.b16 %v467, %v466
    %v545 = vpack.c.b16 %v469, %v468
    %v546 = vpack.c.b16 %v471, %v470
    %v547 = vpack.c.b16 %v473, %v472
    %v548 = vpack.c.b16 %v475, %v474
    %v549 = vpack.c.b16 %v477, %v476
    %v550 = vpack.c.b16 %v479, %v478
    %v551 = vpack.c.b16 %v481, %v480
    %v552 = vpack.c.b16 %v483, %v482
    %v553 = vpack.c.b16 %v485, %v484
    %v554 = vpack.c.b16 %v487, %v486
    %v555 = vpack.c.b16 %v489, %v488
    %v556 = vpack.c.b16 %v491, %v490
    %v557 = vpack.c.b16 %v493, %v492
    %622 = vmatprep.subr.bf16.mxu0 0
    %623 = vmatpush1.bf16.msra.mxu0 %v494
    %624 = vmatprep.subr.bf16.mxu0 0
    %625 = vmatpush1.bf16.msra.mxu0 %v495
    %626 = vmatprep.subr.bf16.mxu0 0
    %627 = vmatpush1.bf16.msra.mxu0 %v496
    %628 = vmatprep.subr.bf16.mxu0 0
    %629 = vmatpush1.bf16.msra.mxu0 %v497
    %630 = vmatprep.subr.bf16.mxu0 0
    %631 = vmatpush1.bf16.msra.mxu0 %v498
    %632 = vmatprep.subr.bf16.mxu0 0
    %633 = vmatpush1.bf16.msra.mxu0 %v499
    %634 = vmatprep.subr.bf16.mxu0 0
    %635 = vmatpush1.bf16.msra.mxu0 %v500
    %636 = vmatprep.subr.bf16.mxu0 0
    %637 = vmatpush1.bf16.msra.mxu0 %v501
    %638 = vmatprep.subr.bf16.mxu0 0
    %639 = vmatpush1.bf16.msra.mxu0 %v502
    %640 = vmatprep.subr.bf16.mxu0 0
    %641 = vmatpush1.bf16.msra.mxu0 %v503
    %642 = vmatprep.subr.bf16.mxu0 0
    %643 = vmatpush1.bf16.msra.mxu0 %v504
    %644 = vmatprep.subr.bf16.mxu0 0
    %645 = vmatpush1.bf16.msra.mxu0 %v505
    %646 = vmatprep.subr.bf16.mxu0 0
    %647 = vmatpush1.bf16.msra.mxu0 %v506
    %648 = vmatprep.subr.bf16.mxu0 0
    %649 = vmatpush1.bf16.msra.mxu0 %v507
    %650 = vmatprep.subr.bf16.mxu0 0
    %651 = vmatpush1.bf16.msra.mxu0 %v508
    %652 = vmatprep.subr.bf16.mxu0 0
    %653 = vmatpush1.bf16.msra.mxu0 %v509
    %654 = vmatprep.mubr.bf16.mxu0 %v223
    %655 = vmatmul.mubr.bf16.gmra.mrb[0].mxu0 %v222
    %v656 = vpop.f32.mrb[0].mxu0
    %v657 = vadd.f32 %v196, %v656
    %v658 = vpop.f32.mrb[0].mxu0
    %v659 = vpop.f32.mrb[0].mxu0
    %v660 = vadd.f32 %v196, %v659
    %v661 = vpop.f32.mrb[0].mxu0
    %662 = vdwg.mxu0
    %663 = vmatprep.subr.bf16.mxu0 0
    %664 = vmatpush1.bf16.msra.mxu0 %v510
    %665 = vmatprep.subr.bf16.mxu0 0
    %666 = vmatpush1.bf16.msra.mxu0 %v511
    %667 = vmatprep.subr.bf16.mxu0 0
    %668 = vmatpush1.bf16.msra.mxu0 %v512
    %669 = vmatprep.subr.bf16.mxu0 0
    %670 = vmatpush1.bf16.msra.mxu0 %v513
    %671 = vmatprep.subr.bf16.mxu0 0
    %672 = vmatpush1.bf16.msra.mxu0 %v514
    %673 = vmatprep.subr.bf16.mxu0 0
    %674 = vmatpush1.bf16.msra.mxu0 %v515
    %675 = vmatprep.subr.bf16.mxu0 0
    %676 = vmatpush1.bf16.msra.mxu0 %v516
    %677 = vmatprep.subr.bf16.mxu0 0
    %678 = vmatpush1.bf16.msra.mxu0 %v517
    %679 = vmatprep.subr.bf16.mxu0 0
    %680 = vmatpush1.bf16.msra.mxu0 %v518
    %681 = vmatprep.subr.bf16.mxu0 0
    %682 = vmatpush1.bf16.msra.mxu0 %v519
    %683 = vmatprep.subr.bf16.mxu0 0
    %684 = vmatpush1.bf16.msra.mxu0 %v520
    %685 = vmatprep.subr.bf16.mxu0 0
    %686 = vmatpush1.bf16.msra.mxu0 %v521
    %687 = vmatprep.subr.bf16.mxu0 0
    %688 = vmatpush1.bf16.msra.mxu0 %v522
    %689 = vmatprep.subr.bf16.mxu0 0
    %690 = vmatpush1.bf16.msra.mxu0 %v523
    %691 = vmatprep.subr.bf16.mxu0 0
    %692 = vmatpush1.bf16.msra.mxu0 %v524
    %693 = vmatprep.subr.bf16.mxu0 0
    %694 = vmatpush1.bf16.msra.mxu0 %v525
    %695 = vmatprep.mubr.bf16.mxu0 %v225
    %696 = vmatmul.mubr.bf16.gmra.mrb[0].mxu0 %v224
    %v697 = vpop.f32.mrb[0].mxu0
    %v698 = vadd.f32 %v657, %v697
    %v699 = vpop.f32.mrb[0].mxu0
    %v700 = vpop.f32.mrb[0].mxu0
    %v701 = vadd.f32 %v660, %v700
    %v702 = vpop.f32.mrb[0].mxu0
    %703 = vdwg.mxu0
    %704 = vmatprep.subr.bf16.mxu0 0
    %705 = vmatpush1.bf16.msra.mxu0 %v526
    %706 = vmatprep.subr.bf16.mxu0 0
    %707 = vmatpush1.bf16.msra.mxu0 %v527
    %708 = vmatprep.subr.bf16.mxu0 0
    %709 = vmatpush1.bf16.msra.mxu0 %v528
    %710 = vmatprep.subr.bf16.mxu0 0
    %711 = vmatpush1.bf16.msra.mxu0 %v529
    %712 = vmatprep.subr.bf16.mxu0 0
    %713 = vmatpush1.bf16.msra.mxu0 %v530
    %714 = vmatprep.subr.bf16.mxu0 0
    %715 = vmatpush1.bf16.msra.mxu0 %v531
    %716 = vmatprep.subr.bf16.mxu0 0
    %717 = vmatpush1.bf16.msra.mxu0 %v532
    %718 = vmatprep.subr.bf16.mxu0 0
    %719 = vmatpush1.bf16.msra.mxu0 %v533
    %720 = vmatprep.subr.bf16.mxu0 0
    %721 = vmatpush1.bf16.msra.mxu0 %v534
    %722 = vmatprep.subr.bf16.mxu0 0
    %723 = vmatpush1.bf16.msra.mxu0 %v535
    %724 = vmatprep.subr.bf16.mxu0 0
    %725 = vmatpush1.bf16.msra.mxu0 %v536
    %726 = vmatprep.subr.bf16.mxu0 0
    %727 = vmatpush1.bf16.msra.mxu0 %v537
    %728 = vmatprep.subr.bf16.mxu0 0
    %729 = vmatpush1.bf16.msra.mxu0 %v538
    %730 = vmatprep.subr.bf16.mxu0 0
    %731 = vmatpush1.bf16.msra.mxu0 %v539
    %732 = vmatprep.subr.bf16.mxu0 0
    %733 = vmatpush1.bf16.msra.mxu0 %v540
    %734 = vmatprep.subr.bf16.mxu0 0
    %735 = vmatpush1.bf16.msra.mxu0 %v541
    %736 = vmatprep.mubr.bf16.mxu0 %v227
    %737 = vmatmul.mubr.bf16.gmra.mrb[0].mxu0 %v226
    %v738 = vpop.f32.mrb[0].mxu0
    %v739 = vadd.f32 %v698, %v738
    %v740 = vpop.f32.mrb[0].mxu0
    %v741 = vpop.f32.mrb[0].mxu0
    %v742 = vadd.f32 %v701, %v741
    %v743 = vpop.f32.mrb[0].mxu0
    %744 = vdwg.mxu0
    %745 = vmatprep.subr.bf16.mxu0 0
    %746 = vmatpush1.bf16.msra.mxu0 %v542
    %747 = vmatprep.subr.bf16.mxu0 0
    %748 = vmatpush1.bf16.msra.mxu0 %v543
    %749 = vmatprep.subr.bf16.mxu0 0
    %750 = vmatpush1.bf16.msra.mxu0 %v544
    %751 = vmatprep.subr.bf16.mxu0 0
    %752 = vmatpush1.bf16.msra.mxu0 %v545
    %753 = vmatprep.subr.bf16.mxu0 0
    %754 = vmatpush1.bf16.msra.mxu0 %v546
    %755 = vmatprep.subr.bf16.mxu0 0
    %756 = vmatpush1.bf16.msra.mxu0 %v547
    %757 = vmatprep.subr.bf16.mxu0 0
    %758 = vmatpush1.bf16.msra.mxu0 %v548
    %759 = vmatprep.subr.bf16.mxu0 0
    %760 = vmatpush1.bf16.msra.mxu0 %v549
    %761 = vmatprep.subr.bf16.mxu0 0
    %762 = vmatpush1.bf16.msra.mxu0 %v550
    %763 = vmatprep.subr.bf16.mxu0 0
    %764 = vmatpush1.bf16.msra.mxu0 %v551
    %765 = vmatprep.subr.bf16.mxu0 0
    %766 = vmatpush1.bf16.msra.mxu0 %v552
    %767 = vmatprep.subr.bf16.mxu0 0
    %768 = vmatpush1.bf16.msra.mxu0 %v553
    %769 = vmatprep.subr.bf16.mxu0 0
    %770 = vmatpush1.bf16.msra.mxu0 %v554
    %771 = vmatprep.subr.bf16.mxu0 0
    %772 = vmatpush1.bf16.msra.mxu0 %v555
    %773 = vmatprep.subr.bf16.mxu0 0
    %774 = vmatpush1.bf16.msra.mxu0 %v556
    %775 = vmatprep.subr.bf16.mxu0 0
    %776 = vmatpush1.bf16.msra.mxu0 %v557
    %777 = vmatprep.mubr.bf16.mxu0 %v229
    %778 = vmatmul.mubr.bf16.gmra.mrb[0].mxu0 %v228
    %v779 = vpop.f32.mrb[0].mxu0
    %v780 = vadd.f32 %v739, %v779
    %v781 = vpop.f32.mrb[0].mxu0
    %v782 = vpop.f32.mrb[0].mxu0
    %v783 = vadd.f32 %v742, %v782
    %v784 = vpop.f32.mrb[0].mxu0
    %785 = vdwg.mxu0
    %vm786 = vcmp.ge.f32.partialorder %v780, 0.0
    %vm787 = vcmp.ge.f32.partialorder %v783, 0.0
    %v788 = vsub.f32 0.0, %v780
    %v789 = vsub.f32 0.0, %v783
    %v790 = vsel %vm786, %v788, %v780
    %v791 = vsel %vm787, %v789, %v783
    %v792 = vmul.f32 %v790, 1.442695
    %v793 = vpow.pop %v792
    %v794 = vmul.f32 %v791, 1.442695
    %v795 = vpow.pop %v794
    %v796 = vadd.f32 %v793, 1.0
    %v797 = vadd.f32 %v795, 1.0
    %v798 = vrcp.pop %v796
    %v799 = vmul.f32 1.0, %v798
    %v800 = vrcp.pop %v797
    %v801 = vmul.f32 1.0, %v800
    %v802 = vmul.f32 %v793, %v798
    %v803 = vmul.f32 %v795, %v800
    %v804 = vsel %vm786, %v799, %v802
    %v805 = vsel %vm787, %v801, %v803
    %806 = vst [vmem:[#allocation8] sm:$0xff] %v804
    %807 = vst [vmem:[#allocation8 + $0x8] sm:$0xff] %v805
    // Predicated region
    $region26: #{dcdisc_forward.15} parent=1 // pred_check
      _
    $region27: #{dcdisc_forward.15} parent=1 // pred_check_branch
      %809 = sbr.rel (0) target = $region29
    $region28: #{dcdisc_forward.15} parent=1 // pred_region
      %s811 = ssub.s32 256, 256
      %812 = vsyncadd [#allocation4], %s811
      %s813 = sshll.u32 [#allocation8], 4
      %s814 = int_to_ptr.vmem [resolvable:$true] %s813
      %819 = dma.vmem_to_hbm [thread:$0]  %s814, 256, %s3, [#allocation4], 128, 128, 8
    $region29: #{dcdisc_forward.15} parent=1 // pred_fallthru
      _
    // Predicated region
    $region30: #{dcdisc_forward.15} parent=1 // pred_check
      _
    $region31: #{dcdisc_forward.15} parent=1 // pred_check_branch
      %821 = sbr.rel (0) target = $region33
    $region32: #{dcdisc_forward.15} parent=1 // pred_region
      %822 = dma.done [#allocation4], 256
    $region33: #{dcdisc_forward.15} parent=1 // pred_fallthru
      _
    %823 = vsyncpa [#allocation3], 1
    %824 = vsyncpa [#allocation6], 1
    %825 = vsyncpa [#allocation4], 1

</llo_original>
